<compile_context>
chip_gen: v5e
topology: v5e:2x2
jax: 0.10.0
libtpu: 0.0.40
codegen_flags: <defaults>
</compile_context>

<pallas_src>
import functools

import jax
import jax.numpy as jnp
from jax import lax
from jax.experimental import pallas as pl
from jax.experimental.pallas import tpu as pltpu


def _round_up(x, m):
    return ((x + m - 1) // m) * m


# ----------------------------------------------------------------------------
# Pallas kernel: one M-tile of   out = [relu](A @ W + b)
#   A tile : (TM, K)  bf16  (streamed, double-buffered by BlockSpec)
#   W      : (K,  N)  bf16  (resident: same block index every grid step)
#   b      : (1,  N)  f32   (resident)
#   out    : (TM, N)  bf16 / f32
# bf16 x bf16 -> f32 on the MXU; bias + ReLU stay in f32 on the VPU
# (v5e has no bf16 VPU); only the final store casts.
# ----------------------------------------------------------------------------
def _matmul_bias_kernel(a_ref, w_ref, b_ref, o_ref, *, apply_relu):
    acc = jnp.dot(a_ref[...], w_ref[...], preferred_element_type=jnp.float32)
    acc = acc + b_ref[...]                       # (TM, N) + (1, N) broadcast
    if apply_relu:
        acc = jnp.maximum(acc, 0.0)
    o_ref[...] = acc.astype(o_ref.dtype)


def matmul_bias_relu(a, w, b, apply_relu, out_dtype):
    """a: (M, K) bf16, w: (K, N) bf16 (K, N multiples of 128),
    b: (1, N) f32  ->  (M, N) out_dtype."""
    M, K = a.shape
    Kw, N = w.shape
    assert K == Kw, (K, Kw)

    TM = 256
    Mp = _round_up(M, 8)
    if Mp <= TM:
        TM = Mp                       # single lane-aligned tile
    else:
        Mp = _round_up(M, TM)
    if Mp != M:
        a = jnp.pad(a, ((0, Mp - M), (0, 0)))

    out_isz = jnp.dtype(out_dtype).itemsize
    # double-buffered A / out tiles + resident W / bias (budget 2x for safety)
    vmem_est = 2 * (TM * K * 2 + TM * N * out_isz + K * N * 2 + N * 4)
    vmem_limit = int(min(max(vmem_est + (4 << 20), 16 << 20), 48 << 20))

    out = pl.pallas_call(
        functools.partial(_matmul_bias_kernel, apply_relu=apply_relu),
        out_shape=jax.ShapeDtypeStruct((Mp, N), out_dtype),
        grid=(Mp // TM,),
        in_specs=[
            pl.BlockSpec((TM, K), lambda i: (i, 0)),   # streamed A tiles
            pl.BlockSpec((K, N), lambda i: (0, 0)),    # resident W
            pl.BlockSpec((1, N), lambda i: (0, 0)),    # resident bias
        ],
        out_specs=pl.BlockSpec((TM, N), lambda i: (i, 0)),
        compiler_params=pltpu.CompilerParams(
            dimension_semantics=("parallel",),         # v7x: shard M over 2 TCs
            vmem_limit_bytes=vmem_limit,
        ),
    )(a, w, b)
    return out[:M] if Mp != M else out


# ----------------------------------------------------------------------------
# Plain-JAX glue: NHWC im2col (pure data movement; channel-minor so the
# flattened patch needs no transpose). Patch element order is (kh, kw, c).
# ----------------------------------------------------------------------------
def _im2col_nhwc(x, ksize, stride, pad):
    """x: (N, H, W, C) -> patches (N*Ho*Wo, K*K*C), Ho, Wo."""
    n, h, w, c = x.shape
    if pad:
        x = jnp.pad(x, ((0, 0), (pad, pad), (pad, pad), (0, 0)))
    hp, wp = h + 2 * pad, w + 2 * pad
    ho = (hp - ksize) // stride + 1
    wo = (wp - ksize) // stride + 1

    cols = []
    for kh in range(ksize):
        for kw in range(ksize):
            cols.append(
                x[:, kh: kh + stride * (ho - 1) + 1: stride,
                     kw: kw + stride * (wo - 1) + 1: stride, :]
            )  # (N, Ho, Wo, C)
    patches = jnp.stack(cols, axis=3)                       # (N, Ho, Wo, K*K, C)
    patches = patches.reshape(n * ho * wo, ksize * ksize * c)
    return patches, ho, wo


def conv_layer(x_nhwc, w2, b2, *, ksize, stride, pad, relu, out_dtype):
    """x_nhwc: (N, H, W, Cin_pad); w2: (Kp, Cout_pad) bf16; b2: (1, Cout_pad) f32."""
    n = x_nhwc.shape[0]
    patches, ho, wo = _im2col_nhwc(x_nhwc, ksize, stride, pad)
    patches = patches.astype(jnp.bfloat16)
    kp = w2.shape[0]
    if patches.shape[1] != kp:                              # only layer 1 (27 -> 128)
        patches = jnp.pad(patches, ((0, 0), (0, kp - patches.shape[1])))
    y = matmul_bias_relu(patches, w2, b2, relu, out_dtype)  # (N*Ho*Wo, Cout_pad)
    return y.reshape(n, ho, wo, y.shape[-1])


# ----------------------------------------------------------------------------
# Module F: layer configuration, param init, one-time weight prep, forward
# ----------------------------------------------------------------------------
def _layer_cfgs(input_channel):
    # cin_pad of layer l must equal cout_pad of layer l-1 (padded channels,
    # which are exactly zero, are carried between layers instead of sliced).
    return [
        dict(cin=input_channel, cout=64, k=3, stride=2, pad=1, relu=True,
             cin_pad=input_channel, cout_pad=128),
        dict(cin=64, cout=128, k=3, stride=2, pad=1, relu=True,
             cin_pad=128, cout_pad=128),
        dict(cin=128, cout=256, k=3, stride=2, pad=1, relu=True,
             cin_pad=128, cout_pad=256),
        dict(cin=256, cout=128, k=4, stride=1, pad=0, relu=False,
             cin_pad=256, cout_pad=128),
    ]


def init_f_params(input_channel, key):
    """PyTorch-style Conv2d init: U(-1/sqrt(fan_in), +1/sqrt(fan_in)), f32 OIHW."""
    params = []
    for cfg in _layer_cfgs(input_channel):
        cin, cout, k = cfg["cin"], cfg["cout"], cfg["k"]
        key, kw_key, kb_key = jax.random.split(key, 3)
        bound = 1.0 / jnp.sqrt(cin * k * k)
        w = jax.random.uniform(kw_key, (cout, cin, k, k), jnp.float32, -bound, bound)
        b = jax.random.uniform(kb_key, (cout,), jnp.float32, -bound, bound)
        params.append((w, b))
    return params


def prep_f_params(raw_params, input_channel):
    """One-time: reshape to matmul form, pad channels/K to 128, cast to bf16."""
    prepped = []
    for (w, b), cfg in zip(raw_params, _layer_cfgs(input_channel)):
        cout, cin, k, _ = w.shape
        cin_p, cout_p = cfg["cin_pad"], cfg["cout_pad"]
        w_p = jnp.pad(w, ((0, cout_p - cout), (0, cin_p - cin), (0, 0), (0, 0)))
        # rows ordered as (kh, kw, c) to match _im2col_nhwc
        w2 = w_p.transpose(2, 3, 1, 0).reshape(k * k * cin_p, cout_p)
        kp = _round_up(w2.shape[0], 128)
        if kp != w2.shape[0]:
            w2 = jnp.pad(w2, ((0, kp - w2.shape[0]), (0, 0)))
        b2 = jnp.pad(b, (0, cout_p - cout)).reshape(1, cout_p).astype(jnp.float32)
        prepped.append((w2.astype(jnp.bfloat16), b2))
    return prepped


def f_forward(prepped_params, x_nchw, input_channel):
    """Forward pass of module F. x: (N, Cin, H, W) NCHW f32 -> (N, 128, Ho, Wo)."""
    cfgs = _layer_cfgs(input_channel)
    x = jnp.transpose(x_nchw, (0, 2, 3, 1))  # NCHW -> NHWC once at entry
    for idx, ((w2, b2), cfg) in enumerate(zip(prepped_params, cfgs)):
        last = idx == len(cfgs) - 1
        x = conv_layer(x, w2, b2, ksize=cfg["k"], stride=cfg["stride"],
                       pad=cfg["pad"], relu=cfg["relu"],
                       out_dtype=jnp.float32 if last else jnp.bfloat16)
    x = x[..., : cfgs[-1]["cout"]]            # no-op here (cout_pad == cout)
    return jnp.transpose(x, (0, 3, 1, 2))     # NHWC -> NCHW once at exit


# ----------------------------------------------------------------------------
# Reference (lax.conv) with matching bf16 operand quantization, f32 accumulate
# ----------------------------------------------------------------------------
def _conv_ref(x, w, b, stride, pad, apply_relu):
    y = lax.conv_general_dilated(
        x.astype(jnp.bfloat16), w.astype(jnp.bfloat16),
        window_strides=(stride, stride),
        padding=[(pad, pad), (pad, pad)],
        dimension_numbers=("NCHW", "OIHW", "NCHW"),
        preferred_element_type=jnp.float32,
    )
    y = y + b.reshape(1, -1, 1, 1)
    return jnp.maximum(y, 0.0) if apply_relu else y


def f_forward_ref(raw_params, x):
    (w1, b1), (w2, b2), (w3, b3), (w4, b4) = raw_params
    x = _conv_ref(x, w1, b1, 2, 1, True)
    x = _conv_ref(x, w2, b2, 2, 1, True)
    x = _conv_ref(x, w3, b3, 2, 1, True)
    x = _conv_ref(x, w4, b4, 1, 0, False)
    return x


if __name__ == "__main__":
    key = jax.random.PRNGKey(0)
    key, xkey = jax.random.split(key)

    input_channel = 3
    # 32x32 spatial: 32 -> 16 -> 8 -> 4 -> (k4, s1, p0) -> 1
    x = jax.random.normal(xkey, (2, input_channel, 32, 32), jnp.float32)

    raw_params = init_f_params(input_channel, key)
    params = prep_f_params(raw_params, input_channel)   # one-time weight prep

    fwd = jax.jit(functools.partial(f_forward, input_channel=input_channel))
    out = jax.block_until_ready(fwd(params, x))
    assert out.shape == (2, 128, 1, 1), out.shape

    ref = jax.block_until_ready(f_forward_ref(raw_params, x))
    max_err = float(jnp.max(jnp.abs(out - ref)))
    assert jnp.allclose(out, ref, rtol=1e-2, atol=1e-2), max_err

    print("KERNEL_OK")
</pallas_src>

<mosaic_0001>
module attributes {stable_mosaic.version = 11 : i64} {
  func.func @_matmul_bias_kernel(%arg0: i32, %arg1: memref<256x128xbf16, #tpu.memory_space<vmem>>, %arg2: memref<128x128xbf16, #tpu.memory_space<vmem>>, %arg3: memref<1x128xf32, #tpu.memory_space<vmem>>, %arg4: memref<256x128xbf16, #tpu.memory_space<vmem>>) attributes {dimension_semantics = [#tpu.dimension_semantics<parallel>], iteration_bounds = array<i64: 2>, scalar_prefetch = 0 : i64, scratch_operands = 0 : i64, tpu.core_type = #tpu.core_type<tc>, window_params = [{transform_indices = @transform_0, window_bounds = array<i64: 256, 128>}, {pipeline_mode = #tpu.pipeline_mode<synchronous>, transform_indices = @transform_1, window_bounds = array<i64: 128, 128>}, {pipeline_mode = #tpu.pipeline_mode<synchronous>, transform_indices = @transform_2, window_bounds = array<i64: 1, 128>}, {transform_indices = @transform_3, window_bounds = array<i64: 256, 128>}]} {
    %c0 = arith.constant 0 : index
    %c0_0 = arith.constant 0 : index
    %0 = vector.load %arg1[%c0, %c0_0] : memref<256x128xbf16, #tpu.memory_space<vmem>>, vector<256x128xbf16>
    %c0_1 = arith.constant 0 : index
    %c0_2 = arith.constant 0 : index
    %1 = vector.load %arg2[%c0_1, %c0_2] : memref<128x128xbf16, #tpu.memory_space<vmem>>, vector<128x128xbf16>
    %cst = arith.constant dense<0.000000e+00> : vector<256x128xf32>
    %2 = tpu.matmul %0, %1, %cst {dimension_numbers = #tpu.dot_dimension_numbers<[1], [0], [0], [1], [0, 0, 1, 1], [], []>} : vector<256x128xbf16>, vector<128x128xbf16>, vector<256x128xf32> -> vector<256x128xf32>
    %c0_3 = arith.constant 0 : index
    %c0_4 = arith.constant 0 : index
    %3 = vector.load %arg3[%c0_3, %c0_4] : memref<1x128xf32, #tpu.memory_space<vmem>>, vector<1x128xf32>
    %4 = vector.broadcast %3 : vector<1x128xf32> to vector<256x128xf32>
    %5 = arith.addf %2, %4 : vector<256x128xf32>
    %cst_5 = arith.constant 0.000000e+00 : f32
    %6 = vector.broadcast %cst_5 : f32 to vector<256x128xf32>
    %7 = arith.maximumf %5, %6 : vector<256x128xf32>
    %8 = arith.truncf %7 : vector<256x128xf32> to vector<256x128xbf16>
    %c0_6 = arith.constant 0 : index
    %c0_7 = arith.constant 0 : index
    %9 = vector.load %arg4[%c0_6, %c0_7] : memref<256x128xbf16, #tpu.memory_space<vmem>>, vector<256x128xbf16>
    tpu.vector_store %arg4[%c0_6, %c0_7], %8 {strides = array<i32>} : memref<256x128xbf16, #tpu.memory_space<vmem>>, vector<256x128xbf16>,
    return
  }
  func.func @transform_0(%arg0: i32) -> (i32, i32) {
    %c0_i32 = arith.constant 0 : i32
    %c0_i32_0 = arith.constant 0 : i32
    return %arg0, %c0_i32 : i32, i32
  }
  func.func @transform_1(%arg0: i32) -> (i32, i32) {
    %c0_i32 = arith.constant 0 : i32
    %c0_i32_0 = arith.constant 0 : i32
    %c0_i32_1 = arith.constant 0 : i32
    return %c0_i32, %c0_i32_0 : i32, i32
  }
  func.func @transform_2(%arg0: i32) -> (i32, i32) {
    %c0_i32 = arith.constant 0 : i32
    %c0_i32_0 = arith.constant 0 : i32
    %c0_i32_1 = arith.constant 0 : i32
    return %c0_i32, %c0_i32_0 : i32, i32
  }
  func.func @transform_3(%arg0: i32) -> (i32, i32) {
    %c0_i32 = arith.constant 0 : i32
    %c0_i32_0 = arith.constant 0 : i32
    return %arg0, %c0_i32 : i32, i32
  }
}

module attributes {stable_mosaic.version = 11 : i64} {
  func.func @_matmul_bias_kernel(%arg0: i32, %arg1: memref<128x1152xbf16, #tpu.memory_space<vmem>>, %arg2: memref<1152x128xbf16, #tpu.memory_space<vmem>>, %arg3: memref<1x128xf32, #tpu.memory_space<vmem>>, %arg4: memref<128x128xbf16, #tpu.memory_space<vmem>>) attributes {dimension_semantics = [#tpu.dimension_semantics<parallel>], iteration_bounds = array<i64: 1>, scalar_prefetch = 0 : i64, scratch_operands = 0 : i64, tpu.core_type = #tpu.core_type<tc>, window_params = [{transform_indices = @transform_0, window_bounds = array<i64: 128, 1152>}, {pipeline_mode = #tpu.pipeline_mode<synchronous>, transform_indices = @transform_1, window_bounds = array<i64: 1152, 128>}, {pipeline_mode = #tpu.pipeline_mode<synchronous>, transform_indices = @transform_2, window_bounds = array<i64: 1, 128>}, {transform_indices = @transform_3, window_bounds = array<i64: 128, 128>}]} {
    %c0 = arith.constant 0 : index
    %c0_0 = arith.constant 0 : index
    %0 = vector.load %arg1[%c0, %c0_0] : memref<128x1152xbf16, #tpu.memory_space<vmem>>, vector<128x1152xbf16>
    %c0_1 = arith.constant 0 : index
    %c0_2 = arith.constant 0 : index
    %1 = vector.load %arg2[%c0_1, %c0_2] : memref<1152x128xbf16, #tpu.memory_space<vmem>>, vector<1152x128xbf16>
    %cst = arith.constant dense<0.000000e+00> : vector<128x128xf32>
    %2 = tpu.matmul %0, %1, %cst {dimension_numbers = #tpu.dot_dimension_numbers<[1], [0], [0], [1], [0, 0, 1, 1], [], []>} : vector<128x1152xbf16>, vector<1152x128xbf16>, vector<128x128xf32> -> vector<128x128xf32>
    %c0_3 = arith.constant 0 : index
    %c0_4 = arith.constant 0 : index
    %3 = vector.load %arg3[%c0_3, %c0_4] : memref<1x128xf32, #tpu.memory_space<vmem>>, vector<1x128xf32>
    %4 = vector.broadcast %3 : vector<1x128xf32> to vector<128x128xf32>
    %5 = arith.addf %2, %4 : vector<128x128xf32>
    %cst_5 = arith.constant 0.000000e+00 : f32
    %6 = vector.broadcast %cst_5 : f32 to vector<128x128xf32>
    %7 = arith.maximumf %5, %6 : vector<128x128xf32>
    %8 = arith.truncf %7 : vector<128x128xf32> to vector<128x128xbf16>
    %c0_6 = arith.constant 0 : index
    %c0_7 = arith.constant 0 : index
    %9 = vector.load %arg4[%c0_6, %c0_7] : memref<128x128xbf16, #tpu.memory_space<vmem>>, vector<128x128xbf16>
    tpu.vector_store %arg4[%c0_6, %c0_7], %8 {strides = array<i32>} : memref<128x128xbf16, #tpu.memory_space<vmem>>, vector<128x128xbf16>,
    return
  }
  func.func @transform_0(%arg0: i32) -> (i32, i32) {
    %c0_i32 = arith.constant 0 : i32
    %c0_i32_0 = arith.constant 0 : i32
    return %arg0, %c0_i32 : i32, i32
  }
  func.func @transform_1(%arg0: i32) -> (i32, i32) {
    %c0_i32 = arith.constant 0 : i32
    %c0_i32_0 = arith.constant 0 : i32
    %c0_i32_1 = arith.constant 0 : i32
    return %c0_i32, %c0_i32_0 : i32, i32
  }
  func.func @transform_2(%arg0: i32) -> (i32, i32) {
    %c0_i32 = arith.constant 0 : i32
    %c0_i32_0 = arith.constant 0 : i32
    %c0_i32_1 = arith.constant 0 : i32
    return %c0_i32, %c0_i32_0 : i32, i32
  }
  func.func @transform_3(%arg0: i32) -> (i32, i32) {
    %c0_i32 = arith.constant 0 : i32
    %c0_i32_0 = arith.constant 0 : i32
    return %arg0, %c0_i32 : i32, i32
  }
}

module attributes {stable_mosaic.version = 11 : i64} {
  func.func @_matmul_bias_kernel(%arg0: i32, %arg1: memref<32x1152xbf16, #tpu.memory_space<vmem>>, %arg2: memref<1152x256xbf16, #tpu.memory_space<vmem>>, %arg3: memref<1x256xf32, #tpu.memory_space<vmem>>, %arg4: memref<32x256xbf16, #tpu.memory_space<vmem>>) attributes {dimension_semantics = [#tpu.dimension_semantics<parallel>], iteration_bounds = array<i64: 1>, scalar_prefetch = 0 : i64, scratch_operands = 0 : i64, tpu.core_type = #tpu.core_type<tc>, window_params = [{transform_indices = @transform_0, window_bounds = array<i64: 32, 1152>}, {pipeline_mode = #tpu.pipeline_mode<synchronous>, transform_indices = @transform_1, window_bounds = array<i64: 1152, 256>}, {pipeline_mode = #tpu.pipeline_mode<synchronous>, transform_indices = @transform_2, window_bounds = array<i64: 1, 256>}, {transform_indices = @transform_3, window_bounds = array<i64: 32, 256>}]} {
    %c0 = arith.constant 0 : index
    %c0_0 = arith.constant 0 : index
    %0 = vector.load %arg1[%c0, %c0_0] : memref<32x1152xbf16, #tpu.memory_space<vmem>>, vector<32x1152xbf16>
    %c0_1 = arith.constant 0 : index
    %c0_2 = arith.constant 0 : index
    %1 = vector.load %arg2[%c0_1, %c0_2] : memref<1152x256xbf16, #tpu.memory_space<vmem>>, vector<1152x256xbf16>
    %cst = arith.constant dense<0.000000e+00> : vector<32x256xf32>
    %2 = tpu.matmul %0, %1, %cst {dimension_numbers = #tpu.dot_dimension_numbers<[1], [0], [0], [1], [0, 0, 1, 1], [], []>} : vector<32x1152xbf16>, vector<1152x256xbf16>, vector<32x256xf32> -> vector<32x256xf32>
    %c0_3 = arith.constant 0 : index
    %c0_4 = arith.constant 0 : index
    %3 = vector.load %arg3[%c0_3, %c0_4] : memref<1x256xf32, #tpu.memory_space<vmem>>, vector<1x256xf32>
    %4 = vector.broadcast %3 : vector<1x256xf32> to vector<32x256xf32>
    %5 = arith.addf %2, %4 : vector<32x256xf32>
    %cst_5 = arith.constant 0.000000e+00 : f32
    %6 = vector.broadcast %cst_5 : f32 to vector<32x256xf32>
    %7 = arith.maximumf %5, %6 : vector<32x256xf32>
    %8 = arith.truncf %7 : vector<32x256xf32> to vector<32x256xbf16>
    %c0_6 = arith.constant 0 : index
    %c0_7 = arith.constant 0 : index
    %9 = vector.load %arg4[%c0_6, %c0_7] : memref<32x256xbf16, #tpu.memory_space<vmem>>, vector<32x256xbf16>
    tpu.vector_store %arg4[%c0_6, %c0_7], %8 {strides = array<i32>} : memref<32x256xbf16, #tpu.memory_space<vmem>>, vector<32x256xbf16>,
    return
  }
  func.func @transform_0(%arg0: i32) -> (i32, i32) {
    %c0_i32 = arith.constant 0 : i32
    %c0_i32_0 = arith.constant 0 : i32
    return %arg0, %c0_i32 : i32, i32
  }
  func.func @transform_1(%arg0: i32) -> (i32, i32) {
    %c0_i32 = arith.constant 0 : i32
    %c0_i32_0 = arith.constant 0 : i32
    %c0_i32_1 = arith.constant 0 : i32
    return %c0_i32, %c0_i32_0 : i32, i32
  }
  func.func @transform_2(%arg0: i32) -> (i32, i32) {
    %c0_i32 = arith.constant 0 : i32
    %c0_i32_0 = arith.constant 0 : i32
    %c0_i32_1 = arith.constant 0 : i32
    return %c0_i32, %c0_i32_0 : i32, i32
  }
  func.func @transform_3(%arg0: i32) -> (i32, i32) {
    %c0_i32 = arith.constant 0 : i32
    %c0_i32_0 = arith.constant 0 : i32
    return %arg0, %c0_i32 : i32, i32
  }
}

module attributes {stable_mosaic.version = 11 : i64} {
  func.func @_matmul_bias_kernel(%arg0: i32, %arg1: memref<8x4096xbf16, #tpu.memory_space<vmem>>, %arg2: memref<4096x128xbf16, #tpu.memory_space<vmem>>, %arg3: memref<1x128xf32, #tpu.memory_space<vmem>>, %arg4: memref<8x128xf32, #tpu.memory_space<vmem>>) attributes {dimension_semantics = [#tpu.dimension_semantics<parallel>], iteration_bounds = array<i64: 1>, scalar_prefetch = 0 : i64, scratch_operands = 0 : i64, tpu.core_type = #tpu.core_type<tc>, window_params = [{transform_indices = @transform_0, window_bounds = array<i64: 8, 4096>}, {pipeline_mode = #tpu.pipeline_mode<synchronous>, transform_indices = @transform_1, window_bounds = array<i64: 4096, 128>}, {pipeline_mode = #tpu.pipeline_mode<synchronous>, transform_indices = @transform_2, window_bounds = array<i64: 1, 128>}, {transform_indices = @transform_3, window_bounds = array<i64: 8, 128>}]} {
    %c0 = arith.constant 0 : index
    %c0_0 = arith.constant 0 : index
    %0 = vector.load %arg1[%c0, %c0_0] : memref<8x4096xbf16, #tpu.memory_space<vmem>>, vector<8x4096xbf16>
    %c0_1 = arith.constant 0 : index
    %c0_2 = arith.constant 0 : index
    %1 = vector.load %arg2[%c0_1, %c0_2] : memref<4096x128xbf16, #tpu.memory_space<vmem>>, vector<4096x128xbf16>
    %cst = arith.constant dense<0.000000e+00> : vector<8x128xf32>
    %2 = tpu.matmul %0, %1, %cst {dimension_numbers = #tpu.dot_dimension_numbers<[1], [0], [0], [1], [0, 0, 1, 1], [], []>} : vector<8x4096xbf16>, vector<4096x128xbf16>, vector<8x128xf32> -> vector<8x128xf32>
    %c0_3 = arith.constant 0 : index
    %c0_4 = arith.constant 0 : index
    %3 = vector.load %arg3[%c0_3, %c0_4] : memref<1x128xf32, #tpu.memory_space<vmem>>, vector<1x128xf32>
    %4 = vector.broadcast %3 : vector<1x128xf32> to vector<8x128xf32>
    %5 = arith.addf %2, %4 : vector<8x128xf32>
    %c0_5 = arith.constant 0 : index
    %c0_6 = arith.constant 0 : index
    %6 = vector.load %arg4[%c0_5, %c0_6] : memref<8x128xf32, #tpu.memory_space<vmem>>, vector<8x128xf32>
    tpu.vector_store %arg4[%c0_5, %c0_6], %5 {strides = array<i32>} : memref<8x128xf32, #tpu.memory_space<vmem>>, vector<8x128xf32>,
    return
  }
  func.func @transform_0(%arg0: i32) -> (i32, i32) {
    %c0_i32 = arith.constant 0 : i32
    %c0_i32_0 = arith.constant 0 : i32
    return %arg0, %c0_i32 : i32, i32
  }
  func.func @transform_1(%arg0: i32) -> (i32, i32) {
    %c0_i32 = arith.constant 0 : i32
    %c0_i32_0 = arith.constant 0 : i32
    %c0_i32_1 = arith.constant 0 : i32
    return %c0_i32, %c0_i32_0 : i32, i32
  }
  func.func @transform_2(%arg0: i32) -> (i32, i32) {
    %c0_i32 = arith.constant 0 : i32
    %c0_i32_0 = arith.constant 0 : i32
    %c0_i32_1 = arith.constant 0 : i32
    return %c0_i32, %c0_i32_0 : i32, i32
  }
  func.func @transform_3(%arg0: i32) -> (i32, i32) {
    %c0_i32 = arith.constant 0 : i32
    %c0_i32_0 = arith.constant 0 : i32
    return %arg0, %c0_i32 : i32, i32
  }
}

</mosaic_0001>

<llo_original>
// kernel: f_forward.4
$region0: #{f_forward.4}
  #allocation0 [shape = 'u32[]', space=smem, size = 0x4, offset = 0x4, fixed_abs, tag = 'smem constant byte address 0x4 - core index']
  #allocation1 [shape = 'u32[72,128]{1,0:T(1,128)}', space=vmem, size = 0x9000, scoped, tag = 'internal scratch']
  %s0 = inlined_call_operand.vmem [shape: bf16[512,128], index: 0, kind: input, shape index: {}]
  %s1 = inlined_call_operand.vmem [shape: bf16[128,128], index: 1, kind: input, shape index: {}]
  %s2 = inlined_call_operand.vmem [shape: f32[1,128], index: 2, kind: input, shape index: {}]
  %s3 = inlined_call_operand.vmem [shape: bf16[512,128], index: 3, kind: output, shape index: {}]
  %s4 = sld [smem:[#allocation0]]
  $region45: #{f_forward.4} parent=0
    _
  %s6 = ssub.s32 1, %s4
  %s7 = scalar_select 0, %s6, %s4
  loop: start=0, step=1, limit=4
  $region2: #{f_forward.4} parent=0 // loop_pre_header
    _
  $region3: #{f_forward.4} parent=0 // loop_header
    %s9 = sphi 0, %s13
    %p10 = scmp.ge.s32.totalorder %s9, 4
    %s19 = sphi 0, %s21
    %s22 = sphi 0, %s19
    %s23 = sphi 0, %s22
    %s39 = sphi 0, %s23
    %s43 = sphi 0, %s43
    %s45 = sphi 0, %s43
    %s46 = sphi 0, %s45
    %s60 = sphi 0, %s46
    %s64 = sphi 0, %s64
    %s66 = sphi 0, %s64
    %s67 = sphi 0, %s66
    %s81 = sphi 0, %s67
    %s87 = sphi 0, %s89
    %s90 = sphi 0, %s87
    %s91 = sphi 0, %s90
    %s107 = sphi 0, %s91
  $region4: #{f_forward.4} parent=0 // loop_header_branch
    %12 = sbr.rel (%p10) target = $region8
  $region5: #{f_forward.4} parent=0 // loop_body
    %s14 = ssub.s32 %s9, 1
    %s15 = ssub.s32 %s9, 2
    %s16 = sadd.s32 %s9, 1
    %s17 = ssub.s32 %s9, %s16
    %p18 = scmp.eq.s32.totalorder %s17, 0
    %s20 = sadd.s32 %s19, 1
    %s21 = scalar_select %p18, %s19, %s20
    %p24 = pneg %p18
    %p25 = scmp.eq.s32.totalorder %s9, 1
    %p26 = por %p24, %p25
    %p27 = scmp.ne.s32.totalorder %s19, %s22
    %p28 = scmp.eq.s32.totalorder %s9, 0
    %p29 = por %p27, %p28
    %p30 = scmp.ne.s32.totalorder %s19, %s22
    %p31 = scmp.eq.s32.totalorder %s14, 1
    %p32 = por %p30, %p31
    %p33 = scmp.ne.s32.totalorder %s22, %s23
    %p34 = scmp.eq.s32.totalorder %s14, 0
    %p35 = por %p33, %p34
    %p36 = scmp.ne.s32.totalorder %s22, %s23
    %p37 = scmp.eq.s32.totalorder %s15, 1
    %p38 = por %p36, %p37
    %p40 = scmp.ne.s32.totalorder %s23, %s39
    %p41 = scmp.eq.s32.totalorder %s15, 0
    %p42 = por %p40, %p41
    %s44 = sadd.s32 %s43, 1
    %p47 = scmp.eq.s32.totalorder %s9, 1
    %p48 = scmp.ne.s32.totalorder %s43, %s45
    %p49 = scmp.eq.s32.totalorder %s9, 0
    %p50 = por %p48, %p49
    %p51 = scmp.ne.s32.totalorder %s43, %s45
    %p52 = scmp.eq.s32.totalorder %s14, 1
    %p53 = por %p51, %p52
    %p54 = scmp.ne.s32.totalorder %s45, %s46
    %p55 = scmp.eq.s32.totalorder %s14, 0
    %p56 = por %p54, %p55
    %p57 = scmp.ne.s32.totalorder %s45, %s46
    %p58 = scmp.eq.s32.totalorder %s15, 1
    %p59 = por %p57, %p58
    %p61 = scmp.ne.s32.totalorder %s46, %s60
    %p62 = scmp.eq.s32.totalorder %s15, 0
    %p63 = por %p61, %p62
    %s65 = sadd.s32 %s64, 1
    %p68 = scmp.eq.s32.totalorder %s9, 1
    %p69 = scmp.ne.s32.totalorder %s64, %s66
    %p70 = scmp.eq.s32.totalorder %s9, 0
    %p71 = por %p69, %p70
    %p72 = scmp.ne.s32.totalorder %s64, %s66
    %p73 = scmp.eq.s32.totalorder %s14, 1
    %p74 = por %p72, %p73
    %p75 = scmp.ne.s32.totalorder %s66, %s67
    %p76 = scmp.eq.s32.totalorder %s14, 0
    %p77 = por %p75, %p76
    %p78 = scmp.ne.s32.totalorder %s66, %s67
    %p79 = scmp.eq.s32.totalorder %s15, 1
    %p80 = por %p78, %p79
    %p82 = scmp.ne.s32.totalorder %s67, %s81
    %p83 = scmp.eq.s32.totalorder %s15, 0
    %p84 = por %p82, %p83
    %s85 = ssub.s32 %s9, %s16
    %p86 = scmp.eq.s32.totalorder %s85, 0
    %s88 = sadd.s32 %s87, 1
    %s89 = scalar_select %p86, %s87, %s88
    %p92 = pneg %p86
    %p93 = scmp.eq.s32.totalorder %s9, 1
    %p94 = por %p92, %p93
    %p95 = scmp.ne.s32.totalorder %s87, %s90
    %p96 = scmp.eq.s32.totalorder %s9, 0
    %p97 = por %p95, %p96
    %p98 = scmp.ne.s32.totalorder %s87, %s90
    %p99 = scmp.eq.s32.totalorder %s14, 1
    %p100 = por %p98, %p99
    %p101 = scmp.ne.s32.totalorder %s90, %s91
    %p102 = scmp.eq.s32.totalorder %s14, 0
    %p103 = por %p101, %p102
    %p104 = scmp.ne.s32.totalorder %s90, %s91
    %p105 = scmp.eq.s32.totalorder %s15, 1
    %p106 = por %p104, %p105
    %p108 = scmp.ne.s32.totalorder %s91, %s107
    %p109 = scmp.eq.s32.totalorder %s15, 0
    %p110 = por %p108, %p109
    %p111 = scmp.le.s32.totalorder 1, %s9
    %p112 = scmp.lt.s32.totalorder %s9, 3
    %p113 = pnand %p111, %p112
    %p114 = pneg %p113
    // Predicated region
    $region9: #{f_forward.4} parent=5 // pred_check
      _
    $region10: #{f_forward.4} parent=5 // pred_check_branch
      %116 = sbr.rel (%p113) target = $region12
    $region11: #{f_forward.4} parent=5 // pred_region
      %s117 = ssub.s32 %s9, 1
      // Predicated region
      $region13: #{f_forward.4} parent=11 // pred_check
        %p118 = pneg %p56
      $region14: #{f_forward.4} parent=11 // pred_check_branch
        %120 = sbr.rel (%p118) target = $region16
      $region15: #{f_forward.4} parent=11 // pred_region
        _
      $region16: #{f_forward.4} parent=11 // pred_fallthru
        _
      // Predicated region
      $region17: #{f_forward.4} parent=11 // pred_check
        %p121 = pneg %p77
      $region18: #{f_forward.4} parent=11 // pred_check_branch
        %123 = sbr.rel (%p121) target = $region20
      $region19: #{f_forward.4} parent=11 // pred_region
        _
      $region20: #{f_forward.4} parent=11 // pred_fallthru
        _
    $region12: #{f_forward.4} parent=5 // pred_fallthru
      _
    %p124 = scmp.lt.s32.totalorder %s9, 2
    // Predicated region
    $region21: #{f_forward.4} parent=5 // pred_check
      %p125 = pneg %p124
    $region22: #{f_forward.4} parent=5 // pred_check_branch
      %127 = sbr.rel (%p125) target = $region24
    $region23: #{f_forward.4} parent=5 // pred_region
      // Predicated region
      $region25: #{f_forward.4} parent=23 // pred_check
        %p128 = pneg %p29
      $region26: #{f_forward.4} parent=23 // pred_check_branch
        %130 = sbr.rel (%p128) target = $region28
      $region27: #{f_forward.4} parent=23 // pred_region
        %s131 = smul.u32 32, %s9
        %p132 = scmp.lt.s32.totalorder %s131, 63
        %s133 = scalar_select %p132, %s131, 63
        %s134 = smul.addr %s133, 4
        %s135 = scalar_lea.vmem %s0, %s134
        %s136 = smul.u32 32, %s9
      $region28: #{f_forward.4} parent=23 // pred_fallthru
        _
    $region24: #{f_forward.4} parent=5 // pred_fallthru
      _
    %p137 = scmp.le.s32.totalorder 1, %s9
    %p138 = scmp.lt.s32.totalorder %s9, 3
    %p139 = pnand %p137, %p138
    %p140 = pneg %p139
    // Predicated region
    $region29: #{f_forward.4} parent=5 // pred_check
      _
    $region30: #{f_forward.4} parent=5 // pred_check_branch
      %142 = sbr.rel (%p139) target = $region32
    $region31: #{f_forward.4} parent=5 // pred_region
      %s143 = ssub.s32 %s9, 1
      %s144 = smul.u32 32, %s14
      %p145 = scmp.lt.s32.totalorder %s144, 63
      %s146 = scalar_select %p145, %s144, 63
      %s147 = smul.addr %s146, 4
      %s148 = scalar_lea.vmem %s0, %s147
      %p149 = pneg %p35
      %p150 = pneg %p32
      %p151 = pneg %p56
      %p152 = pneg %p53
      %p153 = pneg %p77
      %p154 = pneg %p74
      %p155 = pneg %p103
      %p156 = pneg %p100
      %s157 = smul.u32 32, %s14
      %p158 = scmp.lt.s32.totalorder %s157, 63
      %s159 = scalar_select %p158, %s157, 63
      %s160 = smul.addr %s159, 4
      %s161 = scalar_lea.vmem %s3, %s160
      %s162 = smul.u32 32, %s14
      %p163 = scmp.lt.s32.totalorder %s162, 63
      %s164 = scalar_select %p163, %s162, 63
      %s165 = smul.addr %s164, 4
      %s166 = scalar_lea.vmem %s0, %s165
      %s167 = smul.u32 32, %s14
      %s168 = smul.u32 32, %s14
      %p169 = scmp.lt.s32.totalorder %s168, 63
      %s170 = scalar_select %p169, %s168, 63
      %s171 = smul.addr %s170, 4
      %s172 = scalar_lea.vmem %s3, %s171
      %s173 = smul.u32 32, %s14
      %v174 = vld [vmem:[%s166] sm:$0xf]
      %v175 = vld [vmem:[%s166 + $0x4] sm:$0xf]
      %v176 = vld [vmem:[%s166 + $0x8] sm:$0xf]
      %v177 = vld [vmem:[%s166 + $0xc] sm:$0xf]
      %v178 = vld [vmem:[%s166 + $0x10] sm:$0xf]
      %v179 = vld [vmem:[%s166 + $0x14] sm:$0xf]
      %v180 = vld [vmem:[%s166 + $0x18] sm:$0xf]
      %v181 = vld [vmem:[%s166 + $0x1c] sm:$0xf]
      %v182 = vld [vmem:[%s166 + $0x20] sm:$0xf]
      %v183 = vld [vmem:[%s166 + $0x24] sm:$0xf]
      %v184 = vld [vmem:[%s166 + $0x28] sm:$0xf]
      %v185 = vld [vmem:[%s166 + $0x2c] sm:$0xf]
      %v186 = vld [vmem:[%s166 + $0x30] sm:$0xf]
      %v187 = vld [vmem:[%s166 + $0x34] sm:$0xf]
      %v188 = vld [vmem:[%s166 + $0x38] sm:$0xf]
      %v189 = vld [vmem:[%s166 + $0x3c] sm:$0xf]
      %v190 = vld [vmem:[%s166 + $0x40] sm:$0xf]
      %v191 = vld [vmem:[%s166 + $0x44] sm:$0xf]
      %v192 = vld [vmem:[%s166 + $0x48] sm:$0xf]
      %v193 = vld [vmem:[%s166 + $0x4c] sm:$0xf]
      %v194 = vld [vmem:[%s166 + $0x50] sm:$0xf]
      %v195 = vld [vmem:[%s166 + $0x54] sm:$0xf]
      %v196 = vld [vmem:[%s166 + $0x58] sm:$0xf]
      %v197 = vld [vmem:[%s166 + $0x5c] sm:$0xf]
      %v198 = vld [vmem:[%s166 + $0x60] sm:$0xf]
      %v199 = vld [vmem:[%s166 + $0x64] sm:$0xf]
      %v200 = vld [vmem:[%s166 + $0x68] sm:$0xf]
      %v201 = vld [vmem:[%s166 + $0x6c] sm:$0xf]
      %v202 = vld [vmem:[%s166 + $0x70] sm:$0xf]
      %v203 = vld [vmem:[%s166 + $0x74] sm:$0xf]
      %v204 = vld [vmem:[%s166 + $0x78] sm:$0xf]
      %v205 = vld [vmem:[%s166 + $0x7c] sm:$0xf]
      %v206 = vld [vmem:[%s1] sm:$0xf]
      %v207 = vld [vmem:[%s1 + $0x4] sm:$0xf]
      %v208 = vld [vmem:[%s1 + $0x8] sm:$0xf]
      %v209 = vld [vmem:[%s1 + $0xc] sm:$0xf]
      %v210 = vld [vmem:[%s1 + $0x10] sm:$0xf]
      %v211 = vld [vmem:[%s1 + $0x14] sm:$0xf]
      %v212 = vld [vmem:[%s1 + $0x18] sm:$0xf]
      %v213 = vld [vmem:[%s1 + $0x1c] sm:$0xf]
      %v214 = vld [vmem:[%s1 + $0x20] sm:$0xf]
      %v215 = vld [vmem:[%s1 + $0x24] sm:$0xf]
      %v216 = vld [vmem:[%s1 + $0x28] sm:$0xf]
      %v217 = vld [vmem:[%s1 + $0x2c] sm:$0xf]
      %v218 = vld [vmem:[%s1 + $0x30] sm:$0xf]
      %v219 = vld [vmem:[%s1 + $0x34] sm:$0xf]
      %v220 = vld [vmem:[%s1 + $0x38] sm:$0xf]
      %v221 = vld [vmem:[%s1 + $0x3c] sm:$0xf]
      %v222 = vld [vmem:[%s2] sm:$0x1]
      %v224 = vperm.slane %v222, 0
      %v258 = vunpack.c.l.b16 %v174
      %v259 = vunpack.c.l.b16 %v175
      %v260 = vunpack.c.l.b16 %v176
      %v261 = vunpack.c.l.b16 %v177
      %v262 = vunpack.c.l.b16 %v178
      %v263 = vunpack.c.l.b16 %v179
      %v264 = vunpack.c.l.b16 %v180
      %v265 = vunpack.c.l.b16 %v181
      %v266 = vunpack.c.l.b16 %v182
      %v267 = vunpack.c.l.b16 %v183
      %v268 = vunpack.c.l.b16 %v184
      %v269 = vunpack.c.l.b16 %v185
      %v270 = vunpack.c.l.b16 %v186
      %v271 = vunpack.c.l.b16 %v187
      %v272 = vunpack.c.l.b16 %v188
      %v273 = vunpack.c.l.b16 %v189
      %v274 = vunpack.c.l.b16 %v190
      %v275 = vunpack.c.l.b16 %v191
      %v276 = vunpack.c.l.b16 %v192
      %v277 = vunpack.c.l.b16 %v193
      %v278 = vunpack.c.l.b16 %v194
      %v279 = vunpack.c.l.b16 %v195
      %v280 = vunpack.c.l.b16 %v196
      %v281 = vunpack.c.l.b16 %v197
      %v282 = vunpack.c.l.b16 %v198
      %v283 = vunpack.c.l.b16 %v199
      %v284 = vunpack.c.l.b16 %v200
      %v285 = vunpack.c.l.b16 %v201
      %v286 = vunpack.c.l.b16 %v202
      %v287 = vunpack.c.l.b16 %v203
      %v288 = vunpack.c.l.b16 %v204
      %v289 = vunpack.c.l.b16 %v205
      %v290 = vpack.c.b16 %v259, %v258
      %v291 = vpack.c.b16 %v261, %v260
      %v292 = vpack.c.b16 %v263, %v262
      %v293 = vpack.c.b16 %v265, %v264
      %v294 = vpack.c.b16 %v267, %v266
      %v295 = vpack.c.b16 %v269, %v268
      %v296 = vpack.c.b16 %v271, %v270
      %v297 = vpack.c.b16 %v273, %v272
      %v298 = vpack.c.b16 %v275, %v274
      %v299 = vpack.c.b16 %v277, %v276
      %v300 = vpack.c.b16 %v279, %v278
      %v301 = vpack.c.b16 %v281, %v280
      %v302 = vpack.c.b16 %v283, %v282
      %v303 = vpack.c.b16 %v285, %v284
      %v304 = vpack.c.b16 %v287, %v286
      %v305 = vpack.c.b16 %v289, %v288
      %v338 = vunpack.c.l.b16 %v206
      %v339 = vunpack.c.l.b16 %v207
      %v340 = vunpack.c.l.b16 %v208
      %v341 = vunpack.c.l.b16 %v209
      %v342 = vunpack.c.l.b16 %v210
      %v343 = vunpack.c.l.b16 %v211
      %v344 = vunpack.c.l.b16 %v212
      %v345 = vunpack.c.l.b16 %v213
      %v346 = vunpack.c.l.b16 %v214
      %v347 = vunpack.c.l.b16 %v215
      %v348 = vunpack.c.l.b16 %v216
      %v349 = vunpack.c.l.b16 %v217
      %v350 = vunpack.c.l.b16 %v218
      %v351 = vunpack.c.l.b16 %v219
      %v352 = vunpack.c.l.b16 %v220
      %v353 = vunpack.c.l.b16 %v221
      %v354 = vpack.c.b16 %v339, %v338
      %v355 = vpack.c.b16 %v341, %v340
      %v356 = vpack.c.b16 %v343, %v342
      %v357 = vpack.c.b16 %v345, %v344
      %v358 = vpack.c.b16 %v347, %v346
      %v359 = vpack.c.b16 %v349, %v348
      %v360 = vpack.c.b16 %v351, %v350
      %v361 = vpack.c.b16 %v353, %v352
      %370 = vmatpush.bf16.msra.mxu0 %v361
      %371 = vmatpush.bf16.msra.mxu0 %v360
      %372 = vmatpush.bf16.msra.mxu0 %v359
      %373 = vmatpush.bf16.msra.mxu0 %v358
      %374 = vmatpush.bf16.msra.mxu0 %v357
      %375 = vmatpush.bf16.msra.mxu0 %v356
      %376 = vmatpush.bf16.msra.mxu0 %v355
      %377 = vmatpush.bf16.msra.mxu0 %v354
      %378 = vmatmul.bf16.gmra.mxu0 %v290
      %v379 = vpop.f32.mrf.mxu0
      %v380 = vadd.f32 %v224, %v379
      %v381 = vpop.f32.mrf.mxu0
      %v382 = vadd.f32 %v224, %v381
      %383 = vmatmul.bf16.gmra.mxu0 %v291
      %v384 = vpop.f32.mrf.mxu0
      %v385 = vadd.f32 %v224, %v384
      %v386 = vpop.f32.mrf.mxu0
      %v387 = vadd.f32 %v224, %v386
      %388 = vmatmul.bf16.gmra.mxu0 %v292
      %v389 = vpop.f32.mrf.mxu0
      %v390 = vadd.f32 %v224, %v389
      %v391 = vpop.f32.mrf.mxu0
      %v392 = vadd.f32 %v224, %v391
      %393 = vmatmul.bf16.gmra.mxu0 %v293
      %v394 = vpop.f32.mrf.mxu0
      %v395 = vadd.f32 %v224, %v394
      %v396 = vpop.f32.mrf.mxu0
      %v397 = vadd.f32 %v224, %v396
      %398 = vmatmul.bf16.gmra.mxu0 %v294
      %v399 = vpop.f32.mrf.mxu0
      %v400 = vadd.f32 %v224, %v399
      %v401 = vpop.f32.mrf.mxu0
      %v402 = vadd.f32 %v224, %v401
      %403 = vmatmul.bf16.gmra.mxu0 %v295
      %v404 = vpop.f32.mrf.mxu0
      %v405 = vadd.f32 %v224, %v404
      %v406 = vpop.f32.mrf.mxu0
      %v407 = vadd.f32 %v224, %v406
      %408 = vmatmul.bf16.gmra.mxu0 %v296
      %v409 = vpop.f32.mrf.mxu0
      %v410 = vadd.f32 %v224, %v409
      %v411 = vpop.f32.mrf.mxu0
      %v412 = vadd.f32 %v224, %v411
      %413 = vmatmul.bf16.gmra.mxu0 %v297
      %v414 = vpop.f32.mrf.mxu0
      %v415 = vadd.f32 %v224, %v414
      %v416 = vpop.f32.mrf.mxu0
      %v417 = vadd.f32 %v224, %v416
      %418 = vmatmul.bf16.gmra.mxu0 %v298
      %v419 = vpop.f32.mrf.mxu0
      %v420 = vadd.f32 %v224, %v419
      %v421 = vpop.f32.mrf.mxu0
      %v422 = vadd.f32 %v224, %v421
      %423 = vmatmul.bf16.gmra.mxu0 %v299
      %v424 = vpop.f32.mrf.mxu0
      %v425 = vadd.f32 %v224, %v424
      %v426 = vpop.f32.mrf.mxu0
      %v427 = vadd.f32 %v224, %v426
      %428 = vmatmul.bf16.gmra.mxu0 %v300
      %v429 = vpop.f32.mrf.mxu0
      %v430 = vadd.f32 %v224, %v429
      %v431 = vpop.f32.mrf.mxu0
      %v432 = vadd.f32 %v224, %v431
      %433 = vmatmul.bf16.gmra.mxu0 %v301
      %v434 = vpop.f32.mrf.mxu0
      %v435 = vadd.f32 %v224, %v434
      %v436 = vpop.f32.mrf.mxu0
      %v437 = vadd.f32 %v224, %v436
      %438 = vmatmul.bf16.gmra.mxu0 %v302
      %v439 = vpop.f32.mrf.mxu0
      %v440 = vadd.f32 %v224, %v439
      %v441 = vpop.f32.mrf.mxu0
      %v442 = vadd.f32 %v224, %v441
      %443 = vmatmul.bf16.gmra.mxu0 %v303
      %v444 = vpop.f32.mrf.mxu0
      %v445 = vadd.f32 %v224, %v444
      %v446 = vpop.f32.mrf.mxu0
      %v447 = vadd.f32 %v224, %v446
      %448 = vmatmul.bf16.gmra.mxu0 %v304
      %v449 = vpop.f32.mrf.mxu0
      %v450 = vadd.f32 %v224, %v449
      %v451 = vpop.f32.mrf.mxu0
      %v452 = vadd.f32 %v224, %v451
      %453 = vmatmul.bf16.gmra.mxu0 %v305
      %v454 = vpop.f32.mrf.mxu0
      %v455 = vadd.f32 %v224, %v454
      %v456 = vpop.f32.mrf.mxu0
      %v457 = vadd.f32 %v224, %v456
      %458 = vdwg.mxu0
      %v459 = vmax.f32 %v380, 0.0
      %v460 = vmax.f32 %v382, 0.0
      %v461 = vmax.f32 %v385, 0.0
      %v462 = vmax.f32 %v387, 0.0
      %v463 = vmax.f32 %v390, 0.0
      %v464 = vmax.f32 %v392, 0.0
      %v465 = vmax.f32 %v395, 0.0
      %v466 = vmax.f32 %v397, 0.0
      %v467 = vmax.f32 %v400, 0.0
      %v468 = vmax.f32 %v402, 0.0
      %v469 = vmax.f32 %v405, 0.0
      %v470 = vmax.f32 %v407, 0.0
      %v471 = vmax.f32 %v410, 0.0
      %v472 = vmax.f32 %v412, 0.0
      %v473 = vmax.f32 %v415, 0.0
      %v474 = vmax.f32 %v417, 0.0
      %v475 = vmax.f32 %v420, 0.0
      %v476 = vmax.f32 %v422, 0.0
      %v477 = vmax.f32 %v425, 0.0
      %v478 = vmax.f32 %v427, 0.0
      %v479 = vmax.f32 %v430, 0.0
      %v480 = vmax.f32 %v432, 0.0
      %v481 = vmax.f32 %v435, 0.0
      %v482 = vmax.f32 %v437, 0.0
      %v483 = vmax.f32 %v440, 0.0
      %v484 = vmax.f32 %v442, 0.0
      %v485 = vmax.f32 %v445, 0.0
      %v486 = vmax.f32 %v447, 0.0
      %v487 = vmax.f32 %v450, 0.0
      %v488 = vmax.f32 %v452, 0.0
      %v489 = vmax.f32 %v455, 0.0
      %v490 = vmax.f32 %v457, 0.0
      %v491 = vpack.c.bf16 %v459, %v459
      %v492 = vpack.c.bf16 %v460, %v460
      %v493 = vpack.c.bf16 %v461, %v461
      %v494 = vpack.c.bf16 %v462, %v462
      %v495 = vpack.c.bf16 %v463, %v463
      %v496 = vpack.c.bf16 %v464, %v464
      %v497 = vpack.c.bf16 %v465, %v465
      %v498 = vpack.c.bf16 %v466, %v466
      %v499 = vpack.c.bf16 %v467, %v467
      %v500 = vpack.c.bf16 %v468, %v468
      %v501 = vpack.c.bf16 %v469, %v469
      %v502 = vpack.c.bf16 %v470, %v470
      %v503 = vpack.c.bf16 %v471, %v471
      %v504 = vpack.c.bf16 %v472, %v472
      %v505 = vpack.c.bf16 %v473, %v473
      %v506 = vpack.c.bf16 %v474, %v474
      %v507 = vpack.c.bf16 %v475, %v475
      %v508 = vpack.c.bf16 %v476, %v476
      %v509 = vpack.c.bf16 %v477, %v477
      %v510 = vpack.c.bf16 %v478, %v478
      %v511 = vpack.c.bf16 %v479, %v479
      %v512 = vpack.c.bf16 %v480, %v480
      %v513 = vpack.c.bf16 %v481, %v481
      %v514 = vpack.c.bf16 %v482, %v482
      %v515 = vpack.c.bf16 %v483, %v483
      %v516 = vpack.c.bf16 %v484, %v484
      %v517 = vpack.c.bf16 %v485, %v485
      %v518 = vpack.c.bf16 %v486, %v486
      %v519 = vpack.c.bf16 %v487, %v487
      %v520 = vpack.c.bf16 %v488, %v488
      %v521 = vpack.c.bf16 %v489, %v489
      %v522 = vpack.c.bf16 %v490, %v490
      %523 = vst [vmem:[%s172] sm:$0xf] %v491
      %524 = vst [vmem:[%s172 + $0x4] sm:$0xf] %v492
      %525 = vst [vmem:[%s172 + $0x8] sm:$0xf] %v493
      %526 = vst [vmem:[%s172 + $0xc] sm:$0xf] %v494
      %527 = vst [vmem:[%s172 + $0x10] sm:$0xf] %v495
      %528 = vst [vmem:[%s172 + $0x14] sm:$0xf] %v496
      %529 = vst [vmem:[%s172 + $0x18] sm:$0xf] %v497
      %530 = vst [vmem:[%s172 + $0x1c] sm:$0xf] %v498
      %531 = vst [vmem:[%s172 + $0x20] sm:$0xf] %v499
      %532 = vst [vmem:[%s172 + $0x24] sm:$0xf] %v500
      %533 = vst [vmem:[%s172 + $0x28] sm:$0xf] %v501
      %534 = vst [vmem:[%s172 + $0x2c] sm:$0xf] %v502
      %535 = vst [vmem:[%s172 + $0x30] sm:$0xf] %v503
      %536 = vst [vmem:[%s172 + $0x34] sm:$0xf] %v504
      %537 = vst [vmem:[%s172 + $0x38] sm:$0xf] %v505
      %538 = vst [vmem:[%s172 + $0x3c] sm:$0xf] %v506
      %539 = vst [vmem:[%s172 + $0x40] sm:$0xf] %v507
      %540 = vst [vmem:[%s172 + $0x44] sm:$0xf] %v508
      %541 = vst [vmem:[%s172 + $0x48] sm:$0xf] %v509
      %542 = vst [vmem:[%s172 + $0x4c] sm:$0xf] %v510
      %543 = vst [vmem:[%s172 + $0x50] sm:$0xf] %v511
      %544 = vst [vmem:[%s172 + $0x54] sm:$0xf] %v512
      %545 = vst [vmem:[%s172 + $0x58] sm:$0xf] %v513
      %546 = vst [vmem:[%s172 + $0x5c] sm:$0xf] %v514
      %547 = vst [vmem:[%s172 + $0x60] sm:$0xf] %v515
      %548 = vst [vmem:[%s172 + $0x64] sm:$0xf] %v516
      %549 = vst [vmem:[%s172 + $0x68] sm:$0xf] %v517
      %550 = vst [vmem:[%s172 + $0x6c] sm:$0xf] %v518
      %551 = vst [vmem:[%s172 + $0x70] sm:$0xf] %v519
      %552 = vst [vmem:[%s172 + $0x74] sm:$0xf] %v520
      %553 = vst [vmem:[%s172 + $0x78] sm:$0xf] %v521
      %554 = vst [vmem:[%s172 + $0x7c] sm:$0xf] %v522
      %s555 = smul.u32 32, %s14
      %p556 = scmp.lt.s32.totalorder %s555, 63
      %s557 = scalar_select %p556, %s555, 63
      %s558 = smul.addr %s557, 4
      %s559 = scalar_lea.vmem %s3, %s558
      // Predicated region
      $region33: #{f_forward.4} parent=31 // pred_check
        %p560 = pneg %p100
      $region34: #{f_forward.4} parent=31 // pred_check_branch
        %562 = sbr.rel (%p560) target = $region36
      $region35: #{f_forward.4} parent=31 // pred_region
        %s563 = smul.u32 32, %s14
      $region36: #{f_forward.4} parent=31 // pred_fallthru
        _
    $region32: #{f_forward.4} parent=5 // pred_fallthru
      _
    %p564 = scmp.le.s32.totalorder 2, %s9
    // Predicated region
    $region37: #{f_forward.4} parent=5 // pred_check
      %p565 = pneg %p564
    $region38: #{f_forward.4} parent=5 // pred_check_branch
      %567 = sbr.rel (%p565) target = $region40
    $region39: #{f_forward.4} parent=5 // pred_region
      %s568 = ssub.s32 %s9, 2
      // Predicated region
      $region41: #{f_forward.4} parent=39 // pred_check
        %p569 = pneg %p106
      $region42: #{f_forward.4} parent=39 // pred_check_branch
        %571 = sbr.rel (%p569) target = $region44
      $region43: #{f_forward.4} parent=39 // pred_region
        %s572 = smul.u32 32, %s15
        %p573 = scmp.lt.s32.totalorder %s572, 63
        %s574 = scalar_select %p573, %s572, 63
        %s575 = smul.addr %s574, 4
        %s576 = scalar_lea.vmem %s3, %s575
      $region44: #{f_forward.4} parent=39 // pred_fallthru
        _
    $region40: #{f_forward.4} parent=5 // pred_fallthru
      _
  $region6: #{f_forward.4} parent=0 // loop_footer
    %s13 = sadd.s32 1, %s9
  $region7: #{f_forward.4} parent=0 // loop_footer_branch
    %8 = sbr.rel target = $region3
  $region8: #{f_forward.4} parent=0 // loop_exit
    _

// kernel: f_forward.5
$region0: #{f_forward.5}
  #allocation0 [shape = 'u32[]', space=smem, size = 0x4, offset = 0x4, fixed_abs, tag = 'smem constant byte address 0x4 - core index']
  #allocation1 [shape = 'u32[72,128]{1,0:T(1,128)}', space=vmem, size = 0x9000, scoped, tag = 'internal scratch']
  %s0 = inlined_call_operand.vmem [shape: bf16[128,1152], index: 0, kind: input, shape index: {}]
  %s1 = inlined_call_operand.vmem [shape: bf16[1152,128], index: 1, kind: input, shape index: {}]
  %s2 = inlined_call_operand.vmem [shape: f32[1,128], index: 2, kind: input, shape index: {}]
  %s3 = inlined_call_operand.vmem [shape: bf16[128,128], index: 3, kind: output, shape index: {}]
  %s4 = sld [smem:[#allocation0]]
  $region22: #{f_forward.5} parent=0
    _
  %s6 = ssub.s32 1, %s4
  %s7 = scalar_select 0, %s6, %s4
  // Predicated region
  $region2: #{f_forward.5} parent=0 // pred_check
    _
  $region3: #{f_forward.5} parent=0 // pred_check_branch
    %9 = sbr.rel (0) target = $region5
  $region4: #{f_forward.5} parent=0 // pred_region
    _
  $region5: #{f_forward.5} parent=0 // pred_fallthru
    _
  // Predicated region
  $region6: #{f_forward.5} parent=0 // pred_check
    _
  $region7: #{f_forward.5} parent=0 // pred_check_branch
    %11 = sbr.rel (0) target = $region9
  $region8: #{f_forward.5} parent=0 // pred_region
    _
  $region9: #{f_forward.5} parent=0 // pred_fallthru
    _
  // Predicated region
  $region10: #{f_forward.5} parent=0 // pred_check
    _
  $region11: #{f_forward.5} parent=0 // pred_check_branch
    %13 = sbr.rel (0) target = $region13
  $region12: #{f_forward.5} parent=0 // pred_region
    _
  $region13: #{f_forward.5} parent=0 // pred_fallthru
    _
  %v14 = vld [vmem:[%s0] sm:$0xff]
  %v15 = vld [vmem:[%s0 + $0x8] sm:$0xff]
  %v16 = vld [vmem:[%s0 + $0x10] sm:$0xff]
  %v17 = vld [vmem:[%s0 + $0x18] sm:$0xff]
  %v18 = vld [vmem:[%s0 + $0x20] sm:$0xf]
  %v19 = vld [vmem:[%s0 + $0x24] sm:$0xff]
  %v20 = vld [vmem:[%s0 + $0x2c] sm:$0xff]
  %v21 = vld [vmem:[%s0 + $0x34] sm:$0xff]
  %v22 = vld [vmem:[%s0 + $0x3c] sm:$0xff]
  %v23 = vld [vmem:[%s0 + $0x44] sm:$0xf]
  %v24 = vld [vmem:[%s0 + $0x48] sm:$0xff]
  %v25 = vld [vmem:[%s0 + $0x50] sm:$0xff]
  %v26 = vld [vmem:[%s0 + $0x58] sm:$0xff]
  %v27 = vld [vmem:[%s0 + $0x60] sm:$0xff]
  %v28 = vld [vmem:[%s0 + $0x68] sm:$0xf]
  %v29 = vld [vmem:[%s0 + $0x6c] sm:$0xff]
  %v30 = vld [vmem:[%s0 + $0x74] sm:$0xff]
  %v31 = vld [vmem:[%s0 + $0x7c] sm:$0xff]
  %v32 = vld [vmem:[%s0 + $0x84] sm:$0xff]
  %v33 = vld [vmem:[%s0 + $0x8c] sm:$0xf]
  %v34 = vld [vmem:[%s0 + $0x90] sm:$0xff]
  %v35 = vld [vmem:[%s0 + $0x98] sm:$0xff]
  %v36 = vld [vmem:[%s0 + $0xa0] sm:$0xff]
  %v37 = vld [vmem:[%s0 + $0xa8] sm:$0xff]
  %v38 = vld [vmem:[%s0 + $0xb0] sm:$0xf]
  %v39 = vld [vmem:[%s0 + $0xb4] sm:$0xff]
  %v40 = vld [vmem:[%s0 + $0xbc] sm:$0xff]
  %v41 = vld [vmem:[%s0 + $0xc4] sm:$0xff]
  %v42 = vld [vmem:[%s0 + $0xcc] sm:$0xff]
  %v43 = vld [vmem:[%s0 + $0xd4] sm:$0xf]
  %v44 = vld [vmem:[%s0 + $0xd8] sm:$0xff]
  %v45 = vld [vmem:[%s0 + $0xe0] sm:$0xff]
  %v46 = vld [vmem:[%s0 + $0xe8] sm:$0xff]
  %v47 = vld [vmem:[%s0 + $0xf0] sm:$0xff]
  %v48 = vld [vmem:[%s0 + $0xf8] sm:$0xf]
  %v49 = vld [vmem:[%s0 + $0xfc] sm:$0xff]
  %v50 = vld [vmem:[%s0 + $0x104] sm:$0xff]
  %v51 = vld [vmem:[%s0 + $0x10c] sm:$0xff]
  %v52 = vld [vmem:[%s0 + $0x114] sm:$0xff]
  %v53 = vld [vmem:[%s0 + $0x11c] sm:$0xf]
  %v54 = vld [vmem:[%s0 + $0x120] sm:$0xff]
  %v55 = vld [vmem:[%s0 + $0x128] sm:$0xff]
  %v56 = vld [vmem:[%s0 + $0x130] sm:$0xff]
  %v57 = vld [vmem:[%s0 + $0x138] sm:$0xff]
  %v58 = vld [vmem:[%s0 + $0x140] sm:$0xf]
  %v59 = vld [vmem:[%s0 + $0x144] sm:$0xff]
  %v60 = vld [vmem:[%s0 + $0x14c] sm:$0xff]
  %v61 = vld [vmem:[%s0 + $0x154] sm:$0xff]
  %v62 = vld [vmem:[%s0 + $0x15c] sm:$0xff]
  %v63 = vld [vmem:[%s0 + $0x164] sm:$0xf]
  %v64 = vld [vmem:[%s0 + $0x168] sm:$0xff]
  %v65 = vld [vmem:[%s0 + $0x170] sm:$0xff]
  %v66 = vld [vmem:[%s0 + $0x178] sm:$0xff]
  %v67 = vld [vmem:[%s0 + $0x180] sm:$0xff]
  %v68 = vld [vmem:[%s0 + $0x188] sm:$0xf]
  %v69 = vld [vmem:[%s0 + $0x18c] sm:$0xff]
  %v70 = vld [vmem:[%s0 + $0x194] sm:$0xff]
  %v71 = vld [vmem:[%s0 + $0x19c] sm:$0xff]
  %v72 = vld [vmem:[%s0 + $0x1a4] sm:$0xff]
  %v73 = vld [vmem:[%s0 + $0x1ac] sm:$0xf]
  %v74 = vld [vmem:[%s0 + $0x1b0] sm:$0xff]
  %v75 = vld [vmem:[%s0 + $0x1b8] sm:$0xff]
  %v76 = vld [vmem:[%s0 + $0x1c0] sm:$0xff]
  %v77 = vld [vmem:[%s0 + $0x1c8] sm:$0xff]
  %v78 = vld [vmem:[%s0 + $0x1d0] sm:$0xf]
  %v79 = vld [vmem:[%s0 + $0x1d4] sm:$0xff]
  %v80 = vld [vmem:[%s0 + $0x1dc] sm:$0xff]
  %v81 = vld [vmem:[%s0 + $0x1e4] sm:$0xff]
  %v82 = vld [vmem:[%s0 + $0x1ec] sm:$0xff]
  %v83 = vld [vmem:[%s0 + $0x1f4] sm:$0xf]
  %v84 = vld [vmem:[%s0 + $0x1f8] sm:$0xff]
  %v85 = vld [vmem:[%s0 + $0x200] sm:$0xff]
  %v86 = vld [vmem:[%s0 + $0x208] sm:$0xff]
  %v87 = vld [vmem:[%s0 + $0x210] sm:$0xff]
  %v88 = vld [vmem:[%s0 + $0x218] sm:$0xf]
  %v89 = vld [vmem:[%s0 + $0x21c] sm:$0xff]
  %v90 = vld [vmem:[%s0 + $0x224] sm:$0xff]
  %v91 = vld [vmem:[%s0 + $0x22c] sm:$0xff]
  %v92 = vld [vmem:[%s0 + $0x234] sm:$0xff]
  %v93 = vld [vmem:[%s0 + $0x23c] sm:$0xf]
  %v94 = vld [vmem:[%s1] sm:$0xf]
  %v95 = vld [vmem:[%s1 + $0x4] sm:$0xf]
  %v96 = vld [vmem:[%s1 + $0x8] sm:$0xf]
  %v97 = vld [vmem:[%s1 + $0xc] sm:$0xf]
  %v98 = vld [vmem:[%s1 + $0x10] sm:$0xf]
  %v99 = vld [vmem:[%s1 + $0x14] sm:$0xf]
  %v100 = vld [vmem:[%s1 + $0x18] sm:$0xf]
  %v101 = vld [vmem:[%s1 + $0x1c] sm:$0xf]
  %v102 = vld [vmem:[%s1 + $0x20] sm:$0xf]
  %v103 = vld [vmem:[%s1 + $0x24] sm:$0xf]
  %v104 = vld [vmem:[%s1 + $0x28] sm:$0xf]
  %v105 = vld [vmem:[%s1 + $0x2c] sm:$0xf]
  %v106 = vld [vmem:[%s1 + $0x30] sm:$0xf]
  %v107 = vld [vmem:[%s1 + $0x34] sm:$0xf]
  %v108 = vld [vmem:[%s1 + $0x38] sm:$0xf]
  %v109 = vld [vmem:[%s1 + $0x3c] sm:$0xf]
  %v110 = vld [vmem:[%s1 + $0x40] sm:$0xf]
  %v111 = vld [vmem:[%s1 + $0x44] sm:$0xf]
  %v112 = vld [vmem:[%s1 + $0x48] sm:$0xf]
  %v113 = vld [vmem:[%s1 + $0x4c] sm:$0xf]
  %v114 = vld [vmem:[%s1 + $0x50] sm:$0xf]
  %v115 = vld [vmem:[%s1 + $0x54] sm:$0xf]
  %v116 = vld [vmem:[%s1 + $0x58] sm:$0xf]
  %v117 = vld [vmem:[%s1 + $0x5c] sm:$0xf]
  %v118 = vld [vmem:[%s1 + $0x60] sm:$0xf]
  %v119 = vld [vmem:[%s1 + $0x64] sm:$0xf]
  %v120 = vld [vmem:[%s1 + $0x68] sm:$0xf]
  %v121 = vld [vmem:[%s1 + $0x6c] sm:$0xf]
  %v122 = vld [vmem:[%s1 + $0x70] sm:$0xf]
  %v123 = vld [vmem:[%s1 + $0x74] sm:$0xf]
  %v124 = vld [vmem:[%s1 + $0x78] sm:$0xf]
  %v125 = vld [vmem:[%s1 + $0x7c] sm:$0xf]
  %v126 = vld [vmem:[%s1 + $0x80] sm:$0xf]
  %v127 = vld [vmem:[%s1 + $0x84] sm:$0xf]
  %v128 = vld [vmem:[%s1 + $0x88] sm:$0xf]
  %v129 = vld [vmem:[%s1 + $0x8c] sm:$0xf]
  %v130 = vld [vmem:[%s1 + $0x90] sm:$0xf]
  %v131 = vld [vmem:[%s1 + $0x94] sm:$0xf]
  %v132 = vld [vmem:[%s1 + $0x98] sm:$0xf]
  %v133 = vld [vmem:[%s1 + $0x9c] sm:$0xf]
  %v134 = vld [vmem:[%s1 + $0xa0] sm:$0xf]
  %v135 = vld [vmem:[%s1 + $0xa4] sm:$0xf]
  %v136 = vld [vmem:[%s1 + $0xa8] sm:$0xf]
  %v137 = vld [vmem:[%s1 + $0xac] sm:$0xf]
  %v138 = vld [vmem:[%s1 + $0xb0] sm:$0xf]
  %v139 = vld [vmem:[%s1 + $0xb4] sm:$0xf]
  %v140 = vld [vmem:[%s1 + $0xb8] sm:$0xf]
  %v141 = vld [vmem:[%s1 + $0xbc] sm:$0xf]
  %v142 = vld [vmem:[%s1 + $0xc0] sm:$0xf]
  %v143 = vld [vmem:[%s1 + $0xc4] sm:$0xf]
  %v144 = vld [vmem:[%s1 + $0xc8] sm:$0xf]
  %v145 = vld [vmem:[%s1 + $0xcc] sm:$0xf]
  %v146 = vld [vmem:[%s1 + $0xd0] sm:$0xf]
  %v147 = vld [vmem:[%s1 + $0xd4] sm:$0xf]
  %v148 = vld [vmem:[%s1 + $0xd8] sm:$0xf]
  %v149 = vld [vmem:[%s1 + $0xdc] sm:$0xf]
  %v150 = vld [vmem:[%s1 + $0xe0] sm:$0xf]
  %v151 = vld [vmem:[%s1 + $0xe4] sm:$0xf]
  %v152 = vld [vmem:[%s1 + $0xe8] sm:$0xf]
  %v153 = vld [vmem:[%s1 + $0xec] sm:$0xf]
  %v154 = vld [vmem:[%s1 + $0xf0] sm:$0xf]
  %v155 = vld [vmem:[%s1 + $0xf4] sm:$0xf]
  %v156 = vld [vmem:[%s1 + $0xf8] sm:$0xf]
  %v157 = vld [vmem:[%s1 + $0xfc] sm:$0xf]
  %v158 = vld [vmem:[%s1 + $0x100] sm:$0xf]
  %v159 = vld [vmem:[%s1 + $0x104] sm:$0xf]
  %v160 = vld [vmem:[%s1 + $0x108] sm:$0xf]
  %v161 = vld [vmem:[%s1 + $0x10c] sm:$0xf]
  %v162 = vld [vmem:[%s1 + $0x110] sm:$0xf]
  %v163 = vld [vmem:[%s1 + $0x114] sm:$0xf]
  %v164 = vld [vmem:[%s1 + $0x118] sm:$0xf]
  %v165 = vld [vmem:[%s1 + $0x11c] sm:$0xf]
  %v166 = vld [vmem:[%s1 + $0x120] sm:$0xf]
  %v167 = vld [vmem:[%s1 + $0x124] sm:$0xf]
  %v168 = vld [vmem:[%s1 + $0x128] sm:$0xf]
  %v169 = vld [vmem:[%s1 + $0x12c] sm:$0xf]
  %v170 = vld [vmem:[%s1 + $0x130] sm:$0xf]
  %v171 = vld [vmem:[%s1 + $0x134] sm:$0xf]
  %v172 = vld [vmem:[%s1 + $0x138] sm:$0xf]
  %v173 = vld [vmem:[%s1 + $0x13c] sm:$0xf]
  %v174 = vld [vmem:[%s1 + $0x140] sm:$0xf]
  %v175 = vld [vmem:[%s1 + $0x144] sm:$0xf]
  %v176 = vld [vmem:[%s1 + $0x148] sm:$0xf]
  %v177 = vld [vmem:[%s1 + $0x14c] sm:$0xf]
  %v178 = vld [vmem:[%s1 + $0x150] sm:$0xf]
  %v179 = vld [vmem:[%s1 + $0x154] sm:$0xf]
  %v180 = vld [vmem:[%s1 + $0x158] sm:$0xf]
  %v181 = vld [vmem:[%s1 + $0x15c] sm:$0xf]
  %v182 = vld [vmem:[%s1 + $0x160] sm:$0xf]
  %v183 = vld [vmem:[%s1 + $0x164] sm:$0xf]
  %v184 = vld [vmem:[%s1 + $0x168] sm:$0xf]
  %v185 = vld [vmem:[%s1 + $0x16c] sm:$0xf]
  %v186 = vld [vmem:[%s1 + $0x170] sm:$0xf]
  %v187 = vld [vmem:[%s1 + $0x174] sm:$0xf]
  %v188 = vld [vmem:[%s1 + $0x178] sm:$0xf]
  %v189 = vld [vmem:[%s1 + $0x17c] sm:$0xf]
  %v190 = vld [vmem:[%s1 + $0x180] sm:$0xf]
  %v191 = vld [vmem:[%s1 + $0x184] sm:$0xf]
  %v192 = vld [vmem:[%s1 + $0x188] sm:$0xf]
  %v193 = vld [vmem:[%s1 + $0x18c] sm:$0xf]
  %v194 = vld [vmem:[%s1 + $0x190] sm:$0xf]
  %v195 = vld [vmem:[%s1 + $0x194] sm:$0xf]
  %v196 = vld [vmem:[%s1 + $0x198] sm:$0xf]
  %v197 = vld [vmem:[%s1 + $0x19c] sm:$0xf]
  %v198 = vld [vmem:[%s1 + $0x1a0] sm:$0xf]
  %v199 = vld [vmem:[%s1 + $0x1a4] sm:$0xf]
  %v200 = vld [vmem:[%s1 + $0x1a8] sm:$0xf]
  %v201 = vld [vmem:[%s1 + $0x1ac] sm:$0xf]
  %v202 = vld [vmem:[%s1 + $0x1b0] sm:$0xf]
  %v203 = vld [vmem:[%s1 + $0x1b4] sm:$0xf]
  %v204 = vld [vmem:[%s1 + $0x1b8] sm:$0xf]
  %v205 = vld [vmem:[%s1 + $0x1bc] sm:$0xf]
  %v206 = vld [vmem:[%s1 + $0x1c0] sm:$0xf]
  %v207 = vld [vmem:[%s1 + $0x1c4] sm:$0xf]
  %v208 = vld [vmem:[%s1 + $0x1c8] sm:$0xf]
  %v209 = vld [vmem:[%s1 + $0x1cc] sm:$0xf]
  %v210 = vld [vmem:[%s1 + $0x1d0] sm:$0xf]
  %v211 = vld [vmem:[%s1 + $0x1d4] sm:$0xf]
  %v212 = vld [vmem:[%s1 + $0x1d8] sm:$0xf]
  %v213 = vld [vmem:[%s1 + $0x1dc] sm:$0xf]
  %v214 = vld [vmem:[%s1 + $0x1e0] sm:$0xf]
  %v215 = vld [vmem:[%s1 + $0x1e4] sm:$0xf]
  %v216 = vld [vmem:[%s1 + $0x1e8] sm:$0xf]
  %v217 = vld [vmem:[%s1 + $0x1ec] sm:$0xf]
  %v218 = vld [vmem:[%s1 + $0x1f0] sm:$0xf]
  %v219 = vld [vmem:[%s1 + $0x1f4] sm:$0xf]
  %v220 = vld [vmem:[%s1 + $0x1f8] sm:$0xf]
  %v221 = vld [vmem:[%s1 + $0x1fc] sm:$0xf]
  %v222 = vld [vmem:[%s1 + $0x200] sm:$0xf]
  %v223 = vld [vmem:[%s1 + $0x204] sm:$0xf]
  %v224 = vld [vmem:[%s1 + $0x208] sm:$0xf]
  %v225 = vld [vmem:[%s1 + $0x20c] sm:$0xf]
  %v226 = vld [vmem:[%s1 + $0x210] sm:$0xf]
  %v227 = vld [vmem:[%s1 + $0x214] sm:$0xf]
  %v228 = vld [vmem:[%s1 + $0x218] sm:$0xf]
  %v229 = vld [vmem:[%s1 + $0x21c] sm:$0xf]
  %v230 = vld [vmem:[%s1 + $0x220] sm:$0xf]
  %v231 = vld [vmem:[%s1 + $0x224] sm:$0xf]
  %v232 = vld [vmem:[%s1 + $0x228] sm:$0xf]
  %v233 = vld [vmem:[%s1 + $0x22c] sm:$0xf]
  %v234 = vld [vmem:[%s1 + $0x230] sm:$0xf]
  %v235 = vld [vmem:[%s1 + $0x234] sm:$0xf]
  %v236 = vld [vmem:[%s1 + $0x238] sm:$0xf]
  %v237 = vld [vmem:[%s1 + $0x23c] sm:$0xf]
  %v238 = vld [vmem:[%s2] sm:$0x1]
  %v240 = vperm.slane %v238, 0
  %v322 = vunpack.c.l.b16 %v14
  %v323 = vunpack.c.h.b16 %v14
  %v324 = vunpack.c.l.b16 %v15
  %v325 = vunpack.c.h.b16 %v15
  %v326 = vunpack.c.l.b16 %v16
  %v327 = vunpack.c.h.b16 %v16
  %v328 = vunpack.c.l.b16 %v17
  %v329 = vunpack.c.h.b16 %v17
  %v330 = vunpack.c.l.b16 %v18
  %v331 = vunpack.c.l.b16 %v19
  %v332 = vunpack.c.h.b16 %v19
  %v333 = vunpack.c.l.b16 %v20
  %v334 = vunpack.c.h.b16 %v20
  %v335 = vunpack.c.l.b16 %v21
  %v336 = vunpack.c.h.b16 %v21
  %v337 = vunpack.c.l.b16 %v22
  %v338 = vunpack.c.h.b16 %v22
  %v339 = vunpack.c.l.b16 %v23
  %v340 = vunpack.c.l.b16 %v24
  %v341 = vunpack.c.h.b16 %v24
  %v342 = vunpack.c.l.b16 %v25
  %v343 = vunpack.c.h.b16 %v25
  %v344 = vunpack.c.l.b16 %v26
  %v345 = vunpack.c.h.b16 %v26
  %v346 = vunpack.c.l.b16 %v27
  %v347 = vunpack.c.h.b16 %v27
  %v348 = vunpack.c.l.b16 %v28
  %v349 = vunpack.c.l.b16 %v29
  %v350 = vunpack.c.h.b16 %v29
  %v351 = vunpack.c.l.b16 %v30
  %v352 = vunpack.c.h.b16 %v30
  %v353 = vunpack.c.l.b16 %v31
  %v354 = vunpack.c.h.b16 %v31
  %v355 = vunpack.c.l.b16 %v32
  %v356 = vunpack.c.h.b16 %v32
  %v357 = vunpack.c.l.b16 %v33
  %v358 = vunpack.c.l.b16 %v34
  %v359 = vunpack.c.h.b16 %v34
  %v360 = vunpack.c.l.b16 %v35
  %v361 = vunpack.c.h.b16 %v35
  %v362 = vunpack.c.l.b16 %v36
  %v363 = vunpack.c.h.b16 %v36
  %v364 = vunpack.c.l.b16 %v37
  %v365 = vunpack.c.h.b16 %v37
  %v366 = vunpack.c.l.b16 %v38
  %v367 = vunpack.c.l.b16 %v39
  %v368 = vunpack.c.h.b16 %v39
  %v369 = vunpack.c.l.b16 %v40
  %v370 = vunpack.c.h.b16 %v40
  %v371 = vunpack.c.l.b16 %v41
  %v372 = vunpack.c.h.b16 %v41
  %v373 = vunpack.c.l.b16 %v42
  %v374 = vunpack.c.h.b16 %v42
  %v375 = vunpack.c.l.b16 %v43
  %v376 = vunpack.c.l.b16 %v44
  %v377 = vunpack.c.h.b16 %v44
  %v378 = vunpack.c.l.b16 %v45
  %v379 = vunpack.c.h.b16 %v45
  %v380 = vunpack.c.l.b16 %v46
  %v381 = vunpack.c.h.b16 %v46
  %v382 = vunpack.c.l.b16 %v47
  %v383 = vunpack.c.h.b16 %v47
  %v384 = vunpack.c.l.b16 %v48
  %v385 = vunpack.c.l.b16 %v49
  %v386 = vunpack.c.h.b16 %v49
  %v387 = vunpack.c.l.b16 %v50
  %v388 = vunpack.c.h.b16 %v50
  %v389 = vunpack.c.l.b16 %v51
  %v390 = vunpack.c.h.b16 %v51
  %v391 = vunpack.c.l.b16 %v52
  %v392 = vunpack.c.h.b16 %v52
  %v393 = vunpack.c.l.b16 %v53
  %v394 = vunpack.c.l.b16 %v54
  %v395 = vunpack.c.h.b16 %v54
  %v396 = vunpack.c.l.b16 %v55
  %v397 = vunpack.c.h.b16 %v55
  %v398 = vunpack.c.l.b16 %v56
  %v399 = vunpack.c.h.b16 %v56
  %v400 = vunpack.c.l.b16 %v57
  %v401 = vunpack.c.h.b16 %v57
  %v402 = vunpack.c.l.b16 %v58
  %v403 = vunpack.c.l.b16 %v59
  %v404 = vunpack.c.h.b16 %v59
  %v405 = vunpack.c.l.b16 %v60
  %v406 = vunpack.c.h.b16 %v60
  %v407 = vunpack.c.l.b16 %v61
  %v408 = vunpack.c.h.b16 %v61
  %v409 = vunpack.c.l.b16 %v62
  %v410 = vunpack.c.h.b16 %v62
  %v411 = vunpack.c.l.b16 %v63
  %v412 = vunpack.c.l.b16 %v64
  %v413 = vunpack.c.h.b16 %v64
  %v414 = vunpack.c.l.b16 %v65
  %v415 = vunpack.c.h.b16 %v65
  %v416 = vunpack.c.l.b16 %v66
  %v417 = vunpack.c.h.b16 %v66
  %v418 = vunpack.c.l.b16 %v67
  %v419 = vunpack.c.h.b16 %v67
  %v420 = vunpack.c.l.b16 %v68
  %v421 = vunpack.c.l.b16 %v69
  %v422 = vunpack.c.h.b16 %v69
  %v423 = vunpack.c.l.b16 %v70
  %v424 = vunpack.c.h.b16 %v70
  %v425 = vunpack.c.l.b16 %v71
  %v426 = vunpack.c.h.b16 %v71
  %v427 = vunpack.c.l.b16 %v72
  %v428 = vunpack.c.h.b16 %v72
  %v429 = vunpack.c.l.b16 %v73
  %v430 = vunpack.c.l.b16 %v74
  %v431 = vunpack.c.h.b16 %v74
  %v432 = vunpack.c.l.b16 %v75
  %v433 = vunpack.c.h.b16 %v75
  %v434 = vunpack.c.l.b16 %v76
  %v435 = vunpack.c.h.b16 %v76
  %v436 = vunpack.c.l.b16 %v77
  %v437 = vunpack.c.h.b16 %v77
  %v438 = vunpack.c.l.b16 %v78
  %v439 = vunpack.c.l.b16 %v79
  %v440 = vunpack.c.h.b16 %v79
  %v441 = vunpack.c.l.b16 %v80
  %v442 = vunpack.c.h.b16 %v80
  %v443 = vunpack.c.l.b16 %v81
  %v444 = vunpack.c.h.b16 %v81
  %v445 = vunpack.c.l.b16 %v82
  %v446 = vunpack.c.h.b16 %v82
  %v447 = vunpack.c.l.b16 %v83
  %v448 = vunpack.c.l.b16 %v84
  %v449 = vunpack.c.h.b16 %v84
  %v450 = vunpack.c.l.b16 %v85
  %v451 = vunpack.c.h.b16 %v85
  %v452 = vunpack.c.l.b16 %v86
  %v453 = vunpack.c.h.b16 %v86
  %v454 = vunpack.c.l.b16 %v87
  %v455 = vunpack.c.h.b16 %v87
  %v456 = vunpack.c.l.b16 %v88
  %v457 = vunpack.c.l.b16 %v89
  %v458 = vunpack.c.h.b16 %v89
  %v459 = vunpack.c.l.b16 %v90
  %v460 = vunpack.c.h.b16 %v90
  %v461 = vunpack.c.l.b16 %v91
  %v462 = vunpack.c.h.b16 %v91
  %v463 = vunpack.c.l.b16 %v92
  %v464 = vunpack.c.h.b16 %v92
  %v465 = vunpack.c.l.b16 %v93
  %v466 = vpack.c.b16 %v331, %v322
  %v467 = vpack.c.b16 %v332, %v323
  %v468 = vpack.c.b16 %v333, %v324
  %v469 = vpack.c.b16 %v334, %v325
  %v470 = vpack.c.b16 %v335, %v326
  %v471 = vpack.c.b16 %v336, %v327
  %v472 = vpack.c.b16 %v337, %v328
  %v473 = vpack.c.b16 %v338, %v329
  %v474 = vpack.c.b16 %v339, %v330
  %v475 = vpack.c.b16 %v349, %v340
  %v476 = vpack.c.b16 %v350, %v341
  %v477 = vpack.c.b16 %v351, %v342
  %v478 = vpack.c.b16 %v352, %v343
  %v479 = vpack.c.b16 %v353, %v344
  %v480 = vpack.c.b16 %v354, %v345
  %v481 = vpack.c.b16 %v355, %v346
  %v482 = vpack.c.b16 %v356, %v347
  %v483 = vpack.c.b16 %v357, %v348
  %v484 = vpack.c.b16 %v367, %v358
  %v485 = vpack.c.b16 %v368, %v359
  %v486 = vpack.c.b16 %v369, %v360
  %v487 = vpack.c.b16 %v370, %v361
  %v488 = vpack.c.b16 %v371, %v362
  %v489 = vpack.c.b16 %v372, %v363
  %v490 = vpack.c.b16 %v373, %v364
  %v491 = vpack.c.b16 %v374, %v365
  %v492 = vpack.c.b16 %v375, %v366
  %v493 = vpack.c.b16 %v385, %v376
  %v494 = vpack.c.b16 %v386, %v377
  %v495 = vpack.c.b16 %v387, %v378
  %v496 = vpack.c.b16 %v388, %v379
  %v497 = vpack.c.b16 %v389, %v380
  %v498 = vpack.c.b16 %v390, %v381
  %v499 = vpack.c.b16 %v391, %v382
  %v500 = vpack.c.b16 %v392, %v383
  %v501 = vpack.c.b16 %v393, %v384
  %v502 = vpack.c.b16 %v403, %v394
  %v503 = vpack.c.b16 %v404, %v395
  %v504 = vpack.c.b16 %v405, %v396
  %v505 = vpack.c.b16 %v406, %v397
  %v506 = vpack.c.b16 %v407, %v398
  %v507 = vpack.c.b16 %v408, %v399
  %v508 = vpack.c.b16 %v409, %v400
  %v509 = vpack.c.b16 %v410, %v401
  %v510 = vpack.c.b16 %v411, %v402
  %v511 = vpack.c.b16 %v421, %v412
  %v512 = vpack.c.b16 %v422, %v413
  %v513 = vpack.c.b16 %v423, %v414
  %v514 = vpack.c.b16 %v424, %v415
  %v515 = vpack.c.b16 %v425, %v416
  %v516 = vpack.c.b16 %v426, %v417
  %v517 = vpack.c.b16 %v427, %v418
  %v518 = vpack.c.b16 %v428, %v419
  %v519 = vpack.c.b16 %v429, %v420
  %v520 = vpack.c.b16 %v439, %v430
  %v521 = vpack.c.b16 %v440, %v431
  %v522 = vpack.c.b16 %v441, %v432
  %v523 = vpack.c.b16 %v442, %v433
  %v524 = vpack.c.b16 %v443, %v434
  %v525 = vpack.c.b16 %v444, %v435
  %v526 = vpack.c.b16 %v445, %v436
  %v527 = vpack.c.b16 %v446, %v437
  %v528 = vpack.c.b16 %v447, %v438
  %v529 = vpack.c.b16 %v457, %v448
  %v530 = vpack.c.b16 %v458, %v449
  %v531 = vpack.c.b16 %v459, %v450
  %v532 = vpack.c.b16 %v460, %v451
  %v533 = vpack.c.b16 %v461, %v452
  %v534 = vpack.c.b16 %v462, %v453
  %v535 = vpack.c.b16 %v463, %v454
  %v536 = vpack.c.b16 %v464, %v455
  %v537 = vpack.c.b16 %v465, %v456
  %v754 = vunpack.c.l.b16 %v94
  %v755 = vunpack.c.l.b16 %v95
  %v756 = vunpack.c.l.b16 %v96
  %v757 = vunpack.c.l.b16 %v97
  %v758 = vunpack.c.l.b16 %v98
  %v759 = vunpack.c.l.b16 %v99
  %v760 = vunpack.c.l.b16 %v100
  %v761 = vunpack.c.l.b16 %v101
  %v762 = vunpack.c.l.b16 %v102
  %v763 = vunpack.c.l.b16 %v103
  %v764 = vunpack.c.l.b16 %v104
  %v765 = vunpack.c.l.b16 %v105
  %v766 = vunpack.c.l.b16 %v106
  %v767 = vunpack.c.l.b16 %v107
  %v768 = vunpack.c.l.b16 %v108
  %v769 = vunpack.c.l.b16 %v109
  %v770 = vunpack.c.l.b16 %v110
  %v771 = vunpack.c.l.b16 %v111
  %v772 = vunpack.c.l.b16 %v112
  %v773 = vunpack.c.l.b16 %v113
  %v774 = vunpack.c.l.b16 %v114
  %v775 = vunpack.c.l.b16 %v115
  %v776 = vunpack.c.l.b16 %v116
  %v777 = vunpack.c.l.b16 %v117
  %v778 = vunpack.c.l.b16 %v118
  %v779 = vunpack.c.l.b16 %v119
  %v780 = vunpack.c.l.b16 %v120
  %v781 = vunpack.c.l.b16 %v121
  %v782 = vunpack.c.l.b16 %v122
  %v783 = vunpack.c.l.b16 %v123
  %v784 = vunpack.c.l.b16 %v124
  %v785 = vunpack.c.l.b16 %v125
  %v786 = vunpack.c.l.b16 %v126
  %v787 = vunpack.c.l.b16 %v127
  %v788 = vunpack.c.l.b16 %v128
  %v789 = vunpack.c.l.b16 %v129
  %v790 = vunpack.c.l.b16 %v130
  %v791 = vunpack.c.l.b16 %v131
  %v792 = vunpack.c.l.b16 %v132
  %v793 = vunpack.c.l.b16 %v133
  %v794 = vunpack.c.l.b16 %v134
  %v795 = vunpack.c.l.b16 %v135
  %v796 = vunpack.c.l.b16 %v136
  %v797 = vunpack.c.l.b16 %v137
  %v798 = vunpack.c.l.b16 %v138
  %v799 = vunpack.c.l.b16 %v139
  %v800 = vunpack.c.l.b16 %v140
  %v801 = vunpack.c.l.b16 %v141
  %v802 = vunpack.c.l.b16 %v142
  %v803 = vunpack.c.l.b16 %v143
  %v804 = vunpack.c.l.b16 %v144
  %v805 = vunpack.c.l.b16 %v145
  %v806 = vunpack.c.l.b16 %v146
  %v807 = vunpack.c.l.b16 %v147
  %v808 = vunpack.c.l.b16 %v148
  %v809 = vunpack.c.l.b16 %v149
  %v810 = vunpack.c.l.b16 %v150
  %v811 = vunpack.c.l.b16 %v151
  %v812 = vunpack.c.l.b16 %v152
  %v813 = vunpack.c.l.b16 %v153
  %v814 = vunpack.c.l.b16 %v154
  %v815 = vunpack.c.l.b16 %v155
  %v816 = vunpack.c.l.b16 %v156
  %v817 = vunpack.c.l.b16 %v157
  %v818 = vunpack.c.l.b16 %v158
  %v819 = vunpack.c.l.b16 %v159
  %v820 = vunpack.c.l.b16 %v160
  %v821 = vunpack.c.l.b16 %v161
  %v822 = vunpack.c.l.b16 %v162
  %v823 = vunpack.c.l.b16 %v163
  %v824 = vunpack.c.l.b16 %v164
  %v825 = vunpack.c.l.b16 %v165
  %v826 = vunpack.c.l.b16 %v166
  %v827 = vunpack.c.l.b16 %v167
  %v828 = vunpack.c.l.b16 %v168
  %v829 = vunpack.c.l.b16 %v169
  %v830 = vunpack.c.l.b16 %v170
  %v831 = vunpack.c.l.b16 %v171
  %v832 = vunpack.c.l.b16 %v172
  %v833 = vunpack.c.l.b16 %v173
  %v834 = vunpack.c.l.b16 %v174
  %v835 = vunpack.c.l.b16 %v175
  %v836 = vunpack.c.l.b16 %v176
  %v837 = vunpack.c.l.b16 %v177
  %v838 = vunpack.c.l.b16 %v178
  %v839 = vunpack.c.l.b16 %v179
  %v840 = vunpack.c.l.b16 %v180
  %v841 = vunpack.c.l.b16 %v181
  %v842 = vunpack.c.l.b16 %v182
  %v843 = vunpack.c.l.b16 %v183
  %v844 = vunpack.c.l.b16 %v184
  %v845 = vunpack.c.l.b16 %v185
  %v846 = vunpack.c.l.b16 %v186
  %v847 = vunpack.c.l.b16 %v187
  %v848 = vunpack.c.l.b16 %v188
  %v849 = vunpack.c.l.b16 %v189
  %v850 = vunpack.c.l.b16 %v190
  %v851 = vunpack.c.l.b16 %v191
  %v852 = vunpack.c.l.b16 %v192
  %v853 = vunpack.c.l.b16 %v193
  %v854 = vunpack.c.l.b16 %v194
  %v855 = vunpack.c.l.b16 %v195
  %v856 = vunpack.c.l.b16 %v196
  %v857 = vunpack.c.l.b16 %v197
  %v858 = vunpack.c.l.b16 %v198
  %v859 = vunpack.c.l.b16 %v199
  %v860 = vunpack.c.l.b16 %v200
  %v861 = vunpack.c.l.b16 %v201
  %v862 = vunpack.c.l.b16 %v202
  %v863 = vunpack.c.l.b16 %v203
  %v864 = vunpack.c.l.b16 %v204
  %v865 = vunpack.c.l.b16 %v205
  %v866 = vunpack.c.l.b16 %v206
  %v867 = vunpack.c.l.b16 %v207
  %v868 = vunpack.c.l.b16 %v208
  %v869 = vunpack.c.l.b16 %v209
  %v870 = vunpack.c.l.b16 %v210
  %v871 = vunpack.c.l.b16 %v211
  %v872 = vunpack.c.l.b16 %v212
  %v873 = vunpack.c.l.b16 %v213
  %v874 = vunpack.c.l.b16 %v214
  %v875 = vunpack.c.l.b16 %v215
  %v876 = vunpack.c.l.b16 %v216
  %v877 = vunpack.c.l.b16 %v217
  %v878 = vunpack.c.l.b16 %v218
  %v879 = vunpack.c.l.b16 %v219
  %v880 = vunpack.c.l.b16 %v220
  %v881 = vunpack.c.l.b16 %v221
  %v882 = vunpack.c.l.b16 %v222
  %v883 = vunpack.c.l.b16 %v223
  %v884 = vunpack.c.l.b16 %v224
  %v885 = vunpack.c.l.b16 %v225
  %v886 = vunpack.c.l.b16 %v226
  %v887 = vunpack.c.l.b16 %v227
  %v888 = vunpack.c.l.b16 %v228
  %v889 = vunpack.c.l.b16 %v229
  %v890 = vunpack.c.l.b16 %v230
  %v891 = vunpack.c.l.b16 %v231
  %v892 = vunpack.c.l.b16 %v232
  %v893 = vunpack.c.l.b16 %v233
  %v894 = vunpack.c.l.b16 %v234
  %v895 = vunpack.c.l.b16 %v235
  %v896 = vunpack.c.l.b16 %v236
  %v897 = vunpack.c.l.b16 %v237
  %v898 = vpack.c.b16 %v755, %v754
  %v899 = vpack.c.b16 %v757, %v756
  %v900 = vpack.c.b16 %v759, %v758
  %v901 = vpack.c.b16 %v761, %v760
  %v902 = vpack.c.b16 %v763, %v762
  %v903 = vpack.c.b16 %v765, %v764
  %v904 = vpack.c.b16 %v767, %v766
  %v905 = vpack.c.b16 %v769, %v768
  %v906 = vpack.c.b16 %v771, %v770
  %v907 = vpack.c.b16 %v773, %v772
  %v908 = vpack.c.b16 %v775, %v774
  %v909 = vpack.c.b16 %v777, %v776
  %v910 = vpack.c.b16 %v779, %v778
  %v911 = vpack.c.b16 %v781, %v780
  %v912 = vpack.c.b16 %v783, %v782
  %v913 = vpack.c.b16 %v785, %v784
  %v914 = vpack.c.b16 %v787, %v786
  %v915 = vpack.c.b16 %v789, %v788
  %v916 = vpack.c.b16 %v791, %v790
  %v917 = vpack.c.b16 %v793, %v792
  %v918 = vpack.c.b16 %v795, %v794
  %v919 = vpack.c.b16 %v797, %v796
  %v920 = vpack.c.b16 %v799, %v798
  %v921 = vpack.c.b16 %v801, %v800
  %v922 = vpack.c.b16 %v803, %v802
  %v923 = vpack.c.b16 %v805, %v804
  %v924 = vpack.c.b16 %v807, %v806
  %v925 = vpack.c.b16 %v809, %v808
  %v926 = vpack.c.b16 %v811, %v810
  %v927 = vpack.c.b16 %v813, %v812
  %v928 = vpack.c.b16 %v815, %v814
  %v929 = vpack.c.b16 %v817, %v816
  %v930 = vpack.c.b16 %v819, %v818
  %v931 = vpack.c.b16 %v821, %v820
  %v932 = vpack.c.b16 %v823, %v822
  %v933 = vpack.c.b16 %v825, %v824
  %v934 = vpack.c.b16 %v827, %v826
  %v935 = vpack.c.b16 %v829, %v828
  %v936 = vpack.c.b16 %v831, %v830
  %v937 = vpack.c.b16 %v833, %v832
  %v938 = vpack.c.b16 %v835, %v834
  %v939 = vpack.c.b16 %v837, %v836
  %v940 = vpack.c.b16 %v839, %v838
  %v941 = vpack.c.b16 %v841, %v840
  %v942 = vpack.c.b16 %v843, %v842
  %v943 = vpack.c.b16 %v845, %v844
  %v944 = vpack.c.b16 %v847, %v846
  %v945 = vpack.c.b16 %v849, %v848
  %v946 = vpack.c.b16 %v851, %v850
  %v947 = vpack.c.b16 %v853, %v852
  %v948 = vpack.c.b16 %v855, %v854
  %v949 = vpack.c.b16 %v857, %v856
  %v950 = vpack.c.b16 %v859, %v858
  %v951 = vpack.c.b16 %v861, %v860
  %v952 = vpack.c.b16 %v863, %v862
  %v953 = vpack.c.b16 %v865, %v864
  %v954 = vpack.c.b16 %v867, %v866
  %v955 = vpack.c.b16 %v869, %v868
  %v956 = vpack.c.b16 %v871, %v870
  %v957 = vpack.c.b16 %v873, %v872
  %v958 = vpack.c.b16 %v875, %v874
  %v959 = vpack.c.b16 %v877, %v876
  %v960 = vpack.c.b16 %v879, %v878
  %v961 = vpack.c.b16 %v881, %v880
  %v962 = vpack.c.b16 %v883, %v882
  %v963 = vpack.c.b16 %v885, %v884
  %v964 = vpack.c.b16 %v887, %v886
  %v965 = vpack.c.b16 %v889, %v888
  %v966 = vpack.c.b16 %v891, %v890
  %v967 = vpack.c.b16 %v893, %v892
  %v968 = vpack.c.b16 %v895, %v894
  %v969 = vpack.c.b16 %v897, %v896
  %1042 = vmatpush.bf16.msra.mxu0 %v905
  %1043 = vmatpush.bf16.msra.mxu0 %v904
  %1044 = vmatpush.bf16.msra.mxu0 %v903
  %1045 = vmatpush.bf16.msra.mxu0 %v902
  %1046 = vmatpush.bf16.msra.mxu0 %v901
  %1047 = vmatpush.bf16.msra.mxu0 %v900
  %1048 = vmatpush.bf16.msra.mxu0 %v899
  %1049 = vmatpush.bf16.msra.mxu0 %v898
  %1050 = vmatmul.bf16.gmra.mxu0 %v466
  %v1051 = vpop.f32.mrf.mxu0
  %v1052 = vadd.f32 %v240, %v1051
  %v1053 = vpop.f32.mrf.mxu0
  %v1054 = vadd.f32 %v240, %v1053
  %1055 = vmatmul.bf16.gmra.mxu0 %v475
  %v1056 = vpop.f32.mrf.mxu0
  %v1057 = vadd.f32 %v240, %v1056
  %v1058 = vpop.f32.mrf.mxu0
  %v1059 = vadd.f32 %v240, %v1058
  %1060 = vmatmul.bf16.gmra.mxu0 %v484
  %v1061 = vpop.f32.mrf.mxu0
  %v1062 = vadd.f32 %v240, %v1061
  %v1063 = vpop.f32.mrf.mxu0
  %v1064 = vadd.f32 %v240, %v1063
  %1065 = vmatmul.bf16.gmra.mxu0 %v493
  %v1066 = vpop.f32.mrf.mxu0
  %v1067 = vadd.f32 %v240, %v1066
  %v1068 = vpop.f32.mrf.mxu0
  %v1069 = vadd.f32 %v240, %v1068
  %1070 = vmatmul.bf16.gmra.mxu0 %v502
  %v1071 = vpop.f32.mrf.mxu0
  %v1072 = vadd.f32 %v240, %v1071
  %v1073 = vpop.f32.mrf.mxu0
  %v1074 = vadd.f32 %v240, %v1073
  %1075 = vmatmul.bf16.gmra.mxu0 %v511
  %v1076 = vpop.f32.mrf.mxu0
  %v1077 = vadd.f32 %v240, %v1076
  %v1078 = vpop.f32.mrf.mxu0
  %v1079 = vadd.f32 %v240, %v1078
  %1080 = vmatmul.bf16.gmra.mxu0 %v520
  %v1081 = vpop.f32.mrf.mxu0
  %v1082 = vadd.f32 %v240, %v1081
  %v1083 = vpop.f32.mrf.mxu0
  %v1084 = vadd.f32 %v240, %v1083
  %1085 = vmatmul.bf16.gmra.mxu0 %v529
  %v1086 = vpop.f32.mrf.mxu0
  %v1087 = vadd.f32 %v240, %v1086
  %v1088 = vpop.f32.mrf.mxu0
  %v1089 = vadd.f32 %v240, %v1088
  %1090 = vdwg.mxu0
  %1091 = vmatpush.bf16.msra.mxu0 %v913
  %1092 = vmatpush.bf16.msra.mxu0 %v912
  %1093 = vmatpush.bf16.msra.mxu0 %v911
  %1094 = vmatpush.bf16.msra.mxu0 %v910
  %1095 = vmatpush.bf16.msra.mxu0 %v909
  %1096 = vmatpush.bf16.msra.mxu0 %v908
  %1097 = vmatpush.bf16.msra.mxu0 %v907
  %1098 = vmatpush.bf16.msra.mxu0 %v906
  %1099 = vmatmul.bf16.gmra.mxu0 %v467
  %v1100 = vpop.f32.mrf.mxu0
  %v1101 = vadd.f32 %v1052, %v1100
  %v1102 = vpop.f32.mrf.mxu0
  %v1103 = vadd.f32 %v1054, %v1102
  %1104 = vmatmul.bf16.gmra.mxu0 %v476
  %v1105 = vpop.f32.mrf.mxu0
  %v1106 = vadd.f32 %v1057, %v1105
  %v1107 = vpop.f32.mrf.mxu0
  %v1108 = vadd.f32 %v1059, %v1107
  %1109 = vmatmul.bf16.gmra.mxu0 %v485
  %v1110 = vpop.f32.mrf.mxu0
  %v1111 = vadd.f32 %v1062, %v1110
  %v1112 = vpop.f32.mrf.mxu0
  %v1113 = vadd.f32 %v1064, %v1112
  %1114 = vmatmul.bf16.gmra.mxu0 %v494
  %v1115 = vpop.f32.mrf.mxu0
  %v1116 = vadd.f32 %v1067, %v1115
  %v1117 = vpop.f32.mrf.mxu0
  %v1118 = vadd.f32 %v1069, %v1117
  %1119 = vmatmul.bf16.gmra.mxu0 %v503
  %v1120 = vpop.f32.mrf.mxu0
  %v1121 = vadd.f32 %v1072, %v1120
  %v1122 = vpop.f32.mrf.mxu0
  %v1123 = vadd.f32 %v1074, %v1122
  %1124 = vmatmul.bf16.gmra.mxu0 %v512
  %v1125 = vpop.f32.mrf.mxu0
  %v1126 = vadd.f32 %v1077, %v1125
  %v1127 = vpop.f32.mrf.mxu0
  %v1128 = vadd.f32 %v1079, %v1127
  %1129 = vmatmul.bf16.gmra.mxu0 %v521
  %v1130 = vpop.f32.mrf.mxu0
  %v1131 = vadd.f32 %v1082, %v1130
  %v1132 = vpop.f32.mrf.mxu0
  %v1133 = vadd.f32 %v1084, %v1132
  %1134 = vmatmul.bf16.gmra.mxu0 %v530
  %v1135 = vpop.f32.mrf.mxu0
  %v1136 = vadd.f32 %v1087, %v1135
  %v1137 = vpop.f32.mrf.mxu0
  %v1138 = vadd.f32 %v1089, %v1137
  %1139 = vdwg.mxu0
  %1140 = vmatpush.bf16.msra.mxu0 %v921
  %1141 = vmatpush.bf16.msra.mxu0 %v920
  %1142 = vmatpush.bf16.msra.mxu0 %v919
  %1143 = vmatpush.bf16.msra.mxu0 %v918
  %1144 = vmatpush.bf16.msra.mxu0 %v917
  %1145 = vmatpush.bf16.msra.mxu0 %v916
  %1146 = vmatpush.bf16.msra.mxu0 %v915
  %1147 = vmatpush.bf16.msra.mxu0 %v914
  %1148 = vmatmul.bf16.gmra.mxu0 %v468
  %v1149 = vpop.f32.mrf.mxu0
  %v1150 = vadd.f32 %v1101, %v1149
  %v1151 = vpop.f32.mrf.mxu0
  %v1152 = vadd.f32 %v1103, %v1151
  %1153 = vmatmul.bf16.gmra.mxu0 %v477
  %v1154 = vpop.f32.mrf.mxu0
  %v1155 = vadd.f32 %v1106, %v1154
  %v1156 = vpop.f32.mrf.mxu0
  %v1157 = vadd.f32 %v1108, %v1156
  %1158 = vmatmul.bf16.gmra.mxu0 %v486
  %v1159 = vpop.f32.mrf.mxu0
  %v1160 = vadd.f32 %v1111, %v1159
  %v1161 = vpop.f32.mrf.mxu0
  %v1162 = vadd.f32 %v1113, %v1161
  %1163 = vmatmul.bf16.gmra.mxu0 %v495
  %v1164 = vpop.f32.mrf.mxu0
  %v1165 = vadd.f32 %v1116, %v1164
  %v1166 = vpop.f32.mrf.mxu0
  %v1167 = vadd.f32 %v1118, %v1166
  %1168 = vmatmul.bf16.gmra.mxu0 %v504
  %v1169 = vpop.f32.mrf.mxu0
  %v1170 = vadd.f32 %v1121, %v1169
  %v1171 = vpop.f32.mrf.mxu0
  %v1172 = vadd.f32 %v1123, %v1171
  %1173 = vmatmul.bf16.gmra.mxu0 %v513
  %v1174 = vpop.f32.mrf.mxu0
  %v1175 = vadd.f32 %v1126, %v1174
  %v1176 = vpop.f32.mrf.mxu0
  %v1177 = vadd.f32 %v1128, %v1176
  %1178 = vmatmul.bf16.gmra.mxu0 %v522
  %v1179 = vpop.f32.mrf.mxu0
  %v1180 = vadd.f32 %v1131, %v1179
  %v1181 = vpop.f32.mrf.mxu0
  %v1182 = vadd.f32 %v1133, %v1181
  %1183 = vmatmul.bf16.gmra.mxu0 %v531
  %v1184 = vpop.f32.mrf.mxu0
  %v1185 = vadd.f32 %v1136, %v1184
  %v1186 = vpop.f32.mrf.mxu0
  %v1187 = vadd.f32 %v1138, %v1186
  %1188 = vdwg.mxu0
  %1189 = vmatpush.bf16.msra.mxu0 %v929
  %1190 = vmatpush.bf16.msra.mxu0 %v928
  %1191 = vmatpush.bf16.msra.mxu0 %v927
  %1192 = vmatpush.bf16.msra.mxu0 %v926
  %1193 = vmatpush.bf16.msra.mxu0 %v925
  %1194 = vmatpush.bf16.msra.mxu0 %v924
  %1195 = vmatpush.bf16.msra.mxu0 %v923
  %1196 = vmatpush.bf16.msra.mxu0 %v922
  %1197 = vmatmul.bf16.gmra.mxu0 %v469
  %v1198 = vpop.f32.mrf.mxu0
  %v1199 = vadd.f32 %v1150, %v1198
  %v1200 = vpop.f32.mrf.mxu0
  %v1201 = vadd.f32 %v1152, %v1200
  %1202 = vmatmul.bf16.gmra.mxu0 %v478
  %v1203 = vpop.f32.mrf.mxu0
  %v1204 = vadd.f32 %v1155, %v1203
  %v1205 = vpop.f32.mrf.mxu0
  %v1206 = vadd.f32 %v1157, %v1205
  %1207 = vmatmul.bf16.gmra.mxu0 %v487
  %v1208 = vpop.f32.mrf.mxu0
  %v1209 = vadd.f32 %v1160, %v1208
  %v1210 = vpop.f32.mrf.mxu0
  %v1211 = vadd.f32 %v1162, %v1210
  %1212 = vmatmul.bf16.gmra.mxu0 %v496
  %v1213 = vpop.f32.mrf.mxu0
  %v1214 = vadd.f32 %v1165, %v1213
  %v1215 = vpop.f32.mrf.mxu0
  %v1216 = vadd.f32 %v1167, %v1215
  %1217 = vmatmul.bf16.gmra.mxu0 %v505
  %v1218 = vpop.f32.mrf.mxu0
  %v1219 = vadd.f32 %v1170, %v1218
  %v1220 = vpop.f32.mrf.mxu0
  %v1221 = vadd.f32 %v1172, %v1220
  %1222 = vmatmul.bf16.gmra.mxu0 %v514
  %v1223 = vpop.f32.mrf.mxu0
  %v1224 = vadd.f32 %v1175, %v1223
  %v1225 = vpop.f32.mrf.mxu0
  %v1226 = vadd.f32 %v1177, %v1225
  %1227 = vmatmul.bf16.gmra.mxu0 %v523
  %v1228 = vpop.f32.mrf.mxu0
  %v1229 = vadd.f32 %v1180, %v1228
  %v1230 = vpop.f32.mrf.mxu0
  %v1231 = vadd.f32 %v1182, %v1230
  %1232 = vmatmul.bf16.gmra.mxu0 %v532
  %v1233 = vpop.f32.mrf.mxu0
  %v1234 = vadd.f32 %v1185, %v1233
  %v1235 = vpop.f32.mrf.mxu0
  %v1236 = vadd.f32 %v1187, %v1235
  %1237 = vdwg.mxu0
  %1238 = vmatpush.bf16.msra.mxu0 %v937
  %1239 = vmatpush.bf16.msra.mxu0 %v936
  %1240 = vmatpush.bf16.msra.mxu0 %v935
  %1241 = vmatpush.bf16.msra.mxu0 %v934
  %1242 = vmatpush.bf16.msra.mxu0 %v933
  %1243 = vmatpush.bf16.msra.mxu0 %v932
  %1244 = vmatpush.bf16.msra.mxu0 %v931
  %1245 = vmatpush.bf16.msra.mxu0 %v930
  %1246 = vmatmul.bf16.gmra.mxu0 %v470
  %v1247 = vpop.f32.mrf.mxu0
  %v1248 = vadd.f32 %v1199, %v1247
  %v1249 = vpop.f32.mrf.mxu0
  %v1250 = vadd.f32 %v1201, %v1249
  %1251 = vmatmul.bf16.gmra.mxu0 %v479
  %v1252 = vpop.f32.mrf.mxu0
  %v1253 = vadd.f32 %v1204, %v1252
  %v1254 = vpop.f32.mrf.mxu0
  %v1255 = vadd.f32 %v1206, %v1254
  %1256 = vmatmul.bf16.gmra.mxu0 %v488
  %v1257 = vpop.f32.mrf.mxu0
  %v1258 = vadd.f32 %v1209, %v1257
  %v1259 = vpop.f32.mrf.mxu0
  %v1260 = vadd.f32 %v1211, %v1259
  %1261 = vmatmul.bf16.gmra.mxu0 %v497
  %v1262 = vpop.f32.mrf.mxu0
  %v1263 = vadd.f32 %v1214, %v1262
  %v1264 = vpop.f32.mrf.mxu0
  %v1265 = vadd.f32 %v1216, %v1264
  %1266 = vmatmul.bf16.gmra.mxu0 %v506
  %v1267 = vpop.f32.mrf.mxu0
  %v1268 = vadd.f32 %v1219, %v1267
  %v1269 = vpop.f32.mrf.mxu0
  %v1270 = vadd.f32 %v1221, %v1269
  %1271 = vmatmul.bf16.gmra.mxu0 %v515
  %v1272 = vpop.f32.mrf.mxu0
  %v1273 = vadd.f32 %v1224, %v1272
  %v1274 = vpop.f32.mrf.mxu0
  %v1275 = vadd.f32 %v1226, %v1274
  %1276 = vmatmul.bf16.gmra.mxu0 %v524
  %v1277 = vpop.f32.mrf.mxu0
  %v1278 = vadd.f32 %v1229, %v1277
  %v1279 = vpop.f32.mrf.mxu0
  %v1280 = vadd.f32 %v1231, %v1279
  %1281 = vmatmul.bf16.gmra.mxu0 %v533
  %v1282 = vpop.f32.mrf.mxu0
  %v1283 = vadd.f32 %v1234, %v1282
  %v1284 = vpop.f32.mrf.mxu0
  %v1285 = vadd.f32 %v1236, %v1284
  %1286 = vdwg.mxu0
  %1287 = vmatpush.bf16.msra.mxu0 %v945
  %1288 = vmatpush.bf16.msra.mxu0 %v944
  %1289 = vmatpush.bf16.msra.mxu0 %v943
  %1290 = vmatpush.bf16.msra.mxu0 %v942
  %1291 = vmatpush.bf16.msra.mxu0 %v941
  %1292 = vmatpush.bf16.msra.mxu0 %v940
  %1293 = vmatpush.bf16.msra.mxu0 %v939
  %1294 = vmatpush.bf16.msra.mxu0 %v938
  %1295 = vmatmul.bf16.gmra.mxu0 %v471
  %v1296 = vpop.f32.mrf.mxu0
  %v1297 = vadd.f32 %v1248, %v1296
  %v1298 = vpop.f32.mrf.mxu0
  %v1299 = vadd.f32 %v1250, %v1298
  %1300 = vmatmul.bf16.gmra.mxu0 %v480
  %v1301 = vpop.f32.mrf.mxu0
  %v1302 = vadd.f32 %v1253, %v1301
  %v1303 = vpop.f32.mrf.mxu0
  %v1304 = vadd.f32 %v1255, %v1303
  %1305 = vmatmul.bf16.gmra.mxu0 %v489
  %v1306 = vpop.f32.mrf.mxu0
  %v1307 = vadd.f32 %v1258, %v1306
  %v1308 = vpop.f32.mrf.mxu0
  %v1309 = vadd.f32 %v1260, %v1308
  %1310 = vmatmul.bf16.gmra.mxu0 %v498
  %v1311 = vpop.f32.mrf.mxu0
  %v1312 = vadd.f32 %v1263, %v1311
  %v1313 = vpop.f32.mrf.mxu0
  %v1314 = vadd.f32 %v1265, %v1313
  %1315 = vmatmul.bf16.gmra.mxu0 %v507
  %v1316 = vpop.f32.mrf.mxu0
  %v1317 = vadd.f32 %v1268, %v1316
  %v1318 = vpop.f32.mrf.mxu0
  %v1319 = vadd.f32 %v1270, %v1318
  %1320 = vmatmul.bf16.gmra.mxu0 %v516
  %v1321 = vpop.f32.mrf.mxu0
  %v1322 = vadd.f32 %v1273, %v1321
  %v1323 = vpop.f32.mrf.mxu0
  %v1324 = vadd.f32 %v1275, %v1323
  %1325 = vmatmul.bf16.gmra.mxu0 %v525
  %v1326 = vpop.f32.mrf.mxu0
  %v1327 = vadd.f32 %v1278, %v1326
  %v1328 = vpop.f32.mrf.mxu0
  %v1329 = vadd.f32 %v1280, %v1328
  %1330 = vmatmul.bf16.gmra.mxu0 %v534
  %v1331 = vpop.f32.mrf.mxu0
  %v1332 = vadd.f32 %v1283, %v1331
  %v1333 = vpop.f32.mrf.mxu0
  %v1334 = vadd.f32 %v1285, %v1333
  %1335 = vdwg.mxu0
  %1336 = vmatpush.bf16.msra.mxu0 %v953
  %1337 = vmatpush.bf16.msra.mxu0 %v952
  %1338 = vmatpush.bf16.msra.mxu0 %v951
  %1339 = vmatpush.bf16.msra.mxu0 %v950
  %1340 = vmatpush.bf16.msra.mxu0 %v949
  %1341 = vmatpush.bf16.msra.mxu0 %v948
  %1342 = vmatpush.bf16.msra.mxu0 %v947
  %1343 = vmatpush.bf16.msra.mxu0 %v946
  %1344 = vmatmul.bf16.gmra.mxu0 %v472
  %v1345 = vpop.f32.mrf.mxu0
  %v1346 = vadd.f32 %v1297, %v1345
  %v1347 = vpop.f32.mrf.mxu0
  %v1348 = vadd.f32 %v1299, %v1347
  %1349 = vmatmul.bf16.gmra.mxu0 %v481
  %v1350 = vpop.f32.mrf.mxu0
  %v1351 = vadd.f32 %v1302, %v1350
  %v1352 = vpop.f32.mrf.mxu0
  %v1353 = vadd.f32 %v1304, %v1352
  %1354 = vmatmul.bf16.gmra.mxu0 %v490
  %v1355 = vpop.f32.mrf.mxu0
  %v1356 = vadd.f32 %v1307, %v1355
  %v1357 = vpop.f32.mrf.mxu0
  %v1358 = vadd.f32 %v1309, %v1357
  %1359 = vmatmul.bf16.gmra.mxu0 %v499
  %v1360 = vpop.f32.mrf.mxu0
  %v1361 = vadd.f32 %v1312, %v1360
  %v1362 = vpop.f32.mrf.mxu0
  %v1363 = vadd.f32 %v1314, %v1362
  %1364 = vmatmul.bf16.gmra.mxu0 %v508
  %v1365 = vpop.f32.mrf.mxu0
  %v1366 = vadd.f32 %v1317, %v1365
  %v1367 = vpop.f32.mrf.mxu0
  %v1368 = vadd.f32 %v1319, %v1367
  %1369 = vmatmul.bf16.gmra.mxu0 %v517
  %v1370 = vpop.f32.mrf.mxu0
  %v1371 = vadd.f32 %v1322, %v1370
  %v1372 = vpop.f32.mrf.mxu0
  %v1373 = vadd.f32 %v1324, %v1372
  %1374 = vmatmul.bf16.gmra.mxu0 %v526
  %v1375 = vpop.f32.mrf.mxu0
  %v1376 = vadd.f32 %v1327, %v1375
  %v1377 = vpop.f32.mrf.mxu0
  %v1378 = vadd.f32 %v1329, %v1377
  %1379 = vmatmul.bf16.gmra.mxu0 %v535
  %v1380 = vpop.f32.mrf.mxu0
  %v1381 = vadd.f32 %v1332, %v1380
  %v1382 = vpop.f32.mrf.mxu0
  %v1383 = vadd.f32 %v1334, %v1382
  %1384 = vdwg.mxu0
  %1385 = vmatpush.bf16.msra.mxu0 %v961
  %1386 = vmatpush.bf16.msra.mxu0 %v960
  %1387 = vmatpush.bf16.msra.mxu0 %v959
  %1388 = vmatpush.bf16.msra.mxu0 %v958
  %1389 = vmatpush.bf16.msra.mxu0 %v957
  %1390 = vmatpush.bf16.msra.mxu0 %v956
  %1391 = vmatpush.bf16.msra.mxu0 %v955
  %1392 = vmatpush.bf16.msra.mxu0 %v954
  %1393 = vmatmul.bf16.gmra.mxu0 %v473
  %v1394 = vpop.f32.mrf.mxu0
  %v1395 = vadd.f32 %v1346, %v1394
  %v1396 = vpop.f32.mrf.mxu0
  %v1397 = vadd.f32 %v1348, %v1396
  %1398 = vmatmul.bf16.gmra.mxu0 %v482
  %v1399 = vpop.f32.mrf.mxu0
  %v1400 = vadd.f32 %v1351, %v1399
  %v1401 = vpop.f32.mrf.mxu0
  %v1402 = vadd.f32 %v1353, %v1401
  %1403 = vmatmul.bf16.gmra.mxu0 %v491
  %v1404 = vpop.f32.mrf.mxu0
  %v1405 = vadd.f32 %v1356, %v1404
  %v1406 = vpop.f32.mrf.mxu0
  %v1407 = vadd.f32 %v1358, %v1406
  %1408 = vmatmul.bf16.gmra.mxu0 %v500
  %v1409 = vpop.f32.mrf.mxu0
  %v1410 = vadd.f32 %v1361, %v1409
  %v1411 = vpop.f32.mrf.mxu0
  %v1412 = vadd.f32 %v1363, %v1411
  %1413 = vmatmul.bf16.gmra.mxu0 %v509
  %v1414 = vpop.f32.mrf.mxu0
  %v1415 = vadd.f32 %v1366, %v1414
  %v1416 = vpop.f32.mrf.mxu0
  %v1417 = vadd.f32 %v1368, %v1416
  %1418 = vmatmul.bf16.gmra.mxu0 %v518
  %v1419 = vpop.f32.mrf.mxu0
  %v1420 = vadd.f32 %v1371, %v1419
  %v1421 = vpop.f32.mrf.mxu0
  %v1422 = vadd.f32 %v1373, %v1421
  %1423 = vmatmul.bf16.gmra.mxu0 %v527
  %v1424 = vpop.f32.mrf.mxu0
  %v1425 = vadd.f32 %v1376, %v1424
  %v1426 = vpop.f32.mrf.mxu0
  %v1427 = vadd.f32 %v1378, %v1426
  %1428 = vmatmul.bf16.gmra.mxu0 %v536
  %v1429 = vpop.f32.mrf.mxu0
  %v1430 = vadd.f32 %v1381, %v1429
  %v1431 = vpop.f32.mrf.mxu0
  %v1432 = vadd.f32 %v1383, %v1431
  %1433 = vdwg.mxu0
  %1434 = vmatpush.bf16.msra.mxu0 %v969
  %1435 = vmatpush.bf16.msra.mxu0 %v968
  %1436 = vmatpush.bf16.msra.mxu0 %v967
  %1437 = vmatpush.bf16.msra.mxu0 %v966
  %1438 = vmatpush.bf16.msra.mxu0 %v965
  %1439 = vmatpush.bf16.msra.mxu0 %v964
  %1440 = vmatpush.bf16.msra.mxu0 %v963
  %1441 = vmatpush.bf16.msra.mxu0 %v962
  %1442 = vmatmul.bf16.gmra.mxu0 %v474
  %v1443 = vpop.f32.mrf.mxu0
  %v1444 = vadd.f32 %v1395, %v1443
  %v1445 = vpop.f32.mrf.mxu0
  %v1446 = vadd.f32 %v1397, %v1445
  %1447 = vmatmul.bf16.gmra.mxu0 %v483
  %v1448 = vpop.f32.mrf.mxu0
  %v1449 = vadd.f32 %v1400, %v1448
  %v1450 = vpop.f32.mrf.mxu0
  %v1451 = vadd.f32 %v1402, %v1450
  %1452 = vmatmul.bf16.gmra.mxu0 %v492
  %v1453 = vpop.f32.mrf.mxu0
  %v1454 = vadd.f32 %v1405, %v1453
  %v1455 = vpop.f32.mrf.mxu0
  %v1456 = vadd.f32 %v1407, %v1455
  %1457 = vmatmul.bf16.gmra.mxu0 %v501
  %v1458 = vpop.f32.mrf.mxu0
  %v1459 = vadd.f32 %v1410, %v1458
  %v1460 = vpop.f32.mrf.mxu0
  %v1461 = vadd.f32 %v1412, %v1460
  %1462 = vmatmul.bf16.gmra.mxu0 %v510
  %v1463 = vpop.f32.mrf.mxu0
  %v1464 = vadd.f32 %v1415, %v1463
  %v1465 = vpop.f32.mrf.mxu0
  %v1466 = vadd.f32 %v1417, %v1465
  %1467 = vmatmul.bf16.gmra.mxu0 %v519
  %v1468 = vpop.f32.mrf.mxu0
  %v1469 = vadd.f32 %v1420, %v1468
  %v1470 = vpop.f32.mrf.mxu0
  %v1471 = vadd.f32 %v1422, %v1470
  %1472 = vmatmul.bf16.gmra.mxu0 %v528
  %v1473 = vpop.f32.mrf.mxu0
  %v1474 = vadd.f32 %v1425, %v1473
  %v1475 = vpop.f32.mrf.mxu0
  %v1476 = vadd.f32 %v1427, %v1475
  %1477 = vmatmul.bf16.gmra.mxu0 %v537
  %v1478 = vpop.f32.mrf.mxu0
  %v1479 = vadd.f32 %v1430, %v1478
  %v1480 = vpop.f32.mrf.mxu0
  %v1481 = vadd.f32 %v1432, %v1480
  %1482 = vdwg.mxu0
  %v1483 = vmax.f32 %v1444, 0.0
  %v1484 = vmax.f32 %v1446, 0.0
  %v1485 = vmax.f32 %v1449, 0.0
  %v1486 = vmax.f32 %v1451, 0.0
  %v1487 = vmax.f32 %v1454, 0.0
  %v1488 = vmax.f32 %v1456, 0.0
  %v1489 = vmax.f32 %v1459, 0.0
  %v1490 = vmax.f32 %v1461, 0.0
  %v1491 = vmax.f32 %v1464, 0.0
  %v1492 = vmax.f32 %v1466, 0.0
  %v1493 = vmax.f32 %v1469, 0.0
  %v1494 = vmax.f32 %v1471, 0.0
  %v1495 = vmax.f32 %v1474, 0.0
  %v1496 = vmax.f32 %v1476, 0.0
  %v1497 = vmax.f32 %v1479, 0.0
  %v1498 = vmax.f32 %v1481, 0.0
  %v1499 = vpack.c.bf16 %v1483, %v1483
  %v1500 = vpack.c.bf16 %v1484, %v1484
  %v1501 = vpack.c.bf16 %v1485, %v1485
  %v1502 = vpack.c.bf16 %v1486, %v1486
  %v1503 = vpack.c.bf16 %v1487, %v1487
  %v1504 = vpack.c.bf16 %v1488, %v1488
  %v1505 = vpack.c.bf16 %v1489, %v1489
  %v1506 = vpack.c.bf16 %v1490, %v1490
  %v1507 = vpack.c.bf16 %v1491, %v1491
  %v1508 = vpack.c.bf16 %v1492, %v1492
  %v1509 = vpack.c.bf16 %v1493, %v1493
  %v1510 = vpack.c.bf16 %v1494, %v1494
  %v1511 = vpack.c.bf16 %v1495, %v1495
  %v1512 = vpack.c.bf16 %v1496, %v1496
  %v1513 = vpack.c.bf16 %v1497, %v1497
  %v1514 = vpack.c.bf16 %v1498, %v1498
  %1515 = vst [vmem:[%s3] sm:$0xf] %v1499
  %1516 = vst [vmem:[%s3 + $0x4] sm:$0xf] %v1500
  %1517 = vst [vmem:[%s3 + $0x8] sm:$0xf] %v1501
  %1518 = vst [vmem:[%s3 + $0xc] sm:$0xf] %v1502
  %1519 = vst [vmem:[%s3 + $0x10] sm:$0xf] %v1503
  %1520 = vst [vmem:[%s3 + $0x14] sm:$0xf] %v1504
  %1521 = vst [vmem:[%s3 + $0x18] sm:$0xf] %v1505
  %1522 = vst [vmem:[%s3 + $0x1c] sm:$0xf] %v1506
  %1523 = vst [vmem:[%s3 + $0x20] sm:$0xf] %v1507
  %1524 = vst [vmem:[%s3 + $0x24] sm:$0xf] %v1508
  %1525 = vst [vmem:[%s3 + $0x28] sm:$0xf] %v1509
  %1526 = vst [vmem:[%s3 + $0x2c] sm:$0xf] %v1510
  %1527 = vst [vmem:[%s3 + $0x30] sm:$0xf] %v1511
  %1528 = vst [vmem:[%s3 + $0x34] sm:$0xf] %v1512
  %1529 = vst [vmem:[%s3 + $0x38] sm:$0xf] %v1513
  %1530 = vst [vmem:[%s3 + $0x3c] sm:$0xf] %v1514
  // Predicated region
  $region14: #{f_forward.5} parent=0 // pred_check
    _
  $region15: #{f_forward.5} parent=0 // pred_check_branch
    %1532 = sbr.rel (0) target = $region17
  $region16: #{f_forward.5} parent=0 // pred_region
    _
  $region17: #{f_forward.5} parent=0 // pred_fallthru
    _
  // Predicated region
  $region18: #{f_forward.5} parent=0 // pred_check
    _
  $region19: #{f_forward.5} parent=0 // pred_check_branch
    %1534 = sbr.rel (0) target = $region21
  $region20: #{f_forward.5} parent=0 // pred_region
    _
  $region21: #{f_forward.5} parent=0 // pred_fallthru
    _

// kernel: f_forward.6
$region0: #{f_forward.6}
  #allocation0 [shape = 'u32[]', space=smem, size = 0x4, offset = 0x4, fixed_abs, tag = 'smem constant byte address 0x4 - core index']
  #allocation1 [shape = 'u32[72,128]{1,0:T(1,128)}', space=vmem, size = 0x9000, scoped, tag = 'internal scratch']
  %s0 = inlined_call_operand.vmem [shape: bf16[32,1152], index: 0, kind: input, shape index: {}]
  %s1 = inlined_call_operand.vmem [shape: bf16[1152,256], index: 1, kind: input, shape index: {}]
  %s2 = inlined_call_operand.vmem [shape: f32[1,256], index: 2, kind: input, shape index: {}]
  %s3 = inlined_call_operand.vmem [shape: bf16[32,256], index: 3, kind: output, shape index: {}]
  %s4 = sld [smem:[#allocation0]]
  $region22: #{f_forward.6} parent=0
    _
  %s6 = ssub.s32 1, %s4
  %s7 = scalar_select 0, %s6, %s4
  // Predicated region
  $region2: #{f_forward.6} parent=0 // pred_check
    _
  $region3: #{f_forward.6} parent=0 // pred_check_branch
    %9 = sbr.rel (0) target = $region5
  $region4: #{f_forward.6} parent=0 // pred_region
    _
  $region5: #{f_forward.6} parent=0 // pred_fallthru
    _
  // Predicated region
  $region6: #{f_forward.6} parent=0 // pred_check
    _
  $region7: #{f_forward.6} parent=0 // pred_check_branch
    %11 = sbr.rel (0) target = $region9
  $region8: #{f_forward.6} parent=0 // pred_region
    _
  $region9: #{f_forward.6} parent=0 // pred_fallthru
    _
  // Predicated region
  $region10: #{f_forward.6} parent=0 // pred_check
    _
  $region11: #{f_forward.6} parent=0 // pred_check_branch
    %13 = sbr.rel (0) target = $region13
  $region12: #{f_forward.6} parent=0 // pred_region
    _
  $region13: #{f_forward.6} parent=0 // pred_fallthru
    _
  %v14 = vld [vmem:[%s0] sm:$0xff]
  %v15 = vld [vmem:[%s0 + $0x8] sm:$0xff]
  %v16 = vld [vmem:[%s0 + $0x10] sm:$0xff]
  %v17 = vld [vmem:[%s0 + $0x18] sm:$0xff]
  %v18 = vld [vmem:[%s0 + $0x20] sm:$0xf]
  %v19 = vld [vmem:[%s0 + $0x24] sm:$0xff]
  %v20 = vld [vmem:[%s0 + $0x2c] sm:$0xff]
  %v21 = vld [vmem:[%s0 + $0x34] sm:$0xff]
  %v22 = vld [vmem:[%s0 + $0x3c] sm:$0xff]
  %v23 = vld [vmem:[%s0 + $0x44] sm:$0xf]
  %v24 = vld [vmem:[%s0 + $0x48] sm:$0xff]
  %v25 = vld [vmem:[%s0 + $0x50] sm:$0xff]
  %v26 = vld [vmem:[%s0 + $0x58] sm:$0xff]
  %v27 = vld [vmem:[%s0 + $0x60] sm:$0xff]
  %v28 = vld [vmem:[%s0 + $0x68] sm:$0xf]
  %v29 = vld [vmem:[%s0 + $0x6c] sm:$0xff]
  %v30 = vld [vmem:[%s0 + $0x74] sm:$0xff]
  %v31 = vld [vmem:[%s0 + $0x7c] sm:$0xff]
  %v32 = vld [vmem:[%s0 + $0x84] sm:$0xff]
  %v33 = vld [vmem:[%s0 + $0x8c] sm:$0xf]
  %v34 = vld [vmem:[%s1] sm:$0xff]
  %v35 = vld [vmem:[%s1 + $0x8] sm:$0xff]
  %v36 = vld [vmem:[%s1 + $0x10] sm:$0xff]
  %v37 = vld [vmem:[%s1 + $0x18] sm:$0xff]
  %v38 = vld [vmem:[%s1 + $0x20] sm:$0xff]
  %v39 = vld [vmem:[%s1 + $0x28] sm:$0xff]
  %v40 = vld [vmem:[%s1 + $0x30] sm:$0xff]
  %v41 = vld [vmem:[%s1 + $0x38] sm:$0xff]
  %v42 = vld [vmem:[%s1 + $0x40] sm:$0xff]
  %v43 = vld [vmem:[%s1 + $0x48] sm:$0xff]
  %v44 = vld [vmem:[%s1 + $0x50] sm:$0xff]
  %v45 = vld [vmem:[%s1 + $0x58] sm:$0xff]
  %v46 = vld [vmem:[%s1 + $0x60] sm:$0xff]
  %v47 = vld [vmem:[%s1 + $0x68] sm:$0xff]
  %v48 = vld [vmem:[%s1 + $0x70] sm:$0xff]
  %v49 = vld [vmem:[%s1 + $0x78] sm:$0xff]
  %v50 = vld [vmem:[%s1 + $0x80] sm:$0xff]
  %v51 = vld [vmem:[%s1 + $0x88] sm:$0xff]
  %v52 = vld [vmem:[%s1 + $0x90] sm:$0xff]
  %v53 = vld [vmem:[%s1 + $0x98] sm:$0xff]
  %v54 = vld [vmem:[%s1 + $0xa0] sm:$0xff]
  %v55 = vld [vmem:[%s1 + $0xa8] sm:$0xff]
  %v56 = vld [vmem:[%s1 + $0xb0] sm:$0xff]
  %v57 = vld [vmem:[%s1 + $0xb8] sm:$0xff]
  %v58 = vld [vmem:[%s1 + $0xc0] sm:$0xff]
  %v59 = vld [vmem:[%s1 + $0xc8] sm:$0xff]
  %v60 = vld [vmem:[%s1 + $0xd0] sm:$0xff]
  %v61 = vld [vmem:[%s1 + $0xd8] sm:$0xff]
  %v62 = vld [vmem:[%s1 + $0xe0] sm:$0xff]
  %v63 = vld [vmem:[%s1 + $0xe8] sm:$0xff]
  %v64 = vld [vmem:[%s1 + $0xf0] sm:$0xff]
  %v65 = vld [vmem:[%s1 + $0xf8] sm:$0xff]
  %v66 = vld [vmem:[%s1 + $0x100] sm:$0xff]
  %v67 = vld [vmem:[%s1 + $0x108] sm:$0xff]
  %v68 = vld [vmem:[%s1 + $0x110] sm:$0xff]
  %v69 = vld [vmem:[%s1 + $0x118] sm:$0xff]
  %v70 = vld [vmem:[%s1 + $0x120] sm:$0xff]
  %v71 = vld [vmem:[%s1 + $0x128] sm:$0xff]
  %v72 = vld [vmem:[%s1 + $0x130] sm:$0xff]
  %v73 = vld [vmem:[%s1 + $0x138] sm:$0xff]
  %v74 = vld [vmem:[%s1 + $0x140] sm:$0xff]
  %v75 = vld [vmem:[%s1 + $0x148] sm:$0xff]
  %v76 = vld [vmem:[%s1 + $0x150] sm:$0xff]
  %v77 = vld [vmem:[%s1 + $0x158] sm:$0xff]
  %v78 = vld [vmem:[%s1 + $0x160] sm:$0xff]
  %v79 = vld [vmem:[%s1 + $0x168] sm:$0xff]
  %v80 = vld [vmem:[%s1 + $0x170] sm:$0xff]
  %v81 = vld [vmem:[%s1 + $0x178] sm:$0xff]
  %v82 = vld [vmem:[%s1 + $0x180] sm:$0xff]
  %v83 = vld [vmem:[%s1 + $0x188] sm:$0xff]
  %v84 = vld [vmem:[%s1 + $0x190] sm:$0xff]
  %v85 = vld [vmem:[%s1 + $0x198] sm:$0xff]
  %v86 = vld [vmem:[%s1 + $0x1a0] sm:$0xff]
  %v87 = vld [vmem:[%s1 + $0x1a8] sm:$0xff]
  %v88 = vld [vmem:[%s1 + $0x1b0] sm:$0xff]
  %v89 = vld [vmem:[%s1 + $0x1b8] sm:$0xff]
  %v90 = vld [vmem:[%s1 + $0x1c0] sm:$0xff]
  %v91 = vld [vmem:[%s1 + $0x1c8] sm:$0xff]
  %v92 = vld [vmem:[%s1 + $0x1d0] sm:$0xff]
  %v93 = vld [vmem:[%s1 + $0x1d8] sm:$0xff]
  %v94 = vld [vmem:[%s1 + $0x1e0] sm:$0xff]
  %v95 = vld [vmem:[%s1 + $0x1e8] sm:$0xff]
  %v96 = vld [vmem:[%s1 + $0x1f0] sm:$0xff]
  %v97 = vld [vmem:[%s1 + $0x1f8] sm:$0xff]
  %v98 = vld [vmem:[%s1 + $0x200] sm:$0xff]
  %v99 = vld [vmem:[%s1 + $0x208] sm:$0xff]
  %v100 = vld [vmem:[%s1 + $0x210] sm:$0xff]
  %v101 = vld [vmem:[%s1 + $0x218] sm:$0xff]
  %v102 = vld [vmem:[%s1 + $0x220] sm:$0xff]
  %v103 = vld [vmem:[%s1 + $0x228] sm:$0xff]
  %v104 = vld [vmem:[%s1 + $0x230] sm:$0xff]
  %v105 = vld [vmem:[%s1 + $0x238] sm:$0xff]
  %v106 = vld [vmem:[%s1 + $0x240] sm:$0xff]
  %v107 = vld [vmem:[%s1 + $0x248] sm:$0xff]
  %v108 = vld [vmem:[%s1 + $0x250] sm:$0xff]
  %v109 = vld [vmem:[%s1 + $0x258] sm:$0xff]
  %v110 = vld [vmem:[%s1 + $0x260] sm:$0xff]
  %v111 = vld [vmem:[%s1 + $0x268] sm:$0xff]
  %v112 = vld [vmem:[%s1 + $0x270] sm:$0xff]
  %v113 = vld [vmem:[%s1 + $0x278] sm:$0xff]
  %v114 = vld [vmem:[%s1 + $0x280] sm:$0xff]
  %v115 = vld [vmem:[%s1 + $0x288] sm:$0xff]
  %v116 = vld [vmem:[%s1 + $0x290] sm:$0xff]
  %v117 = vld [vmem:[%s1 + $0x298] sm:$0xff]
  %v118 = vld [vmem:[%s1 + $0x2a0] sm:$0xff]
  %v119 = vld [vmem:[%s1 + $0x2a8] sm:$0xff]
  %v120 = vld [vmem:[%s1 + $0x2b0] sm:$0xff]
  %v121 = vld [vmem:[%s1 + $0x2b8] sm:$0xff]
  %v122 = vld [vmem:[%s1 + $0x2c0] sm:$0xff]
  %v123 = vld [vmem:[%s1 + $0x2c8] sm:$0xff]
  %v124 = vld [vmem:[%s1 + $0x2d0] sm:$0xff]
  %v125 = vld [vmem:[%s1 + $0x2d8] sm:$0xff]
  %v126 = vld [vmem:[%s1 + $0x2e0] sm:$0xff]
  %v127 = vld [vmem:[%s1 + $0x2e8] sm:$0xff]
  %v128 = vld [vmem:[%s1 + $0x2f0] sm:$0xff]
  %v129 = vld [vmem:[%s1 + $0x2f8] sm:$0xff]
  %v130 = vld [vmem:[%s1 + $0x300] sm:$0xff]
  %v131 = vld [vmem:[%s1 + $0x308] sm:$0xff]
  %v132 = vld [vmem:[%s1 + $0x310] sm:$0xff]
  %v133 = vld [vmem:[%s1 + $0x318] sm:$0xff]
  %v134 = vld [vmem:[%s1 + $0x320] sm:$0xff]
  %v135 = vld [vmem:[%s1 + $0x328] sm:$0xff]
  %v136 = vld [vmem:[%s1 + $0x330] sm:$0xff]
  %v137 = vld [vmem:[%s1 + $0x338] sm:$0xff]
  %v138 = vld [vmem:[%s1 + $0x340] sm:$0xff]
  %v139 = vld [vmem:[%s1 + $0x348] sm:$0xff]
  %v140 = vld [vmem:[%s1 + $0x350] sm:$0xff]
  %v141 = vld [vmem:[%s1 + $0x358] sm:$0xff]
  %v142 = vld [vmem:[%s1 + $0x360] sm:$0xff]
  %v143 = vld [vmem:[%s1 + $0x368] sm:$0xff]
  %v144 = vld [vmem:[%s1 + $0x370] sm:$0xff]
  %v145 = vld [vmem:[%s1 + $0x378] sm:$0xff]
  %v146 = vld [vmem:[%s1 + $0x380] sm:$0xff]
  %v147 = vld [vmem:[%s1 + $0x388] sm:$0xff]
  %v148 = vld [vmem:[%s1 + $0x390] sm:$0xff]
  %v149 = vld [vmem:[%s1 + $0x398] sm:$0xff]
  %v150 = vld [vmem:[%s1 + $0x3a0] sm:$0xff]
  %v151 = vld [vmem:[%s1 + $0x3a8] sm:$0xff]
  %v152 = vld [vmem:[%s1 + $0x3b0] sm:$0xff]
  %v153 = vld [vmem:[%s1 + $0x3b8] sm:$0xff]
  %v154 = vld [vmem:[%s1 + $0x3c0] sm:$0xff]
  %v155 = vld [vmem:[%s1 + $0x3c8] sm:$0xff]
  %v156 = vld [vmem:[%s1 + $0x3d0] sm:$0xff]
  %v157 = vld [vmem:[%s1 + $0x3d8] sm:$0xff]
  %v158 = vld [vmem:[%s1 + $0x3e0] sm:$0xff]
  %v159 = vld [vmem:[%s1 + $0x3e8] sm:$0xff]
  %v160 = vld [vmem:[%s1 + $0x3f0] sm:$0xff]
  %v161 = vld [vmem:[%s1 + $0x3f8] sm:$0xff]
  %v162 = vld [vmem:[%s1 + $0x400] sm:$0xff]
  %v163 = vld [vmem:[%s1 + $0x408] sm:$0xff]
  %v164 = vld [vmem:[%s1 + $0x410] sm:$0xff]
  %v165 = vld [vmem:[%s1 + $0x418] sm:$0xff]
  %v166 = vld [vmem:[%s1 + $0x420] sm:$0xff]
  %v167 = vld [vmem:[%s1 + $0x428] sm:$0xff]
  %v168 = vld [vmem:[%s1 + $0x430] sm:$0xff]
  %v169 = vld [vmem:[%s1 + $0x438] sm:$0xff]
  %v170 = vld [vmem:[%s1 + $0x440] sm:$0xff]
  %v171 = vld [vmem:[%s1 + $0x448] sm:$0xff]
  %v172 = vld [vmem:[%s1 + $0x450] sm:$0xff]
  %v173 = vld [vmem:[%s1 + $0x458] sm:$0xff]
  %v174 = vld [vmem:[%s1 + $0x460] sm:$0xff]
  %v175 = vld [vmem:[%s1 + $0x468] sm:$0xff]
  %v176 = vld [vmem:[%s1 + $0x470] sm:$0xff]
  %v177 = vld [vmem:[%s1 + $0x478] sm:$0xff]
  %v178 = vld [vmem:[%s2] sm:$0x3]
  %v180 = vperm.slane %v178, 0
  %v181 = vperm.slane %v178, 1
  %v204 = vunpack.c.l.b16 %v14
  %v205 = vunpack.c.h.b16 %v14
  %v206 = vunpack.c.l.b16 %v15
  %v207 = vunpack.c.h.b16 %v15
  %v208 = vunpack.c.l.b16 %v16
  %v209 = vunpack.c.h.b16 %v16
  %v210 = vunpack.c.l.b16 %v17
  %v211 = vunpack.c.h.b16 %v17
  %v212 = vunpack.c.l.b16 %v18
  %v213 = vunpack.c.l.b16 %v19
  %v214 = vunpack.c.h.b16 %v19
  %v215 = vunpack.c.l.b16 %v20
  %v216 = vunpack.c.h.b16 %v20
  %v217 = vunpack.c.l.b16 %v21
  %v218 = vunpack.c.h.b16 %v21
  %v219 = vunpack.c.l.b16 %v22
  %v220 = vunpack.c.h.b16 %v22
  %v221 = vunpack.c.l.b16 %v23
  %v222 = vunpack.c.l.b16 %v24
  %v223 = vunpack.c.h.b16 %v24
  %v224 = vunpack.c.l.b16 %v25
  %v225 = vunpack.c.h.b16 %v25
  %v226 = vunpack.c.l.b16 %v26
  %v227 = vunpack.c.h.b16 %v26
  %v228 = vunpack.c.l.b16 %v27
  %v229 = vunpack.c.h.b16 %v27
  %v230 = vunpack.c.l.b16 %v28
  %v231 = vunpack.c.l.b16 %v29
  %v232 = vunpack.c.h.b16 %v29
  %v233 = vunpack.c.l.b16 %v30
  %v234 = vunpack.c.h.b16 %v30
  %v235 = vunpack.c.l.b16 %v31
  %v236 = vunpack.c.h.b16 %v31
  %v237 = vunpack.c.l.b16 %v32
  %v238 = vunpack.c.h.b16 %v32
  %v239 = vunpack.c.l.b16 %v33
  %v240 = vpack.c.b16 %v213, %v204
  %v241 = vpack.c.b16 %v214, %v205
  %v242 = vpack.c.b16 %v215, %v206
  %v243 = vpack.c.b16 %v216, %v207
  %v244 = vpack.c.b16 %v217, %v208
  %v245 = vpack.c.b16 %v218, %v209
  %v246 = vpack.c.b16 %v219, %v210
  %v247 = vpack.c.b16 %v220, %v211
  %v248 = vpack.c.b16 %v221, %v212
  %v249 = vpack.c.b16 %v231, %v222
  %v250 = vpack.c.b16 %v232, %v223
  %v251 = vpack.c.b16 %v233, %v224
  %v252 = vpack.c.b16 %v234, %v225
  %v253 = vpack.c.b16 %v235, %v226
  %v254 = vpack.c.b16 %v236, %v227
  %v255 = vpack.c.b16 %v237, %v228
  %v256 = vpack.c.b16 %v238, %v229
  %v257 = vpack.c.b16 %v239, %v230
  %v420 = vunpack.c.l.b16 %v34
  %v421 = vunpack.c.h.b16 %v34
  %v422 = vunpack.c.l.b16 %v35
  %v423 = vunpack.c.h.b16 %v35
  %v424 = vunpack.c.l.b16 %v36
  %v425 = vunpack.c.h.b16 %v36
  %v426 = vunpack.c.l.b16 %v37
  %v427 = vunpack.c.h.b16 %v37
  %v428 = vunpack.c.l.b16 %v38
  %v429 = vunpack.c.h.b16 %v38
  %v430 = vunpack.c.l.b16 %v39
  %v431 = vunpack.c.h.b16 %v39
  %v432 = vunpack.c.l.b16 %v40
  %v433 = vunpack.c.h.b16 %v40
  %v434 = vunpack.c.l.b16 %v41
  %v435 = vunpack.c.h.b16 %v41
  %v436 = vunpack.c.l.b16 %v42
  %v437 = vunpack.c.h.b16 %v42
  %v438 = vunpack.c.l.b16 %v43
  %v439 = vunpack.c.h.b16 %v43
  %v440 = vunpack.c.l.b16 %v44
  %v441 = vunpack.c.h.b16 %v44
  %v442 = vunpack.c.l.b16 %v45
  %v443 = vunpack.c.h.b16 %v45
  %v444 = vunpack.c.l.b16 %v46
  %v445 = vunpack.c.h.b16 %v46
  %v446 = vunpack.c.l.b16 %v47
  %v447 = vunpack.c.h.b16 %v47
  %v448 = vunpack.c.l.b16 %v48
  %v449 = vunpack.c.h.b16 %v48
  %v450 = vunpack.c.l.b16 %v49
  %v451 = vunpack.c.h.b16 %v49
  %v452 = vunpack.c.l.b16 %v50
  %v453 = vunpack.c.h.b16 %v50
  %v454 = vunpack.c.l.b16 %v51
  %v455 = vunpack.c.h.b16 %v51
  %v456 = vunpack.c.l.b16 %v52
  %v457 = vunpack.c.h.b16 %v52
  %v458 = vunpack.c.l.b16 %v53
  %v459 = vunpack.c.h.b16 %v53
  %v460 = vunpack.c.l.b16 %v54
  %v461 = vunpack.c.h.b16 %v54
  %v462 = vunpack.c.l.b16 %v55
  %v463 = vunpack.c.h.b16 %v55
  %v464 = vunpack.c.l.b16 %v56
  %v465 = vunpack.c.h.b16 %v56
  %v466 = vunpack.c.l.b16 %v57
  %v467 = vunpack.c.h.b16 %v57
  %v468 = vunpack.c.l.b16 %v58
  %v469 = vunpack.c.h.b16 %v58
  %v470 = vunpack.c.l.b16 %v59
  %v471 = vunpack.c.h.b16 %v59
  %v472 = vunpack.c.l.b16 %v60
  %v473 = vunpack.c.h.b16 %v60
  %v474 = vunpack.c.l.b16 %v61
  %v475 = vunpack.c.h.b16 %v61
  %v476 = vunpack.c.l.b16 %v62
  %v477 = vunpack.c.h.b16 %v62
  %v478 = vunpack.c.l.b16 %v63
  %v479 = vunpack.c.h.b16 %v63
  %v480 = vunpack.c.l.b16 %v64
  %v481 = vunpack.c.h.b16 %v64
  %v482 = vunpack.c.l.b16 %v65
  %v483 = vunpack.c.h.b16 %v65
  %v484 = vunpack.c.l.b16 %v66
  %v485 = vunpack.c.h.b16 %v66
  %v486 = vunpack.c.l.b16 %v67
  %v487 = vunpack.c.h.b16 %v67
  %v488 = vunpack.c.l.b16 %v68
  %v489 = vunpack.c.h.b16 %v68
  %v490 = vunpack.c.l.b16 %v69
  %v491 = vunpack.c.h.b16 %v69
  %v492 = vunpack.c.l.b16 %v70
  %v493 = vunpack.c.h.b16 %v70
  %v494 = vunpack.c.l.b16 %v71
  %v495 = vunpack.c.h.b16 %v71
  %v496 = vunpack.c.l.b16 %v72
  %v497 = vunpack.c.h.b16 %v72
  %v498 = vunpack.c.l.b16 %v73
  %v499 = vunpack.c.h.b16 %v73
  %v500 = vunpack.c.l.b16 %v74
  %v501 = vunpack.c.h.b16 %v74
  %v502 = vunpack.c.l.b16 %v75
  %v503 = vunpack.c.h.b16 %v75
  %v504 = vunpack.c.l.b16 %v76
  %v505 = vunpack.c.h.b16 %v76
  %v506 = vunpack.c.l.b16 %v77
  %v507 = vunpack.c.h.b16 %v77
  %v508 = vunpack.c.l.b16 %v78
  %v509 = vunpack.c.h.b16 %v78
  %v510 = vunpack.c.l.b16 %v79
  %v511 = vunpack.c.h.b16 %v79
  %v512 = vunpack.c.l.b16 %v80
  %v513 = vunpack.c.h.b16 %v80
  %v514 = vunpack.c.l.b16 %v81
  %v515 = vunpack.c.h.b16 %v81
  %v516 = vunpack.c.l.b16 %v82
  %v517 = vunpack.c.h.b16 %v82
  %v518 = vunpack.c.l.b16 %v83
  %v519 = vunpack.c.h.b16 %v83
  %v520 = vunpack.c.l.b16 %v84
  %v521 = vunpack.c.h.b16 %v84
  %v522 = vunpack.c.l.b16 %v85
  %v523 = vunpack.c.h.b16 %v85
  %v524 = vunpack.c.l.b16 %v86
  %v525 = vunpack.c.h.b16 %v86
  %v526 = vunpack.c.l.b16 %v87
  %v527 = vunpack.c.h.b16 %v87
  %v528 = vunpack.c.l.b16 %v88
  %v529 = vunpack.c.h.b16 %v88
  %v530 = vunpack.c.l.b16 %v89
  %v531 = vunpack.c.h.b16 %v89
  %v532 = vunpack.c.l.b16 %v90
  %v533 = vunpack.c.h.b16 %v90
  %v534 = vunpack.c.l.b16 %v91
  %v535 = vunpack.c.h.b16 %v91
  %v536 = vunpack.c.l.b16 %v92
  %v537 = vunpack.c.h.b16 %v92
  %v538 = vunpack.c.l.b16 %v93
  %v539 = vunpack.c.h.b16 %v93
  %v540 = vunpack.c.l.b16 %v94
  %v541 = vunpack.c.h.b16 %v94
  %v542 = vunpack.c.l.b16 %v95
  %v543 = vunpack.c.h.b16 %v95
  %v544 = vunpack.c.l.b16 %v96
  %v545 = vunpack.c.h.b16 %v96
  %v546 = vunpack.c.l.b16 %v97
  %v547 = vunpack.c.h.b16 %v97
  %v548 = vunpack.c.l.b16 %v98
  %v549 = vunpack.c.h.b16 %v98
  %v550 = vunpack.c.l.b16 %v99
  %v551 = vunpack.c.h.b16 %v99
  %v552 = vunpack.c.l.b16 %v100
  %v553 = vunpack.c.h.b16 %v100
  %v554 = vunpack.c.l.b16 %v101
  %v555 = vunpack.c.h.b16 %v101
  %v556 = vunpack.c.l.b16 %v102
  %v557 = vunpack.c.h.b16 %v102
  %v558 = vunpack.c.l.b16 %v103
  %v559 = vunpack.c.h.b16 %v103
  %v560 = vunpack.c.l.b16 %v104
  %v561 = vunpack.c.h.b16 %v104
  %v562 = vunpack.c.l.b16 %v105
  %v563 = vunpack.c.h.b16 %v105
  %v564 = vunpack.c.l.b16 %v106
  %v565 = vunpack.c.h.b16 %v106
  %v566 = vunpack.c.l.b16 %v107
  %v567 = vunpack.c.h.b16 %v107
  %v568 = vunpack.c.l.b16 %v108
  %v569 = vunpack.c.h.b16 %v108
  %v570 = vunpack.c.l.b16 %v109
  %v571 = vunpack.c.h.b16 %v109
  %v572 = vunpack.c.l.b16 %v110
  %v573 = vunpack.c.h.b16 %v110
  %v574 = vunpack.c.l.b16 %v111
  %v575 = vunpack.c.h.b16 %v111
  %v576 = vunpack.c.l.b16 %v112
  %v577 = vunpack.c.h.b16 %v112
  %v578 = vunpack.c.l.b16 %v113
  %v579 = vunpack.c.h.b16 %v113
  %v580 = vunpack.c.l.b16 %v114
  %v581 = vunpack.c.h.b16 %v114
  %v582 = vunpack.c.l.b16 %v115
  %v583 = vunpack.c.h.b16 %v115
  %v584 = vunpack.c.l.b16 %v116
  %v585 = vunpack.c.h.b16 %v116
  %v586 = vunpack.c.l.b16 %v117
  %v587 = vunpack.c.h.b16 %v117
  %v588 = vunpack.c.l.b16 %v118
  %v589 = vunpack.c.h.b16 %v118
  %v590 = vunpack.c.l.b16 %v119
  %v591 = vunpack.c.h.b16 %v119
  %v592 = vunpack.c.l.b16 %v120
  %v593 = vunpack.c.h.b16 %v120
  %v594 = vunpack.c.l.b16 %v121
  %v595 = vunpack.c.h.b16 %v121
  %v596 = vunpack.c.l.b16 %v122
  %v597 = vunpack.c.h.b16 %v122
  %v598 = vunpack.c.l.b16 %v123
  %v599 = vunpack.c.h.b16 %v123
  %v600 = vunpack.c.l.b16 %v124
  %v601 = vunpack.c.h.b16 %v124
  %v602 = vunpack.c.l.b16 %v125
  %v603 = vunpack.c.h.b16 %v125
  %v604 = vunpack.c.l.b16 %v126
  %v605 = vunpack.c.h.b16 %v126
  %v606 = vunpack.c.l.b16 %v127
  %v607 = vunpack.c.h.b16 %v127
  %v608 = vunpack.c.l.b16 %v128
  %v609 = vunpack.c.h.b16 %v128
  %v610 = vunpack.c.l.b16 %v129
  %v611 = vunpack.c.h.b16 %v129
  %v612 = vunpack.c.l.b16 %v130
  %v613 = vunpack.c.h.b16 %v130
  %v614 = vunpack.c.l.b16 %v131
  %v615 = vunpack.c.h.b16 %v131
  %v616 = vunpack.c.l.b16 %v132
  %v617 = vunpack.c.h.b16 %v132
  %v618 = vunpack.c.l.b16 %v133
  %v619 = vunpack.c.h.b16 %v133
  %v620 = vunpack.c.l.b16 %v134
  %v621 = vunpack.c.h.b16 %v134
  %v622 = vunpack.c.l.b16 %v135
  %v623 = vunpack.c.h.b16 %v135
  %v624 = vunpack.c.l.b16 %v136
  %v625 = vunpack.c.h.b16 %v136
  %v626 = vunpack.c.l.b16 %v137
  %v627 = vunpack.c.h.b16 %v137
  %v628 = vunpack.c.l.b16 %v138
  %v629 = vunpack.c.h.b16 %v138
  %v630 = vunpack.c.l.b16 %v139
  %v631 = vunpack.c.h.b16 %v139
  %v632 = vunpack.c.l.b16 %v140
  %v633 = vunpack.c.h.b16 %v140
  %v634 = vunpack.c.l.b16 %v141
  %v635 = vunpack.c.h.b16 %v141
  %v636 = vunpack.c.l.b16 %v142
  %v637 = vunpack.c.h.b16 %v142
  %v638 = vunpack.c.l.b16 %v143
  %v639 = vunpack.c.h.b16 %v143
  %v640 = vunpack.c.l.b16 %v144
  %v641 = vunpack.c.h.b16 %v144
  %v642 = vunpack.c.l.b16 %v145
  %v643 = vunpack.c.h.b16 %v145
  %v644 = vunpack.c.l.b16 %v146
  %v645 = vunpack.c.h.b16 %v146
  %v646 = vunpack.c.l.b16 %v147
  %v647 = vunpack.c.h.b16 %v147
  %v648 = vunpack.c.l.b16 %v148
  %v649 = vunpack.c.h.b16 %v148
  %v650 = vunpack.c.l.b16 %v149
  %v651 = vunpack.c.h.b16 %v149
  %v652 = vunpack.c.l.b16 %v150
  %v653 = vunpack.c.h.b16 %v150
  %v654 = vunpack.c.l.b16 %v151
  %v655 = vunpack.c.h.b16 %v151
  %v656 = vunpack.c.l.b16 %v152
  %v657 = vunpack.c.h.b16 %v152
  %v658 = vunpack.c.l.b16 %v153
  %v659 = vunpack.c.h.b16 %v153
  %v660 = vunpack.c.l.b16 %v154
  %v661 = vunpack.c.h.b16 %v154
  %v662 = vunpack.c.l.b16 %v155
  %v663 = vunpack.c.h.b16 %v155
  %v664 = vunpack.c.l.b16 %v156
  %v665 = vunpack.c.h.b16 %v156
  %v666 = vunpack.c.l.b16 %v157
  %v667 = vunpack.c.h.b16 %v157
  %v668 = vunpack.c.l.b16 %v158
  %v669 = vunpack.c.h.b16 %v158
  %v670 = vunpack.c.l.b16 %v159
  %v671 = vunpack.c.h.b16 %v159
  %v672 = vunpack.c.l.b16 %v160
  %v673 = vunpack.c.h.b16 %v160
  %v674 = vunpack.c.l.b16 %v161
  %v675 = vunpack.c.h.b16 %v161
  %v676 = vunpack.c.l.b16 %v162
  %v677 = vunpack.c.h.b16 %v162
  %v678 = vunpack.c.l.b16 %v163
  %v679 = vunpack.c.h.b16 %v163
  %v680 = vunpack.c.l.b16 %v164
  %v681 = vunpack.c.h.b16 %v164
  %v682 = vunpack.c.l.b16 %v165
  %v683 = vunpack.c.h.b16 %v165
  %v684 = vunpack.c.l.b16 %v166
  %v685 = vunpack.c.h.b16 %v166
  %v686 = vunpack.c.l.b16 %v167
  %v687 = vunpack.c.h.b16 %v167
  %v688 = vunpack.c.l.b16 %v168
  %v689 = vunpack.c.h.b16 %v168
  %v690 = vunpack.c.l.b16 %v169
  %v691 = vunpack.c.h.b16 %v169
  %v692 = vunpack.c.l.b16 %v170
  %v693 = vunpack.c.h.b16 %v170
  %v694 = vunpack.c.l.b16 %v171
  %v695 = vunpack.c.h.b16 %v171
  %v696 = vunpack.c.l.b16 %v172
  %v697 = vunpack.c.h.b16 %v172
  %v698 = vunpack.c.l.b16 %v173
  %v699 = vunpack.c.h.b16 %v173
  %v700 = vunpack.c.l.b16 %v174
  %v701 = vunpack.c.h.b16 %v174
  %v702 = vunpack.c.l.b16 %v175
  %v703 = vunpack.c.h.b16 %v175
  %v704 = vunpack.c.l.b16 %v176
  %v705 = vunpack.c.h.b16 %v176
  %v706 = vunpack.c.l.b16 %v177
  %v707 = vunpack.c.h.b16 %v177
  %v708 = vpack.c.b16 %v422, %v420
  %v709 = vpack.c.b16 %v423, %v421
  %v710 = vpack.c.b16 %v426, %v424
  %v711 = vpack.c.b16 %v427, %v425
  %v712 = vpack.c.b16 %v430, %v428
  %v713 = vpack.c.b16 %v431, %v429
  %v714 = vpack.c.b16 %v434, %v432
  %v715 = vpack.c.b16 %v435, %v433
  %v716 = vpack.c.b16 %v438, %v436
  %v717 = vpack.c.b16 %v439, %v437
  %v718 = vpack.c.b16 %v442, %v440
  %v719 = vpack.c.b16 %v443, %v441
  %v720 = vpack.c.b16 %v446, %v444
  %v721 = vpack.c.b16 %v447, %v445
  %v722 = vpack.c.b16 %v450, %v448
  %v723 = vpack.c.b16 %v451, %v449
  %v724 = vpack.c.b16 %v454, %v452
  %v725 = vpack.c.b16 %v455, %v453
  %v726 = vpack.c.b16 %v458, %v456
  %v727 = vpack.c.b16 %v459, %v457
  %v728 = vpack.c.b16 %v462, %v460
  %v729 = vpack.c.b16 %v463, %v461
  %v730 = vpack.c.b16 %v466, %v464
  %v731 = vpack.c.b16 %v467, %v465
  %v732 = vpack.c.b16 %v470, %v468
  %v733 = vpack.c.b16 %v471, %v469
  %v734 = vpack.c.b16 %v474, %v472
  %v735 = vpack.c.b16 %v475, %v473
  %v736 = vpack.c.b16 %v478, %v476
  %v737 = vpack.c.b16 %v479, %v477
  %v738 = vpack.c.b16 %v482, %v480
  %v739 = vpack.c.b16 %v483, %v481
  %v740 = vpack.c.b16 %v486, %v484
  %v741 = vpack.c.b16 %v487, %v485
  %v742 = vpack.c.b16 %v490, %v488
  %v743 = vpack.c.b16 %v491, %v489
  %v744 = vpack.c.b16 %v494, %v492
  %v745 = vpack.c.b16 %v495, %v493
  %v746 = vpack.c.b16 %v498, %v496
  %v747 = vpack.c.b16 %v499, %v497
  %v748 = vpack.c.b16 %v502, %v500
  %v749 = vpack.c.b16 %v503, %v501
  %v750 = vpack.c.b16 %v506, %v504
  %v751 = vpack.c.b16 %v507, %v505
  %v752 = vpack.c.b16 %v510, %v508
  %v753 = vpack.c.b16 %v511, %v509
  %v754 = vpack.c.b16 %v514, %v512
  %v755 = vpack.c.b16 %v515, %v513
  %v756 = vpack.c.b16 %v518, %v516
  %v757 = vpack.c.b16 %v519, %v517
  %v758 = vpack.c.b16 %v522, %v520
  %v759 = vpack.c.b16 %v523, %v521
  %v760 = vpack.c.b16 %v526, %v524
  %v761 = vpack.c.b16 %v527, %v525
  %v762 = vpack.c.b16 %v530, %v528
  %v763 = vpack.c.b16 %v531, %v529
  %v764 = vpack.c.b16 %v534, %v532
  %v765 = vpack.c.b16 %v535, %v533
  %v766 = vpack.c.b16 %v538, %v536
  %v767 = vpack.c.b16 %v539, %v537
  %v768 = vpack.c.b16 %v542, %v540
  %v769 = vpack.c.b16 %v543, %v541
  %v770 = vpack.c.b16 %v546, %v544
  %v771 = vpack.c.b16 %v547, %v545
  %v772 = vpack.c.b16 %v550, %v548
  %v773 = vpack.c.b16 %v551, %v549
  %v774 = vpack.c.b16 %v554, %v552
  %v775 = vpack.c.b16 %v555, %v553
  %v776 = vpack.c.b16 %v558, %v556
  %v777 = vpack.c.b16 %v559, %v557
  %v778 = vpack.c.b16 %v562, %v560
  %v779 = vpack.c.b16 %v563, %v561
  %v780 = vpack.c.b16 %v566, %v564
  %v781 = vpack.c.b16 %v567, %v565
  %v782 = vpack.c.b16 %v570, %v568
  %v783 = vpack.c.b16 %v571, %v569
  %v784 = vpack.c.b16 %v574, %v572
  %v785 = vpack.c.b16 %v575, %v573
  %v786 = vpack.c.b16 %v578, %v576
  %v787 = vpack.c.b16 %v579, %v577
  %v788 = vpack.c.b16 %v582, %v580
  %v789 = vpack.c.b16 %v583, %v581
  %v790 = vpack.c.b16 %v586, %v584
  %v791 = vpack.c.b16 %v587, %v585
  %v792 = vpack.c.b16 %v590, %v588
  %v793 = vpack.c.b16 %v591, %v589
  %v794 = vpack.c.b16 %v594, %v592
  %v795 = vpack.c.b16 %v595, %v593
  %v796 = vpack.c.b16 %v598, %v596
  %v797 = vpack.c.b16 %v599, %v597
  %v798 = vpack.c.b16 %v602, %v600
  %v799 = vpack.c.b16 %v603, %v601
  %v800 = vpack.c.b16 %v606, %v604
  %v801 = vpack.c.b16 %v607, %v605
  %v802 = vpack.c.b16 %v610, %v608
  %v803 = vpack.c.b16 %v611, %v609
  %v804 = vpack.c.b16 %v614, %v612
  %v805 = vpack.c.b16 %v615, %v613
  %v806 = vpack.c.b16 %v618, %v616
  %v807 = vpack.c.b16 %v619, %v617
  %v808 = vpack.c.b16 %v622, %v620
  %v809 = vpack.c.b16 %v623, %v621
  %v810 = vpack.c.b16 %v626, %v624
  %v811 = vpack.c.b16 %v627, %v625
  %v812 = vpack.c.b16 %v630, %v628
  %v813 = vpack.c.b16 %v631, %v629
  %v814 = vpack.c.b16 %v634, %v632
  %v815 = vpack.c.b16 %v635, %v633
  %v816 = vpack.c.b16 %v638, %v636
  %v817 = vpack.c.b16 %v639, %v637
  %v818 = vpack.c.b16 %v642, %v640
  %v819 = vpack.c.b16 %v643, %v641
  %v820 = vpack.c.b16 %v646, %v644
  %v821 = vpack.c.b16 %v647, %v645
  %v822 = vpack.c.b16 %v650, %v648
  %v823 = vpack.c.b16 %v651, %v649
  %v824 = vpack.c.b16 %v654, %v652
  %v825 = vpack.c.b16 %v655, %v653
  %v826 = vpack.c.b16 %v658, %v656
  %v827 = vpack.c.b16 %v659, %v657
  %v828 = vpack.c.b16 %v662, %v660
  %v829 = vpack.c.b16 %v663, %v661
  %v830 = vpack.c.b16 %v666, %v664
  %v831 = vpack.c.b16 %v667, %v665
  %v832 = vpack.c.b16 %v670, %v668
  %v833 = vpack.c.b16 %v671, %v669
  %v834 = vpack.c.b16 %v674, %v672
  %v835 = vpack.c.b16 %v675, %v673
  %v836 = vpack.c.b16 %v678, %v676
  %v837 = vpack.c.b16 %v679, %v677
  %v838 = vpack.c.b16 %v682, %v680
  %v839 = vpack.c.b16 %v683, %v681
  %v840 = vpack.c.b16 %v686, %v684
  %v841 = vpack.c.b16 %v687, %v685
  %v842 = vpack.c.b16 %v690, %v688
  %v843 = vpack.c.b16 %v691, %v689
  %v844 = vpack.c.b16 %v694, %v692
  %v845 = vpack.c.b16 %v695, %v693
  %v846 = vpack.c.b16 %v698, %v696
  %v847 = vpack.c.b16 %v699, %v697
  %v848 = vpack.c.b16 %v702, %v700
  %v849 = vpack.c.b16 %v703, %v701
  %v850 = vpack.c.b16 %v706, %v704
  %v851 = vpack.c.b16 %v707, %v705
  %996 = vmatpush.bf16.msra.mxu0 %v722
  %997 = vmatpush.bf16.msra.mxu0 %v720
  %998 = vmatpush.bf16.msra.mxu0 %v718
  %999 = vmatpush.bf16.msra.mxu0 %v716
  %1000 = vmatpush.bf16.msra.mxu0 %v714
  %1001 = vmatpush.bf16.msra.mxu0 %v712
  %1002 = vmatpush.bf16.msra.mxu0 %v710
  %1003 = vmatpush.bf16.msra.mxu0 %v708
  %1004 = vmatmul.bf16.gmra.mxu0 %v240
  %v1005 = vpop.f32.mrf.mxu0
  %v1006 = vadd.f32 %v180, %v1005
  %v1007 = vpop.f32.mrf.mxu0
  %v1008 = vadd.f32 %v180, %v1007
  %1009 = vmatmul.bf16.gmra.mxu0 %v249
  %v1010 = vpop.f32.mrf.mxu0
  %v1011 = vadd.f32 %v180, %v1010
  %v1012 = vpop.f32.mrf.mxu0
  %v1013 = vadd.f32 %v180, %v1012
  %1014 = vdwg.mxu0
  %1015 = vmatpush.bf16.msra.mxu0 %v738
  %1016 = vmatpush.bf16.msra.mxu0 %v736
  %1017 = vmatpush.bf16.msra.mxu0 %v734
  %1018 = vmatpush.bf16.msra.mxu0 %v732
  %1019 = vmatpush.bf16.msra.mxu0 %v730
  %1020 = vmatpush.bf16.msra.mxu0 %v728
  %1021 = vmatpush.bf16.msra.mxu0 %v726
  %1022 = vmatpush.bf16.msra.mxu0 %v724
  %1023 = vmatmul.bf16.gmra.mxu0 %v241
  %v1024 = vpop.f32.mrf.mxu0
  %v1025 = vadd.f32 %v1006, %v1024
  %v1026 = vpop.f32.mrf.mxu0
  %v1027 = vadd.f32 %v1008, %v1026
  %1028 = vmatmul.bf16.gmra.mxu0 %v250
  %v1029 = vpop.f32.mrf.mxu0
  %v1030 = vadd.f32 %v1011, %v1029
  %v1031 = vpop.f32.mrf.mxu0
  %v1032 = vadd.f32 %v1013, %v1031
  %1033 = vdwg.mxu0
  %1034 = vmatpush.bf16.msra.mxu0 %v754
  %1035 = vmatpush.bf16.msra.mxu0 %v752
  %1036 = vmatpush.bf16.msra.mxu0 %v750
  %1037 = vmatpush.bf16.msra.mxu0 %v748
  %1038 = vmatpush.bf16.msra.mxu0 %v746
  %1039 = vmatpush.bf16.msra.mxu0 %v744
  %1040 = vmatpush.bf16.msra.mxu0 %v742
  %1041 = vmatpush.bf16.msra.mxu0 %v740
  %1042 = vmatmul.bf16.gmra.mxu0 %v242
  %v1043 = vpop.f32.mrf.mxu0
  %v1044 = vadd.f32 %v1025, %v1043
  %v1045 = vpop.f32.mrf.mxu0
  %v1046 = vadd.f32 %v1027, %v1045
  %1047 = vmatmul.bf16.gmra.mxu0 %v251
  %v1048 = vpop.f32.mrf.mxu0
  %v1049 = vadd.f32 %v1030, %v1048
  %v1050 = vpop.f32.mrf.mxu0
  %v1051 = vadd.f32 %v1032, %v1050
  %1052 = vdwg.mxu0
  %1053 = vmatpush.bf16.msra.mxu0 %v770
  %1054 = vmatpush.bf16.msra.mxu0 %v768
  %1055 = vmatpush.bf16.msra.mxu0 %v766
  %1056 = vmatpush.bf16.msra.mxu0 %v764
  %1057 = vmatpush.bf16.msra.mxu0 %v762
  %1058 = vmatpush.bf16.msra.mxu0 %v760
  %1059 = vmatpush.bf16.msra.mxu0 %v758
  %1060 = vmatpush.bf16.msra.mxu0 %v756
  %1061 = vmatmul.bf16.gmra.mxu0 %v243
  %v1062 = vpop.f32.mrf.mxu0
  %v1063 = vadd.f32 %v1044, %v1062
  %v1064 = vpop.f32.mrf.mxu0
  %v1065 = vadd.f32 %v1046, %v1064
  %1066 = vmatmul.bf16.gmra.mxu0 %v252
  %v1067 = vpop.f32.mrf.mxu0
  %v1068 = vadd.f32 %v1049, %v1067
  %v1069 = vpop.f32.mrf.mxu0
  %v1070 = vadd.f32 %v1051, %v1069
  %1071 = vdwg.mxu0
  %1072 = vmatpush.bf16.msra.mxu0 %v786
  %1073 = vmatpush.bf16.msra.mxu0 %v784
  %1074 = vmatpush.bf16.msra.mxu0 %v782
  %1075 = vmatpush.bf16.msra.mxu0 %v780
  %1076 = vmatpush.bf16.msra.mxu0 %v778
  %1077 = vmatpush.bf16.msra.mxu0 %v776
  %1078 = vmatpush.bf16.msra.mxu0 %v774
  %1079 = vmatpush.bf16.msra.mxu0 %v772
  %1080 = vmatmul.bf16.gmra.mxu0 %v244
  %v1081 = vpop.f32.mrf.mxu0
  %v1082 = vadd.f32 %v1063, %v1081
  %v1083 = vpop.f32.mrf.mxu0
  %v1084 = vadd.f32 %v1065, %v1083
  %1085 = vmatmul.bf16.gmra.mxu0 %v253
  %v1086 = vpop.f32.mrf.mxu0
  %v1087 = vadd.f32 %v1068, %v1086
  %v1088 = vpop.f32.mrf.mxu0
  %v1089 = vadd.f32 %v1070, %v1088
  %1090 = vdwg.mxu0
  %1091 = vmatpush.bf16.msra.mxu0 %v802
  %1092 = vmatpush.bf16.msra.mxu0 %v800
  %1093 = vmatpush.bf16.msra.mxu0 %v798
  %1094 = vmatpush.bf16.msra.mxu0 %v796
  %1095 = vmatpush.bf16.msra.mxu0 %v794
  %1096 = vmatpush.bf16.msra.mxu0 %v792
  %1097 = vmatpush.bf16.msra.mxu0 %v790
  %1098 = vmatpush.bf16.msra.mxu0 %v788
  %1099 = vmatmul.bf16.gmra.mxu0 %v245
  %v1100 = vpop.f32.mrf.mxu0
  %v1101 = vadd.f32 %v1082, %v1100
  %v1102 = vpop.f32.mrf.mxu0
  %v1103 = vadd.f32 %v1084, %v1102
  %1104 = vmatmul.bf16.gmra.mxu0 %v254
  %v1105 = vpop.f32.mrf.mxu0
  %v1106 = vadd.f32 %v1087, %v1105
  %v1107 = vpop.f32.mrf.mxu0
  %v1108 = vadd.f32 %v1089, %v1107
  %1109 = vdwg.mxu0
  %1110 = vmatpush.bf16.msra.mxu0 %v818
  %1111 = vmatpush.bf16.msra.mxu0 %v816
  %1112 = vmatpush.bf16.msra.mxu0 %v814
  %1113 = vmatpush.bf16.msra.mxu0 %v812
  %1114 = vmatpush.bf16.msra.mxu0 %v810
  %1115 = vmatpush.bf16.msra.mxu0 %v808
  %1116 = vmatpush.bf16.msra.mxu0 %v806
  %1117 = vmatpush.bf16.msra.mxu0 %v804
  %1118 = vmatmul.bf16.gmra.mxu0 %v246
  %v1119 = vpop.f32.mrf.mxu0
  %v1120 = vadd.f32 %v1101, %v1119
  %v1121 = vpop.f32.mrf.mxu0
  %v1122 = vadd.f32 %v1103, %v1121
  %1123 = vmatmul.bf16.gmra.mxu0 %v255
  %v1124 = vpop.f32.mrf.mxu0
  %v1125 = vadd.f32 %v1106, %v1124
  %v1126 = vpop.f32.mrf.mxu0
  %v1127 = vadd.f32 %v1108, %v1126
  %1128 = vdwg.mxu0
  %1129 = vmatpush.bf16.msra.mxu0 %v834
  %1130 = vmatpush.bf16.msra.mxu0 %v832
  %1131 = vmatpush.bf16.msra.mxu0 %v830
  %1132 = vmatpush.bf16.msra.mxu0 %v828
  %1133 = vmatpush.bf16.msra.mxu0 %v826
  %1134 = vmatpush.bf16.msra.mxu0 %v824
  %1135 = vmatpush.bf16.msra.mxu0 %v822
  %1136 = vmatpush.bf16.msra.mxu0 %v820
  %1137 = vmatmul.bf16.gmra.mxu0 %v247
  %v1138 = vpop.f32.mrf.mxu0
  %v1139 = vadd.f32 %v1120, %v1138
  %v1140 = vpop.f32.mrf.mxu0
  %v1141 = vadd.f32 %v1122, %v1140
  %1142 = vmatmul.bf16.gmra.mxu0 %v256
  %v1143 = vpop.f32.mrf.mxu0
  %v1144 = vadd.f32 %v1125, %v1143
  %v1145 = vpop.f32.mrf.mxu0
  %v1146 = vadd.f32 %v1127, %v1145
  %1147 = vdwg.mxu0
  %1148 = vmatpush.bf16.msra.mxu0 %v850
  %1149 = vmatpush.bf16.msra.mxu0 %v848
  %1150 = vmatpush.bf16.msra.mxu0 %v846
  %1151 = vmatpush.bf16.msra.mxu0 %v844
  %1152 = vmatpush.bf16.msra.mxu0 %v842
  %1153 = vmatpush.bf16.msra.mxu0 %v840
  %1154 = vmatpush.bf16.msra.mxu0 %v838
  %1155 = vmatpush.bf16.msra.mxu0 %v836
  %1156 = vmatmul.bf16.gmra.mxu0 %v248
  %v1157 = vpop.f32.mrf.mxu0
  %v1158 = vadd.f32 %v1139, %v1157
  %v1159 = vpop.f32.mrf.mxu0
  %v1160 = vadd.f32 %v1141, %v1159
  %1161 = vmatmul.bf16.gmra.mxu0 %v257
  %v1162 = vpop.f32.mrf.mxu0
  %v1163 = vadd.f32 %v1144, %v1162
  %v1164 = vpop.f32.mrf.mxu0
  %v1165 = vadd.f32 %v1146, %v1164
  %1166 = vdwg.mxu0
  %1167 = vmatpush.bf16.msra.mxu0 %v723
  %1168 = vmatpush.bf16.msra.mxu0 %v721
  %1169 = vmatpush.bf16.msra.mxu0 %v719
  %1170 = vmatpush.bf16.msra.mxu0 %v717
  %1171 = vmatpush.bf16.msra.mxu0 %v715
  %1172 = vmatpush.bf16.msra.mxu0 %v713
  %1173 = vmatpush.bf16.msra.mxu0 %v711
  %1174 = vmatpush.bf16.msra.mxu0 %v709
  %1175 = vmatmul.bf16.gmra.mxu0 %v240
  %v1176 = vpop.f32.mrf.mxu0
  %v1177 = vadd.f32 %v181, %v1176
  %v1178 = vpop.f32.mrf.mxu0
  %v1179 = vadd.f32 %v181, %v1178
  %1180 = vmatmul.bf16.gmra.mxu0 %v249
  %v1181 = vpop.f32.mrf.mxu0
  %v1182 = vadd.f32 %v181, %v1181
  %v1183 = vpop.f32.mrf.mxu0
  %v1184 = vadd.f32 %v181, %v1183
  %1185 = vdwg.mxu0
  %1186 = vmatpush.bf16.msra.mxu0 %v739
  %1187 = vmatpush.bf16.msra.mxu0 %v737
  %1188 = vmatpush.bf16.msra.mxu0 %v735
  %1189 = vmatpush.bf16.msra.mxu0 %v733
  %1190 = vmatpush.bf16.msra.mxu0 %v731
  %1191 = vmatpush.bf16.msra.mxu0 %v729
  %1192 = vmatpush.bf16.msra.mxu0 %v727
  %1193 = vmatpush.bf16.msra.mxu0 %v725
  %1194 = vmatmul.bf16.gmra.mxu0 %v241
  %v1195 = vpop.f32.mrf.mxu0
  %v1196 = vadd.f32 %v1177, %v1195
  %v1197 = vpop.f32.mrf.mxu0
  %v1198 = vadd.f32 %v1179, %v1197
  %1199 = vmatmul.bf16.gmra.mxu0 %v250
  %v1200 = vpop.f32.mrf.mxu0
  %v1201 = vadd.f32 %v1182, %v1200
  %v1202 = vpop.f32.mrf.mxu0
  %v1203 = vadd.f32 %v1184, %v1202
  %1204 = vdwg.mxu0
  %1205 = vmatpush.bf16.msra.mxu0 %v755
  %1206 = vmatpush.bf16.msra.mxu0 %v753
  %1207 = vmatpush.bf16.msra.mxu0 %v751
  %1208 = vmatpush.bf16.msra.mxu0 %v749
  %1209 = vmatpush.bf16.msra.mxu0 %v747
  %1210 = vmatpush.bf16.msra.mxu0 %v745
  %1211 = vmatpush.bf16.msra.mxu0 %v743
  %1212 = vmatpush.bf16.msra.mxu0 %v741
  %1213 = vmatmul.bf16.gmra.mxu0 %v242
  %v1214 = vpop.f32.mrf.mxu0
  %v1215 = vadd.f32 %v1196, %v1214
  %v1216 = vpop.f32.mrf.mxu0
  %v1217 = vadd.f32 %v1198, %v1216
  %1218 = vmatmul.bf16.gmra.mxu0 %v251
  %v1219 = vpop.f32.mrf.mxu0
  %v1220 = vadd.f32 %v1201, %v1219
  %v1221 = vpop.f32.mrf.mxu0
  %v1222 = vadd.f32 %v1203, %v1221
  %1223 = vdwg.mxu0
  %1224 = vmatpush.bf16.msra.mxu0 %v771
  %1225 = vmatpush.bf16.msra.mxu0 %v769
  %1226 = vmatpush.bf16.msra.mxu0 %v767
  %1227 = vmatpush.bf16.msra.mxu0 %v765
  %1228 = vmatpush.bf16.msra.mxu0 %v763
  %1229 = vmatpush.bf16.msra.mxu0 %v761
  %1230 = vmatpush.bf16.msra.mxu0 %v759
  %1231 = vmatpush.bf16.msra.mxu0 %v757
  %1232 = vmatmul.bf16.gmra.mxu0 %v243
  %v1233 = vpop.f32.mrf.mxu0
  %v1234 = vadd.f32 %v1215, %v1233
  %v1235 = vpop.f32.mrf.mxu0
  %v1236 = vadd.f32 %v1217, %v1235
  %1237 = vmatmul.bf16.gmra.mxu0 %v252
  %v1238 = vpop.f32.mrf.mxu0
  %v1239 = vadd.f32 %v1220, %v1238
  %v1240 = vpop.f32.mrf.mxu0
  %v1241 = vadd.f32 %v1222, %v1240
  %1242 = vdwg.mxu0
  %1243 = vmatpush.bf16.msra.mxu0 %v787
  %1244 = vmatpush.bf16.msra.mxu0 %v785
  %1245 = vmatpush.bf16.msra.mxu0 %v783
  %1246 = vmatpush.bf16.msra.mxu0 %v781
  %1247 = vmatpush.bf16.msra.mxu0 %v779
  %1248 = vmatpush.bf16.msra.mxu0 %v777
  %1249 = vmatpush.bf16.msra.mxu0 %v775
  %1250 = vmatpush.bf16.msra.mxu0 %v773
  %1251 = vmatmul.bf16.gmra.mxu0 %v244
  %v1252 = vpop.f32.mrf.mxu0
  %v1253 = vadd.f32 %v1234, %v1252
  %v1254 = vpop.f32.mrf.mxu0
  %v1255 = vadd.f32 %v1236, %v1254
  %1256 = vmatmul.bf16.gmra.mxu0 %v253
  %v1257 = vpop.f32.mrf.mxu0
  %v1258 = vadd.f32 %v1239, %v1257
  %v1259 = vpop.f32.mrf.mxu0
  %v1260 = vadd.f32 %v1241, %v1259
  %1261 = vdwg.mxu0
  %1262 = vmatpush.bf16.msra.mxu0 %v803
  %1263 = vmatpush.bf16.msra.mxu0 %v801
  %1264 = vmatpush.bf16.msra.mxu0 %v799
  %1265 = vmatpush.bf16.msra.mxu0 %v797
  %1266 = vmatpush.bf16.msra.mxu0 %v795
  %1267 = vmatpush.bf16.msra.mxu0 %v793
  %1268 = vmatpush.bf16.msra.mxu0 %v791
  %1269 = vmatpush.bf16.msra.mxu0 %v789
  %1270 = vmatmul.bf16.gmra.mxu0 %v245
  %v1271 = vpop.f32.mrf.mxu0
  %v1272 = vadd.f32 %v1253, %v1271
  %v1273 = vpop.f32.mrf.mxu0
  %v1274 = vadd.f32 %v1255, %v1273
  %1275 = vmatmul.bf16.gmra.mxu0 %v254
  %v1276 = vpop.f32.mrf.mxu0
  %v1277 = vadd.f32 %v1258, %v1276
  %v1278 = vpop.f32.mrf.mxu0
  %v1279 = vadd.f32 %v1260, %v1278
  %1280 = vdwg.mxu0
  %1281 = vmatpush.bf16.msra.mxu0 %v819
  %1282 = vmatpush.bf16.msra.mxu0 %v817
  %1283 = vmatpush.bf16.msra.mxu0 %v815
  %1284 = vmatpush.bf16.msra.mxu0 %v813
  %1285 = vmatpush.bf16.msra.mxu0 %v811
  %1286 = vmatpush.bf16.msra.mxu0 %v809
  %1287 = vmatpush.bf16.msra.mxu0 %v807
  %1288 = vmatpush.bf16.msra.mxu0 %v805
  %1289 = vmatmul.bf16.gmra.mxu0 %v246
  %v1290 = vpop.f32.mrf.mxu0
  %v1291 = vadd.f32 %v1272, %v1290
  %v1292 = vpop.f32.mrf.mxu0
  %v1293 = vadd.f32 %v1274, %v1292
  %1294 = vmatmul.bf16.gmra.mxu0 %v255
  %v1295 = vpop.f32.mrf.mxu0
  %v1296 = vadd.f32 %v1277, %v1295
  %v1297 = vpop.f32.mrf.mxu0
  %v1298 = vadd.f32 %v1279, %v1297
  %1299 = vdwg.mxu0
  %1300 = vmatpush.bf16.msra.mxu0 %v835
  %1301 = vmatpush.bf16.msra.mxu0 %v833
  %1302 = vmatpush.bf16.msra.mxu0 %v831
  %1303 = vmatpush.bf16.msra.mxu0 %v829
  %1304 = vmatpush.bf16.msra.mxu0 %v827
  %1305 = vmatpush.bf16.msra.mxu0 %v825
  %1306 = vmatpush.bf16.msra.mxu0 %v823
  %1307 = vmatpush.bf16.msra.mxu0 %v821
  %1308 = vmatmul.bf16.gmra.mxu0 %v247
  %v1309 = vpop.f32.mrf.mxu0
  %v1310 = vadd.f32 %v1291, %v1309
  %v1311 = vpop.f32.mrf.mxu0
  %v1312 = vadd.f32 %v1293, %v1311
  %1313 = vmatmul.bf16.gmra.mxu0 %v256
  %v1314 = vpop.f32.mrf.mxu0
  %v1315 = vadd.f32 %v1296, %v1314
  %v1316 = vpop.f32.mrf.mxu0
  %v1317 = vadd.f32 %v1298, %v1316
  %1318 = vdwg.mxu0
  %1319 = vmatpush.bf16.msra.mxu0 %v851
  %1320 = vmatpush.bf16.msra.mxu0 %v849
  %1321 = vmatpush.bf16.msra.mxu0 %v847
  %1322 = vmatpush.bf16.msra.mxu0 %v845
  %1323 = vmatpush.bf16.msra.mxu0 %v843
  %1324 = vmatpush.bf16.msra.mxu0 %v841
  %1325 = vmatpush.bf16.msra.mxu0 %v839
  %1326 = vmatpush.bf16.msra.mxu0 %v837
  %1327 = vmatmul.bf16.gmra.mxu0 %v248
  %v1328 = vpop.f32.mrf.mxu0
  %v1329 = vadd.f32 %v1310, %v1328
  %v1330 = vpop.f32.mrf.mxu0
  %v1331 = vadd.f32 %v1312, %v1330
  %1332 = vmatmul.bf16.gmra.mxu0 %v257
  %v1333 = vpop.f32.mrf.mxu0
  %v1334 = vadd.f32 %v1315, %v1333
  %v1335 = vpop.f32.mrf.mxu0
  %v1336 = vadd.f32 %v1317, %v1335
  %1337 = vdwg.mxu0
  %v1338 = vmax.f32 %v1158, 0.0
  %v1339 = vmax.f32 %v1329, 0.0
  %v1340 = vmax.f32 %v1160, 0.0
  %v1341 = vmax.f32 %v1331, 0.0
  %v1342 = vmax.f32 %v1163, 0.0
  %v1343 = vmax.f32 %v1334, 0.0
  %v1344 = vmax.f32 %v1165, 0.0
  %v1345 = vmax.f32 %v1336, 0.0
  %v1346 = vpack.c.bf16 %v1339, %v1338
  %v1347 = vpack.c.bf16 %v1341, %v1340
  %v1348 = vpack.c.bf16 %v1343, %v1342
  %v1349 = vpack.c.bf16 %v1345, %v1344
  %1350 = vst [vmem:[%s3] sm:$0xff] %v1346
  %1351 = vst [vmem:[%s3 + $0x8] sm:$0xff] %v1347
  %1352 = vst [vmem:[%s3 + $0x10] sm:$0xff] %v1348
  %1353 = vst [vmem:[%s3 + $0x18] sm:$0xff] %v1349
  // Predicated region
  $region14: #{f_forward.6} parent=0 // pred_check
    _
  $region15: #{f_forward.6} parent=0 // pred_check_branch
    %1355 = sbr.rel (0) target = $region17
  $region16: #{f_forward.6} parent=0 // pred_region
    _
  $region17: #{f_forward.6} parent=0 // pred_fallthru
    _
  // Predicated region
  $region18: #{f_forward.6} parent=0 // pred_check
    _
  $region19: #{f_forward.6} parent=0 // pred_check_branch
    %1357 = sbr.rel (0) target = $region21
  $region20: #{f_forward.6} parent=0 // pred_region
    _
  $region21: #{f_forward.6} parent=0 // pred_fallthru
    _

// kernel: f_forward.7
$region0: #{f_forward.7}
  #allocation0 [shape = 'u32[]', space=smem, size = 0x4, offset = 0x4, fixed_abs, tag = 'smem constant byte address 0x4 - core index']
  #allocation1 [shape = 'u32[72,128]{1,0:T(1,128)}', space=vmem, size = 0x9000, scoped, tag = 'internal scratch']
  %s0 = inlined_call_operand.vmem [shape: bf16[8,4096], index: 0, kind: input, shape index: {}]
  %s1 = inlined_call_operand.vmem [shape: bf16[4096,128], index: 1, kind: input, shape index: {}]
  %s2 = inlined_call_operand.vmem [shape: f32[1,128], index: 2, kind: input, shape index: {}]
  %s3 = inlined_call_operand.vmem [shape: f32[8,128], index: 3, kind: output, shape index: {}]
  %s4 = sld [smem:[#allocation0]]
  $region22: #{f_forward.7} parent=0
    _
  %s6 = ssub.s32 1, %s4
  %s7 = scalar_select 0, %s6, %s4
  // Predicated region
  $region2: #{f_forward.7} parent=0 // pred_check
    _
  $region3: #{f_forward.7} parent=0 // pred_check_branch
    %9 = sbr.rel (0) target = $region5
  $region4: #{f_forward.7} parent=0 // pred_region
    _
  $region5: #{f_forward.7} parent=0 // pred_fallthru
    _
  // Predicated region
  $region6: #{f_forward.7} parent=0 // pred_check
    _
  $region7: #{f_forward.7} parent=0 // pred_check_branch
    %11 = sbr.rel (0) target = $region9
  $region8: #{f_forward.7} parent=0 // pred_region
    _
  $region9: #{f_forward.7} parent=0 // pred_fallthru
    _
  // Predicated region
  $region10: #{f_forward.7} parent=0 // pred_check
    _
  $region11: #{f_forward.7} parent=0 // pred_check_branch
    %13 = sbr.rel (0) target = $region13
  $region12: #{f_forward.7} parent=0 // pred_region
    _
  $region13: #{f_forward.7} parent=0 // pred_fallthru
    _
  %v14 = vld [vmem:[%s0] sm:$0xff]
  %v15 = vld [vmem:[%s0 + $0x8] sm:$0xff]
  %v16 = vld [vmem:[%s0 + $0x10] sm:$0xff]
  %v17 = vld [vmem:[%s0 + $0x18] sm:$0xff]
  %v18 = vld [vmem:[%s0 + $0x20] sm:$0xff]
  %v19 = vld [vmem:[%s0 + $0x28] sm:$0xff]
  %v20 = vld [vmem:[%s0 + $0x30] sm:$0xff]
  %v21 = vld [vmem:[%s0 + $0x38] sm:$0xff]
  %v22 = vld [vmem:[%s0 + $0x40] sm:$0xff]
  %v23 = vld [vmem:[%s0 + $0x48] sm:$0xff]
  %v24 = vld [vmem:[%s0 + $0x50] sm:$0xff]
  %v25 = vld [vmem:[%s0 + $0x58] sm:$0xff]
  %v26 = vld [vmem:[%s0 + $0x60] sm:$0xff]
  %v27 = vld [vmem:[%s0 + $0x68] sm:$0xff]
  %v28 = vld [vmem:[%s0 + $0x70] sm:$0xff]
  %v29 = vld [vmem:[%s0 + $0x78] sm:$0xff]
  %v30 = vld [vmem:[%s1] sm:$0xf]
  %v31 = vld [vmem:[%s1 + $0x4] sm:$0xf]
  %v32 = vld [vmem:[%s1 + $0x8] sm:$0xf]
  %v33 = vld [vmem:[%s1 + $0xc] sm:$0xf]
  %v34 = vld [vmem:[%s1 + $0x10] sm:$0xf]
  %v35 = vld [vmem:[%s1 + $0x14] sm:$0xf]
  %v36 = vld [vmem:[%s1 + $0x18] sm:$0xf]
  %v37 = vld [vmem:[%s1 + $0x1c] sm:$0xf]
  %v38 = vld [vmem:[%s1 + $0x20] sm:$0xf]
  %v39 = vld [vmem:[%s1 + $0x24] sm:$0xf]
  %v40 = vld [vmem:[%s1 + $0x28] sm:$0xf]
  %v41 = vld [vmem:[%s1 + $0x2c] sm:$0xf]
  %v42 = vld [vmem:[%s1 + $0x30] sm:$0xf]
  %v43 = vld [vmem:[%s1 + $0x34] sm:$0xf]
  %v44 = vld [vmem:[%s1 + $0x38] sm:$0xf]
  %v45 = vld [vmem:[%s1 + $0x3c] sm:$0xf]
  %v46 = vld [vmem:[%s1 + $0x40] sm:$0xf]
  %v47 = vld [vmem:[%s1 + $0x44] sm:$0xf]
  %v48 = vld [vmem:[%s1 + $0x48] sm:$0xf]
  %v49 = vld [vmem:[%s1 + $0x4c] sm:$0xf]
  %v50 = vld [vmem:[%s1 + $0x50] sm:$0xf]
  %v51 = vld [vmem:[%s1 + $0x54] sm:$0xf]
  %v52 = vld [vmem:[%s1 + $0x58] sm:$0xf]
  %v53 = vld [vmem:[%s1 + $0x5c] sm:$0xf]
  %v54 = vld [vmem:[%s1 + $0x60] sm:$0xf]
  %v55 = vld [vmem:[%s1 + $0x64] sm:$0xf]
  %v56 = vld [vmem:[%s1 + $0x68] sm:$0xf]
  %v57 = vld [vmem:[%s1 + $0x6c] sm:$0xf]
  %v58 = vld [vmem:[%s1 + $0x70] sm:$0xf]
  %v59 = vld [vmem:[%s1 + $0x74] sm:$0xf]
  %v60 = vld [vmem:[%s1 + $0x78] sm:$0xf]
  %v61 = vld [vmem:[%s1 + $0x7c] sm:$0xf]
  %v62 = vld [vmem:[%s1 + $0x80] sm:$0xf]
  %v63 = vld [vmem:[%s1 + $0x84] sm:$0xf]
  %v64 = vld [vmem:[%s1 + $0x88] sm:$0xf]
  %v65 = vld [vmem:[%s1 + $0x8c] sm:$0xf]
  %v66 = vld [vmem:[%s1 + $0x90] sm:$0xf]
  %v67 = vld [vmem:[%s1 + $0x94] sm:$0xf]
  %v68 = vld [vmem:[%s1 + $0x98] sm:$0xf]
  %v69 = vld [vmem:[%s1 + $0x9c] sm:$0xf]
  %v70 = vld [vmem:[%s1 + $0xa0] sm:$0xf]
  %v71 = vld [vmem:[%s1 + $0xa4] sm:$0xf]
  %v72 = vld [vmem:[%s1 + $0xa8] sm:$0xf]
  %v73 = vld [vmem:[%s1 + $0xac] sm:$0xf]
  %v74 = vld [vmem:[%s1 + $0xb0] sm:$0xf]
  %v75 = vld [vmem:[%s1 + $0xb4] sm:$0xf]
  %v76 = vld [vmem:[%s1 + $0xb8] sm:$0xf]
  %v77 = vld [vmem:[%s1 + $0xbc] sm:$0xf]
  %v78 = vld [vmem:[%s1 + $0xc0] sm:$0xf]
  %v79 = vld [vmem:[%s1 + $0xc4] sm:$0xf]
  %v80 = vld [vmem:[%s1 + $0xc8] sm:$0xf]
  %v81 = vld [vmem:[%s1 + $0xcc] sm:$0xf]
  %v82 = vld [vmem:[%s1 + $0xd0] sm:$0xf]
  %v83 = vld [vmem:[%s1 + $0xd4] sm:$0xf]
  %v84 = vld [vmem:[%s1 + $0xd8] sm:$0xf]
  %v85 = vld [vmem:[%s1 + $0xdc] sm:$0xf]
  %v86 = vld [vmem:[%s1 + $0xe0] sm:$0xf]
  %v87 = vld [vmem:[%s1 + $0xe4] sm:$0xf]
  %v88 = vld [vmem:[%s1 + $0xe8] sm:$0xf]
  %v89 = vld [vmem:[%s1 + $0xec] sm:$0xf]
  %v90 = vld [vmem:[%s1 + $0xf0] sm:$0xf]
  %v91 = vld [vmem:[%s1 + $0xf4] sm:$0xf]
  %v92 = vld [vmem:[%s1 + $0xf8] sm:$0xf]
  %v93 = vld [vmem:[%s1 + $0xfc] sm:$0xf]
  %v94 = vld [vmem:[%s1 + $0x100] sm:$0xf]
  %v95 = vld [vmem:[%s1 + $0x104] sm:$0xf]
  %v96 = vld [vmem:[%s1 + $0x108] sm:$0xf]
  %v97 = vld [vmem:[%s1 + $0x10c] sm:$0xf]
  %v98 = vld [vmem:[%s1 + $0x110] sm:$0xf]
  %v99 = vld [vmem:[%s1 + $0x114] sm:$0xf]
  %v100 = vld [vmem:[%s1 + $0x118] sm:$0xf]
  %v101 = vld [vmem:[%s1 + $0x11c] sm:$0xf]
  %v102 = vld [vmem:[%s1 + $0x120] sm:$0xf]
  %v103 = vld [vmem:[%s1 + $0x124] sm:$0xf]
  %v104 = vld [vmem:[%s1 + $0x128] sm:$0xf]
  %v105 = vld [vmem:[%s1 + $0x12c] sm:$0xf]
  %v106 = vld [vmem:[%s1 + $0x130] sm:$0xf]
  %v107 = vld [vmem:[%s1 + $0x134] sm:$0xf]
  %v108 = vld [vmem:[%s1 + $0x138] sm:$0xf]
  %v109 = vld [vmem:[%s1 + $0x13c] sm:$0xf]
  %v110 = vld [vmem:[%s1 + $0x140] sm:$0xf]
  %v111 = vld [vmem:[%s1 + $0x144] sm:$0xf]
  %v112 = vld [vmem:[%s1 + $0x148] sm:$0xf]
  %v113 = vld [vmem:[%s1 + $0x14c] sm:$0xf]
  %v114 = vld [vmem:[%s1 + $0x150] sm:$0xf]
  %v115 = vld [vmem:[%s1 + $0x154] sm:$0xf]
  %v116 = vld [vmem:[%s1 + $0x158] sm:$0xf]
  %v117 = vld [vmem:[%s1 + $0x15c] sm:$0xf]
  %v118 = vld [vmem:[%s1 + $0x160] sm:$0xf]
  %v119 = vld [vmem:[%s1 + $0x164] sm:$0xf]
  %v120 = vld [vmem:[%s1 + $0x168] sm:$0xf]
  %v121 = vld [vmem:[%s1 + $0x16c] sm:$0xf]
  %v122 = vld [vmem:[%s1 + $0x170] sm:$0xf]
  %v123 = vld [vmem:[%s1 + $0x174] sm:$0xf]
  %v124 = vld [vmem:[%s1 + $0x178] sm:$0xf]
  %v125 = vld [vmem:[%s1 + $0x17c] sm:$0xf]
  %v126 = vld [vmem:[%s1 + $0x180] sm:$0xf]
  %v127 = vld [vmem:[%s1 + $0x184] sm:$0xf]
  %v128 = vld [vmem:[%s1 + $0x188] sm:$0xf]
  %v129 = vld [vmem:[%s1 + $0x18c] sm:$0xf]
  %v130 = vld [vmem:[%s1 + $0x190] sm:$0xf]
  %v131 = vld [vmem:[%s1 + $0x194] sm:$0xf]
  %v132 = vld [vmem:[%s1 + $0x198] sm:$0xf]
  %v133 = vld [vmem:[%s1 + $0x19c] sm:$0xf]
  %v134 = vld [vmem:[%s1 + $0x1a0] sm:$0xf]
  %v135 = vld [vmem:[%s1 + $0x1a4] sm:$0xf]
  %v136 = vld [vmem:[%s1 + $0x1a8] sm:$0xf]
  %v137 = vld [vmem:[%s1 + $0x1ac] sm:$0xf]
  %v138 = vld [vmem:[%s1 + $0x1b0] sm:$0xf]
  %v139 = vld [vmem:[%s1 + $0x1b4] sm:$0xf]
  %v140 = vld [vmem:[%s1 + $0x1b8] sm:$0xf]
  %v141 = vld [vmem:[%s1 + $0x1bc] sm:$0xf]
  %v142 = vld [vmem:[%s1 + $0x1c0] sm:$0xf]
  %v143 = vld [vmem:[%s1 + $0x1c4] sm:$0xf]
  %v144 = vld [vmem:[%s1 + $0x1c8] sm:$0xf]
  %v145 = vld [vmem:[%s1 + $0x1cc] sm:$0xf]
  %v146 = vld [vmem:[%s1 + $0x1d0] sm:$0xf]
  %v147 = vld [vmem:[%s1 + $0x1d4] sm:$0xf]
  %v148 = vld [vmem:[%s1 + $0x1d8] sm:$0xf]
  %v149 = vld [vmem:[%s1 + $0x1dc] sm:$0xf]
  %v150 = vld [vmem:[%s1 + $0x1e0] sm:$0xf]
  %v151 = vld [vmem:[%s1 + $0x1e4] sm:$0xf]
  %v152 = vld [vmem:[%s1 + $0x1e8] sm:$0xf]
  %v153 = vld [vmem:[%s1 + $0x1ec] sm:$0xf]
  %v154 = vld [vmem:[%s1 + $0x1f0] sm:$0xf]
  %v155 = vld [vmem:[%s1 + $0x1f4] sm:$0xf]
  %v156 = vld [vmem:[%s1 + $0x1f8] sm:$0xf]
  %v157 = vld [vmem:[%s1 + $0x1fc] sm:$0xf]
  %v158 = vld [vmem:[%s1 + $0x200] sm:$0xf]
  %v159 = vld [vmem:[%s1 + $0x204] sm:$0xf]
  %v160 = vld [vmem:[%s1 + $0x208] sm:$0xf]
  %v161 = vld [vmem:[%s1 + $0x20c] sm:$0xf]
  %v162 = vld [vmem:[%s1 + $0x210] sm:$0xf]
  %v163 = vld [vmem:[%s1 + $0x214] sm:$0xf]
  %v164 = vld [vmem:[%s1 + $0x218] sm:$0xf]
  %v165 = vld [vmem:[%s1 + $0x21c] sm:$0xf]
  %v166 = vld [vmem:[%s1 + $0x220] sm:$0xf]
  %v167 = vld [vmem:[%s1 + $0x224] sm:$0xf]
  %v168 = vld [vmem:[%s1 + $0x228] sm:$0xf]
  %v169 = vld [vmem:[%s1 + $0x22c] sm:$0xf]
  %v170 = vld [vmem:[%s1 + $0x230] sm:$0xf]
  %v171 = vld [vmem:[%s1 + $0x234] sm:$0xf]
  %v172 = vld [vmem:[%s1 + $0x238] sm:$0xf]
  %v173 = vld [vmem:[%s1 + $0x23c] sm:$0xf]
  %v174 = vld [vmem:[%s1 + $0x240] sm:$0xf]
  %v175 = vld [vmem:[%s1 + $0x244] sm:$0xf]
  %v176 = vld [vmem:[%s1 + $0x248] sm:$0xf]
  %v177 = vld [vmem:[%s1 + $0x24c] sm:$0xf]
  %v178 = vld [vmem:[%s1 + $0x250] sm:$0xf]
  %v179 = vld [vmem:[%s1 + $0x254] sm:$0xf]
  %v180 = vld [vmem:[%s1 + $0x258] sm:$0xf]
  %v181 = vld [vmem:[%s1 + $0x25c] sm:$0xf]
  %v182 = vld [vmem:[%s1 + $0x260] sm:$0xf]
  %v183 = vld [vmem:[%s1 + $0x264] sm:$0xf]
  %v184 = vld [vmem:[%s1 + $0x268] sm:$0xf]
  %v185 = vld [vmem:[%s1 + $0x26c] sm:$0xf]
  %v186 = vld [vmem:[%s1 + $0x270] sm:$0xf]
  %v187 = vld [vmem:[%s1 + $0x274] sm:$0xf]
  %v188 = vld [vmem:[%s1 + $0x278] sm:$0xf]
  %v189 = vld [vmem:[%s1 + $0x27c] sm:$0xf]
  %v190 = vld [vmem:[%s1 + $0x280] sm:$0xf]
  %v191 = vld [vmem:[%s1 + $0x284] sm:$0xf]
  %v192 = vld [vmem:[%s1 + $0x288] sm:$0xf]
  %v193 = vld [vmem:[%s1 + $0x28c] sm:$0xf]
  %v194 = vld [vmem:[%s1 + $0x290] sm:$0xf]
  %v195 = vld [vmem:[%s1 + $0x294] sm:$0xf]
  %v196 = vld [vmem:[%s1 + $0x298] sm:$0xf]
  %v197 = vld [vmem:[%s1 + $0x29c] sm:$0xf]
  %v198 = vld [vmem:[%s1 + $0x2a0] sm:$0xf]
  %v199 = vld [vmem:[%s1 + $0x2a4] sm:$0xf]
  %v200 = vld [vmem:[%s1 + $0x2a8] sm:$0xf]
  %v201 = vld [vmem:[%s1 + $0x2ac] sm:$0xf]
  %v202 = vld [vmem:[%s1 + $0x2b0] sm:$0xf]
  %v203 = vld [vmem:[%s1 + $0x2b4] sm:$0xf]
  %v204 = vld [vmem:[%s1 + $0x2b8] sm:$0xf]
  %v205 = vld [vmem:[%s1 + $0x2bc] sm:$0xf]
  %v206 = vld [vmem:[%s1 + $0x2c0] sm:$0xf]
  %v207 = vld [vmem:[%s1 + $0x2c4] sm:$0xf]
  %v208 = vld [vmem:[%s1 + $0x2c8] sm:$0xf]
  %v209 = vld [vmem:[%s1 + $0x2cc] sm:$0xf]
  %v210 = vld [vmem:[%s1 + $0x2d0] sm:$0xf]
  %v211 = vld [vmem:[%s1 + $0x2d4] sm:$0xf]
  %v212 = vld [vmem:[%s1 + $0x2d8] sm:$0xf]
  %v213 = vld [vmem:[%s1 + $0x2dc] sm:$0xf]
  %v214 = vld [vmem:[%s1 + $0x2e0] sm:$0xf]
  %v215 = vld [vmem:[%s1 + $0x2e4] sm:$0xf]
  %v216 = vld [vmem:[%s1 + $0x2e8] sm:$0xf]
  %v217 = vld [vmem:[%s1 + $0x2ec] sm:$0xf]
  %v218 = vld [vmem:[%s1 + $0x2f0] sm:$0xf]
  %v219 = vld [vmem:[%s1 + $0x2f4] sm:$0xf]
  %v220 = vld [vmem:[%s1 + $0x2f8] sm:$0xf]
  %v221 = vld [vmem:[%s1 + $0x2fc] sm:$0xf]
  %v222 = vld [vmem:[%s1 + $0x300] sm:$0xf]
  %v223 = vld [vmem:[%s1 + $0x304] sm:$0xf]
  %v224 = vld [vmem:[%s1 + $0x308] sm:$0xf]
  %v225 = vld [vmem:[%s1 + $0x30c] sm:$0xf]
  %v226 = vld [vmem:[%s1 + $0x310] sm:$0xf]
  %v227 = vld [vmem:[%s1 + $0x314] sm:$0xf]
  %v228 = vld [vmem:[%s1 + $0x318] sm:$0xf]
  %v229 = vld [vmem:[%s1 + $0x31c] sm:$0xf]
  %v230 = vld [vmem:[%s1 + $0x320] sm:$0xf]
  %v231 = vld [vmem:[%s1 + $0x324] sm:$0xf]
  %v232 = vld [vmem:[%s1 + $0x328] sm:$0xf]
  %v233 = vld [vmem:[%s1 + $0x32c] sm:$0xf]
  %v234 = vld [vmem:[%s1 + $0x330] sm:$0xf]
  %v235 = vld [vmem:[%s1 + $0x334] sm:$0xf]
  %v236 = vld [vmem:[%s1 + $0x338] sm:$0xf]
  %v237 = vld [vmem:[%s1 + $0x33c] sm:$0xf]
  %v238 = vld [vmem:[%s1 + $0x340] sm:$0xf]
  %v239 = vld [vmem:[%s1 + $0x344] sm:$0xf]
  %v240 = vld [vmem:[%s1 + $0x348] sm:$0xf]
  %v241 = vld [vmem:[%s1 + $0x34c] sm:$0xf]
  %v242 = vld [vmem:[%s1 + $0x350] sm:$0xf]
  %v243 = vld [vmem:[%s1 + $0x354] sm:$0xf]
  %v244 = vld [vmem:[%s1 + $0x358] sm:$0xf]
  %v245 = vld [vmem:[%s1 + $0x35c] sm:$0xf]
  %v246 = vld [vmem:[%s1 + $0x360] sm:$0xf]
  %v247 = vld [vmem:[%s1 + $0x364] sm:$0xf]
  %v248 = vld [vmem:[%s1 + $0x368] sm:$0xf]
  %v249 = vld [vmem:[%s1 + $0x36c] sm:$0xf]
  %v250 = vld [vmem:[%s1 + $0x370] sm:$0xf]
  %v251 = vld [vmem:[%s1 + $0x374] sm:$0xf]
  %v252 = vld [vmem:[%s1 + $0x378] sm:$0xf]
  %v253 = vld [vmem:[%s1 + $0x37c] sm:$0xf]
  %v254 = vld [vmem:[%s1 + $0x380] sm:$0xf]
  %v255 = vld [vmem:[%s1 + $0x384] sm:$0xf]
  %v256 = vld [vmem:[%s1 + $0x388] sm:$0xf]
  %v257 = vld [vmem:[%s1 + $0x38c] sm:$0xf]
  %v258 = vld [vmem:[%s1 + $0x390] sm:$0xf]
  %v259 = vld [vmem:[%s1 + $0x394] sm:$0xf]
  %v260 = vld [vmem:[%s1 + $0x398] sm:$0xf]
  %v261 = vld [vmem:[%s1 + $0x39c] sm:$0xf]
  %v262 = vld [vmem:[%s1 + $0x3a0] sm:$0xf]
  %v263 = vld [vmem:[%s1 + $0x3a4] sm:$0xf]
  %v264 = vld [vmem:[%s1 + $0x3a8] sm:$0xf]
  %v265 = vld [vmem:[%s1 + $0x3ac] sm:$0xf]
  %v266 = vld [vmem:[%s1 + $0x3b0] sm:$0xf]
  %v267 = vld [vmem:[%s1 + $0x3b4] sm:$0xf]
  %v268 = vld [vmem:[%s1 + $0x3b8] sm:$0xf]
  %v269 = vld [vmem:[%s1 + $0x3bc] sm:$0xf]
  %v270 = vld [vmem:[%s1 + $0x3c0] sm:$0xf]
  %v271 = vld [vmem:[%s1 + $0x3c4] sm:$0xf]
  %v272 = vld [vmem:[%s1 + $0x3c8] sm:$0xf]
  %v273 = vld [vmem:[%s1 + $0x3cc] sm:$0xf]
  %v274 = vld [vmem:[%s1 + $0x3d0] sm:$0xf]
  %v275 = vld [vmem:[%s1 + $0x3d4] sm:$0xf]
  %v276 = vld [vmem:[%s1 + $0x3d8] sm:$0xf]
  %v277 = vld [vmem:[%s1 + $0x3dc] sm:$0xf]
  %v278 = vld [vmem:[%s1 + $0x3e0] sm:$0xf]
  %v279 = vld [vmem:[%s1 + $0x3e4] sm:$0xf]
  %v280 = vld [vmem:[%s1 + $0x3e8] sm:$0xf]
  %v281 = vld [vmem:[%s1 + $0x3ec] sm:$0xf]
  %v282 = vld [vmem:[%s1 + $0x3f0] sm:$0xf]
  %v283 = vld [vmem:[%s1 + $0x3f4] sm:$0xf]
  %v284 = vld [vmem:[%s1 + $0x3f8] sm:$0xf]
  %v285 = vld [vmem:[%s1 + $0x3fc] sm:$0xf]
  %v286 = vld [vmem:[%s1 + $0x400] sm:$0xf]
  %v287 = vld [vmem:[%s1 + $0x404] sm:$0xf]
  %v288 = vld [vmem:[%s1 + $0x408] sm:$0xf]
  %v289 = vld [vmem:[%s1 + $0x40c] sm:$0xf]
  %v290 = vld [vmem:[%s1 + $0x410] sm:$0xf]
  %v291 = vld [vmem:[%s1 + $0x414] sm:$0xf]
  %v292 = vld [vmem:[%s1 + $0x418] sm:$0xf]
  %v293 = vld [vmem:[%s1 + $0x41c] sm:$0xf]
  %v294 = vld [vmem:[%s1 + $0x420] sm:$0xf]
  %v295 = vld [vmem:[%s1 + $0x424] sm:$0xf]
  %v296 = vld [vmem:[%s1 + $0x428] sm:$0xf]
  %v297 = vld [vmem:[%s1 + $0x42c] sm:$0xf]
  %v298 = vld [vmem:[%s1 + $0x430] sm:$0xf]
  %v299 = vld [vmem:[%s1 + $0x434] sm:$0xf]
  %v300 = vld [vmem:[%s1 + $0x438] sm:$0xf]
  %v301 = vld [vmem:[%s1 + $0x43c] sm:$0xf]
  %v302 = vld [vmem:[%s1 + $0x440] sm:$0xf]
  %v303 = vld [vmem:[%s1 + $0x444] sm:$0xf]
  %v304 = vld [vmem:[%s1 + $0x448] sm:$0xf]
  %v305 = vld [vmem:[%s1 + $0x44c] sm:$0xf]
  %v306 = vld [vmem:[%s1 + $0x450] sm:$0xf]
  %v307 = vld [vmem:[%s1 + $0x454] sm:$0xf]
  %v308 = vld [vmem:[%s1 + $0x458] sm:$0xf]
  %v309 = vld [vmem:[%s1 + $0x45c] sm:$0xf]
  %v310 = vld [vmem:[%s1 + $0x460] sm:$0xf]
  %v311 = vld [vmem:[%s1 + $0x464] sm:$0xf]
  %v312 = vld [vmem:[%s1 + $0x468] sm:$0xf]
  %v313 = vld [vmem:[%s1 + $0x46c] sm:$0xf]
  %v314 = vld [vmem:[%s1 + $0x470] sm:$0xf]
  %v315 = vld [vmem:[%s1 + $0x474] sm:$0xf]
  %v316 = vld [vmem:[%s1 + $0x478] sm:$0xf]
  %v317 = vld [vmem:[%s1 + $0x47c] sm:$0xf]
  %v318 = vld [vmem:[%s1 + $0x480] sm:$0xf]
  %v319 = vld [vmem:[%s1 + $0x484] sm:$0xf]
  %v320 = vld [vmem:[%s1 + $0x488] sm:$0xf]
  %v321 = vld [vmem:[%s1 + $0x48c] sm:$0xf]
  %v322 = vld [vmem:[%s1 + $0x490] sm:$0xf]
  %v323 = vld [vmem:[%s1 + $0x494] sm:$0xf]
  %v324 = vld [vmem:[%s1 + $0x498] sm:$0xf]
  %v325 = vld [vmem:[%s1 + $0x49c] sm:$0xf]
  %v326 = vld [vmem:[%s1 + $0x4a0] sm:$0xf]
  %v327 = vld [vmem:[%s1 + $0x4a4] sm:$0xf]
  %v328 = vld [vmem:[%s1 + $0x4a8] sm:$0xf]
  %v329 = vld [vmem:[%s1 + $0x4ac] sm:$0xf]
  %v330 = vld [vmem:[%s1 + $0x4b0] sm:$0xf]
  %v331 = vld [vmem:[%s1 + $0x4b4] sm:$0xf]
  %v332 = vld [vmem:[%s1 + $0x4b8] sm:$0xf]
  %v333 = vld [vmem:[%s1 + $0x4bc] sm:$0xf]
  %v334 = vld [vmem:[%s1 + $0x4c0] sm:$0xf]
  %v335 = vld [vmem:[%s1 + $0x4c4] sm:$0xf]
  %v336 = vld [vmem:[%s1 + $0x4c8] sm:$0xf]
  %v337 = vld [vmem:[%s1 + $0x4cc] sm:$0xf]
  %v338 = vld [vmem:[%s1 + $0x4d0] sm:$0xf]
  %v339 = vld [vmem:[%s1 + $0x4d4] sm:$0xf]
  %v340 = vld [vmem:[%s1 + $0x4d8] sm:$0xf]
  %v341 = vld [vmem:[%s1 + $0x4dc] sm:$0xf]
  %v342 = vld [vmem:[%s1 + $0x4e0] sm:$0xf]
  %v343 = vld [vmem:[%s1 + $0x4e4] sm:$0xf]
  %v344 = vld [vmem:[%s1 + $0x4e8] sm:$0xf]
  %v345 = vld [vmem:[%s1 + $0x4ec] sm:$0xf]
  %v346 = vld [vmem:[%s1 + $0x4f0] sm:$0xf]
  %v347 = vld [vmem:[%s1 + $0x4f4] sm:$0xf]
  %v348 = vld [vmem:[%s1 + $0x4f8] sm:$0xf]
  %v349 = vld [vmem:[%s1 + $0x4fc] sm:$0xf]
  %v350 = vld [vmem:[%s1 + $0x500] sm:$0xf]
  %v351 = vld [vmem:[%s1 + $0x504] sm:$0xf]
  %v352 = vld [vmem:[%s1 + $0x508] sm:$0xf]
  %v353 = vld [vmem:[%s1 + $0x50c] sm:$0xf]
  %v354 = vld [vmem:[%s1 + $0x510] sm:$0xf]
  %v355 = vld [vmem:[%s1 + $0x514] sm:$0xf]
  %v356 = vld [vmem:[%s1 + $0x518] sm:$0xf]
  %v357 = vld [vmem:[%s1 + $0x51c] sm:$0xf]
  %v358 = vld [vmem:[%s1 + $0x520] sm:$0xf]
  %v359 = vld [vmem:[%s1 + $0x524] sm:$0xf]
  %v360 = vld [vmem:[%s1 + $0x528] sm:$0xf]
  %v361 = vld [vmem:[%s1 + $0x52c] sm:$0xf]
  %v362 = vld [vmem:[%s1 + $0x530] sm:$0xf]
  %v363 = vld [vmem:[%s1 + $0x534] sm:$0xf]
  %v364 = vld [vmem:[%s1 + $0x538] sm:$0xf]
  %v365 = vld [vmem:[%s1 + $0x53c] sm:$0xf]
  %v366 = vld [vmem:[%s1 + $0x540] sm:$0xf]
  %v367 = vld [vmem:[%s1 + $0x544] sm:$0xf]
  %v368 = vld [vmem:[%s1 + $0x548] sm:$0xf]
  %v369 = vld [vmem:[%s1 + $0x54c] sm:$0xf]
  %v370 = vld [vmem:[%s1 + $0x550] sm:$0xf]
  %v371 = vld [vmem:[%s1 + $0x554] sm:$0xf]
  %v372 = vld [vmem:[%s1 + $0x558] sm:$0xf]
  %v373 = vld [vmem:[%s1 + $0x55c] sm:$0xf]
  %v374 = vld [vmem:[%s1 + $0x560] sm:$0xf]
  %v375 = vld [vmem:[%s1 + $0x564] sm:$0xf]
  %v376 = vld [vmem:[%s1 + $0x568] sm:$0xf]
  %v377 = vld [vmem:[%s1 + $0x56c] sm:$0xf]
  %v378 = vld [vmem:[%s1 + $0x570] sm:$0xf]
  %v379 = vld [vmem:[%s1 + $0x574] sm:$0xf]
  %v380 = vld [vmem:[%s1 + $0x578] sm:$0xf]
  %v381 = vld [vmem:[%s1 + $0x57c] sm:$0xf]
  %v382 = vld [vmem:[%s1 + $0x580] sm:$0xf]
  %v383 = vld [vmem:[%s1 + $0x584] sm:$0xf]
  %v384 = vld [vmem:[%s1 + $0x588] sm:$0xf]
  %v385 = vld [vmem:[%s1 + $0x58c] sm:$0xf]
  %v386 = vld [vmem:[%s1 + $0x590] sm:$0xf]
  %v387 = vld [vmem:[%s1 + $0x594] sm:$0xf]
  %v388 = vld [vmem:[%s1 + $0x598] sm:$0xf]
  %v389 = vld [vmem:[%s1 + $0x59c] sm:$0xf]
  %v390 = vld [vmem:[%s1 + $0x5a0] sm:$0xf]
  %v391 = vld [vmem:[%s1 + $0x5a4] sm:$0xf]
  %v392 = vld [vmem:[%s1 + $0x5a8] sm:$0xf]
  %v393 = vld [vmem:[%s1 + $0x5ac] sm:$0xf]
  %v394 = vld [vmem:[%s1 + $0x5b0] sm:$0xf]
  %v395 = vld [vmem:[%s1 + $0x5b4] sm:$0xf]
  %v396 = vld [vmem:[%s1 + $0x5b8] sm:$0xf]
  %v397 = vld [vmem:[%s1 + $0x5bc] sm:$0xf]
  %v398 = vld [vmem:[%s1 + $0x5c0] sm:$0xf]
  %v399 = vld [vmem:[%s1 + $0x5c4] sm:$0xf]
  %v400 = vld [vmem:[%s1 + $0x5c8] sm:$0xf]
  %v401 = vld [vmem:[%s1 + $0x5cc] sm:$0xf]
  %v402 = vld [vmem:[%s1 + $0x5d0] sm:$0xf]
  %v403 = vld [vmem:[%s1 + $0x5d4] sm:$0xf]
  %v404 = vld [vmem:[%s1 + $0x5d8] sm:$0xf]
  %v405 = vld [vmem:[%s1 + $0x5dc] sm:$0xf]
  %v406 = vld [vmem:[%s1 + $0x5e0] sm:$0xf]
  %v407 = vld [vmem:[%s1 + $0x5e4] sm:$0xf]
  %v408 = vld [vmem:[%s1 + $0x5e8] sm:$0xf]
  %v409 = vld [vmem:[%s1 + $0x5ec] sm:$0xf]
  %v410 = vld [vmem:[%s1 + $0x5f0] sm:$0xf]
  %v411 = vld [vmem:[%s1 + $0x5f4] sm:$0xf]
  %v412 = vld [vmem:[%s1 + $0x5f8] sm:$0xf]
  %v413 = vld [vmem:[%s1 + $0x5fc] sm:$0xf]
  %v414 = vld [vmem:[%s1 + $0x600] sm:$0xf]
  %v415 = vld [vmem:[%s1 + $0x604] sm:$0xf]
  %v416 = vld [vmem:[%s1 + $0x608] sm:$0xf]
  %v417 = vld [vmem:[%s1 + $0x60c] sm:$0xf]
  %v418 = vld [vmem:[%s1 + $0x610] sm:$0xf]
  %v419 = vld [vmem:[%s1 + $0x614] sm:$0xf]
  %v420 = vld [vmem:[%s1 + $0x618] sm:$0xf]
  %v421 = vld [vmem:[%s1 + $0x61c] sm:$0xf]
  %v422 = vld [vmem:[%s1 + $0x620] sm:$0xf]
  %v423 = vld [vmem:[%s1 + $0x624] sm:$0xf]
  %v424 = vld [vmem:[%s1 + $0x628] sm:$0xf]
  %v425 = vld [vmem:[%s1 + $0x62c] sm:$0xf]
  %v426 = vld [vmem:[%s1 + $0x630] sm:$0xf]
  %v427 = vld [vmem:[%s1 + $0x634] sm:$0xf]
  %v428 = vld [vmem:[%s1 + $0x638] sm:$0xf]
  %v429 = vld [vmem:[%s1 + $0x63c] sm:$0xf]
  %v430 = vld [vmem:[%s1 + $0x640] sm:$0xf]
  %v431 = vld [vmem:[%s1 + $0x644] sm:$0xf]
  %v432 = vld [vmem:[%s1 + $0x648] sm:$0xf]
  %v433 = vld [vmem:[%s1 + $0x64c] sm:$0xf]
  %v434 = vld [vmem:[%s1 + $0x650] sm:$0xf]
  %v435 = vld [vmem:[%s1 + $0x654] sm:$0xf]
  %v436 = vld [vmem:[%s1 + $0x658] sm:$0xf]
  %v437 = vld [vmem:[%s1 + $0x65c] sm:$0xf]
  %v438 = vld [vmem:[%s1 + $0x660] sm:$0xf]
  %v439 = vld [vmem:[%s1 + $0x664] sm:$0xf]
  %v440 = vld [vmem:[%s1 + $0x668] sm:$0xf]
  %v441 = vld [vmem:[%s1 + $0x66c] sm:$0xf]
  %v442 = vld [vmem:[%s1 + $0x670] sm:$0xf]
  %v443 = vld [vmem:[%s1 + $0x674] sm:$0xf]
  %v444 = vld [vmem:[%s1 + $0x678] sm:$0xf]
  %v445 = vld [vmem:[%s1 + $0x67c] sm:$0xf]
  %v446 = vld [vmem:[%s1 + $0x680] sm:$0xf]
  %v447 = vld [vmem:[%s1 + $0x684] sm:$0xf]
  %v448 = vld [vmem:[%s1 + $0x688] sm:$0xf]
  %v449 = vld [vmem:[%s1 + $0x68c] sm:$0xf]
  %v450 = vld [vmem:[%s1 + $0x690] sm:$0xf]
  %v451 = vld [vmem:[%s1 + $0x694] sm:$0xf]
  %v452 = vld [vmem:[%s1 + $0x698] sm:$0xf]
  %v453 = vld [vmem:[%s1 + $0x69c] sm:$0xf]
  %v454 = vld [vmem:[%s1 + $0x6a0] sm:$0xf]
  %v455 = vld [vmem:[%s1 + $0x6a4] sm:$0xf]
  %v456 = vld [vmem:[%s1 + $0x6a8] sm:$0xf]
  %v457 = vld [vmem:[%s1 + $0x6ac] sm:$0xf]
  %v458 = vld [vmem:[%s1 + $0x6b0] sm:$0xf]
  %v459 = vld [vmem:[%s1 + $0x6b4] sm:$0xf]
  %v460 = vld [vmem:[%s1 + $0x6b8] sm:$0xf]
  %v461 = vld [vmem:[%s1 + $0x6bc] sm:$0xf]
  %v462 = vld [vmem:[%s1 + $0x6c0] sm:$0xf]
  %v463 = vld [vmem:[%s1 + $0x6c4] sm:$0xf]
  %v464 = vld [vmem:[%s1 + $0x6c8] sm:$0xf]
  %v465 = vld [vmem:[%s1 + $0x6cc] sm:$0xf]
  %v466 = vld [vmem:[%s1 + $0x6d0] sm:$0xf]
  %v467 = vld [vmem:[%s1 + $0x6d4] sm:$0xf]
  %v468 = vld [vmem:[%s1 + $0x6d8] sm:$0xf]
  %v469 = vld [vmem:[%s1 + $0x6dc] sm:$0xf]
  %v470 = vld [vmem:[%s1 + $0x6e0] sm:$0xf]
  %v471 = vld [vmem:[%s1 + $0x6e4] sm:$0xf]
  %v472 = vld [vmem:[%s1 + $0x6e8] sm:$0xf]
  %v473 = vld [vmem:[%s1 + $0x6ec] sm:$0xf]
  %v474 = vld [vmem:[%s1 + $0x6f0] sm:$0xf]
  %v475 = vld [vmem:[%s1 + $0x6f4] sm:$0xf]
  %v476 = vld [vmem:[%s1 + $0x6f8] sm:$0xf]
  %v477 = vld [vmem:[%s1 + $0x6fc] sm:$0xf]
  %v478 = vld [vmem:[%s1 + $0x700] sm:$0xf]
  %v479 = vld [vmem:[%s1 + $0x704] sm:$0xf]
  %v480 = vld [vmem:[%s1 + $0x708] sm:$0xf]
  %v481 = vld [vmem:[%s1 + $0x70c] sm:$0xf]
  %v482 = vld [vmem:[%s1 + $0x710] sm:$0xf]
  %v483 = vld [vmem:[%s1 + $0x714] sm:$0xf]
  %v484 = vld [vmem:[%s1 + $0x718] sm:$0xf]
  %v485 = vld [vmem:[%s1 + $0x71c] sm:$0xf]
  %v486 = vld [vmem:[%s1 + $0x720] sm:$0xf]
  %v487 = vld [vmem:[%s1 + $0x724] sm:$0xf]
  %v488 = vld [vmem:[%s1 + $0x728] sm:$0xf]
  %v489 = vld [vmem:[%s1 + $0x72c] sm:$0xf]
  %v490 = vld [vmem:[%s1 + $0x730] sm:$0xf]
  %v491 = vld [vmem:[%s1 + $0x734] sm:$0xf]
  %v492 = vld [vmem:[%s1 + $0x738] sm:$0xf]
  %v493 = vld [vmem:[%s1 + $0x73c] sm:$0xf]
  %v494 = vld [vmem:[%s1 + $0x740] sm:$0xf]
  %v495 = vld [vmem:[%s1 + $0x744] sm:$0xf]
  %v496 = vld [vmem:[%s1 + $0x748] sm:$0xf]
  %v497 = vld [vmem:[%s1 + $0x74c] sm:$0xf]
  %v498 = vld [vmem:[%s1 + $0x750] sm:$0xf]
  %v499 = vld [vmem:[%s1 + $0x754] sm:$0xf]
  %v500 = vld [vmem:[%s1 + $0x758] sm:$0xf]
  %v501 = vld [vmem:[%s1 + $0x75c] sm:$0xf]
  %v502 = vld [vmem:[%s1 + $0x760] sm:$0xf]
  %v503 = vld [vmem:[%s1 + $0x764] sm:$0xf]
  %v504 = vld [vmem:[%s1 + $0x768] sm:$0xf]
  %v505 = vld [vmem:[%s1 + $0x76c] sm:$0xf]
  %v506 = vld [vmem:[%s1 + $0x770] sm:$0xf]
  %v507 = vld [vmem:[%s1 + $0x774] sm:$0xf]
  %v508 = vld [vmem:[%s1 + $0x778] sm:$0xf]
  %v509 = vld [vmem:[%s1 + $0x77c] sm:$0xf]
  %v510 = vld [vmem:[%s1 + $0x780] sm:$0xf]
  %v511 = vld [vmem:[%s1 + $0x784] sm:$0xf]
  %v512 = vld [vmem:[%s1 + $0x788] sm:$0xf]
  %v513 = vld [vmem:[%s1 + $0x78c] sm:$0xf]
  %v514 = vld [vmem:[%s1 + $0x790] sm:$0xf]
  %v515 = vld [vmem:[%s1 + $0x794] sm:$0xf]
  %v516 = vld [vmem:[%s1 + $0x798] sm:$0xf]
  %v517 = vld [vmem:[%s1 + $0x79c] sm:$0xf]
  %v518 = vld [vmem:[%s1 + $0x7a0] sm:$0xf]
  %v519 = vld [vmem:[%s1 + $0x7a4] sm:$0xf]
  %v520 = vld [vmem:[%s1 + $0x7a8] sm:$0xf]
  %v521 = vld [vmem:[%s1 + $0x7ac] sm:$0xf]
  %v522 = vld [vmem:[%s1 + $0x7b0] sm:$0xf]
  %v523 = vld [vmem:[%s1 + $0x7b4] sm:$0xf]
  %v524 = vld [vmem:[%s1 + $0x7b8] sm:$0xf]
  %v525 = vld [vmem:[%s1 + $0x7bc] sm:$0xf]
  %v526 = vld [vmem:[%s1 + $0x7c0] sm:$0xf]
  %v527 = vld [vmem:[%s1 + $0x7c4] sm:$0xf]
  %v528 = vld [vmem:[%s1 + $0x7c8] sm:$0xf]
  %v529 = vld [vmem:[%s1 + $0x7cc] sm:$0xf]
  %v530 = vld [vmem:[%s1 + $0x7d0] sm:$0xf]
  %v531 = vld [vmem:[%s1 + $0x7d4] sm:$0xf]
  %v532 = vld [vmem:[%s1 + $0x7d8] sm:$0xf]
  %v533 = vld [vmem:[%s1 + $0x7dc] sm:$0xf]
  %v534 = vld [vmem:[%s1 + $0x7e0] sm:$0xf]
  %v535 = vld [vmem:[%s1 + $0x7e4] sm:$0xf]
  %v536 = vld [vmem:[%s1 + $0x7e8] sm:$0xf]
  %v537 = vld [vmem:[%s1 + $0x7ec] sm:$0xf]
  %v538 = vld [vmem:[%s1 + $0x7f0] sm:$0xf]
  %v539 = vld [vmem:[%s1 + $0x7f4] sm:$0xf]
  %v540 = vld [vmem:[%s1 + $0x7f8] sm:$0xf]
  %v541 = vld [vmem:[%s1 + $0x7fc] sm:$0xf]
  %v542 = vld [vmem:[%s2] sm:$0x1]
  %v544 = vperm.slane %v542, 0
  %v562 = vunpack.c.l.b16 %v14
  %v563 = vunpack.c.h.b16 %v14
  %v564 = vunpack.c.l.b16 %v15
  %v565 = vunpack.c.h.b16 %v15
  %v566 = vunpack.c.l.b16 %v16
  %v567 = vunpack.c.h.b16 %v16
  %v568 = vunpack.c.l.b16 %v17
  %v569 = vunpack.c.h.b16 %v17
  %v570 = vunpack.c.l.b16 %v18
  %v571 = vunpack.c.h.b16 %v18
  %v572 = vunpack.c.l.b16 %v19
  %v573 = vunpack.c.h.b16 %v19
  %v574 = vunpack.c.l.b16 %v20
  %v575 = vunpack.c.h.b16 %v20
  %v576 = vunpack.c.l.b16 %v21
  %v577 = vunpack.c.h.b16 %v21
  %v578 = vunpack.c.l.b16 %v22
  %v579 = vunpack.c.h.b16 %v22
  %v580 = vunpack.c.l.b16 %v23
  %v581 = vunpack.c.h.b16 %v23
  %v582 = vunpack.c.l.b16 %v24
  %v583 = vunpack.c.h.b16 %v24
  %v584 = vunpack.c.l.b16 %v25
  %v585 = vunpack.c.h.b16 %v25
  %v586 = vunpack.c.l.b16 %v26
  %v587 = vunpack.c.h.b16 %v26
  %v588 = vunpack.c.l.b16 %v27
  %v589 = vunpack.c.h.b16 %v27
  %v590 = vunpack.c.l.b16 %v28
  %v591 = vunpack.c.h.b16 %v28
  %v592 = vunpack.c.l.b16 %v29
  %v593 = vunpack.c.h.b16 %v29
  %v594 = vpack.c.b16 %v562, %v562
  %v595 = vpack.c.b16 %v563, %v563
  %v596 = vpack.c.b16 %v564, %v564
  %v597 = vpack.c.b16 %v565, %v565
  %v598 = vpack.c.b16 %v566, %v566
  %v599 = vpack.c.b16 %v567, %v567
  %v600 = vpack.c.b16 %v568, %v568
  %v601 = vpack.c.b16 %v569, %v569
  %v602 = vpack.c.b16 %v570, %v570
  %v603 = vpack.c.b16 %v571, %v571
  %v604 = vpack.c.b16 %v572, %v572
  %v605 = vpack.c.b16 %v573, %v573
  %v606 = vpack.c.b16 %v574, %v574
  %v607 = vpack.c.b16 %v575, %v575
  %v608 = vpack.c.b16 %v576, %v576
  %v609 = vpack.c.b16 %v577, %v577
  %v610 = vpack.c.b16 %v578, %v578
  %v611 = vpack.c.b16 %v579, %v579
  %v612 = vpack.c.b16 %v580, %v580
  %v613 = vpack.c.b16 %v581, %v581
  %v614 = vpack.c.b16 %v582, %v582
  %v615 = vpack.c.b16 %v583, %v583
  %v616 = vpack.c.b16 %v584, %v584
  %v617 = vpack.c.b16 %v585, %v585
  %v618 = vpack.c.b16 %v586, %v586
  %v619 = vpack.c.b16 %v587, %v587
  %v620 = vpack.c.b16 %v588, %v588
  %v621 = vpack.c.b16 %v589, %v589
  %v622 = vpack.c.b16 %v590, %v590
  %v623 = vpack.c.b16 %v591, %v591
  %v624 = vpack.c.b16 %v592, %v592
  %v625 = vpack.c.b16 %v593, %v593
  %v1170 = vunpack.c.l.b16 %v30
  %v1171 = vunpack.c.l.b16 %v31
  %v1172 = vunpack.c.l.b16 %v32
  %v1173 = vunpack.c.l.b16 %v33
  %v1174 = vunpack.c.l.b16 %v34
  %v1175 = vunpack.c.l.b16 %v35
  %v1176 = vunpack.c.l.b16 %v36
  %v1177 = vunpack.c.l.b16 %v37
  %v1178 = vunpack.c.l.b16 %v38
  %v1179 = vunpack.c.l.b16 %v39
  %v1180 = vunpack.c.l.b16 %v40
  %v1181 = vunpack.c.l.b16 %v41
  %v1182 = vunpack.c.l.b16 %v42
  %v1183 = vunpack.c.l.b16 %v43
  %v1184 = vunpack.c.l.b16 %v44
  %v1185 = vunpack.c.l.b16 %v45
  %v1186 = vunpack.c.l.b16 %v46
  %v1187 = vunpack.c.l.b16 %v47
  %v1188 = vunpack.c.l.b16 %v48
  %v1189 = vunpack.c.l.b16 %v49
  %v1190 = vunpack.c.l.b16 %v50
  %v1191 = vunpack.c.l.b16 %v51
  %v1192 = vunpack.c.l.b16 %v52
  %v1193 = vunpack.c.l.b16 %v53
  %v1194 = vunpack.c.l.b16 %v54
  %v1195 = vunpack.c.l.b16 %v55
  %v1196 = vunpack.c.l.b16 %v56
  %v1197 = vunpack.c.l.b16 %v57
  %v1198 = vunpack.c.l.b16 %v58
  %v1199 = vunpack.c.l.b16 %v59
  %v1200 = vunpack.c.l.b16 %v60
  %v1201 = vunpack.c.l.b16 %v61
  %v1202 = vunpack.c.l.b16 %v62
  %v1203 = vunpack.c.l.b16 %v63
  %v1204 = vunpack.c.l.b16 %v64
  %v1205 = vunpack.c.l.b16 %v65
  %v1206 = vunpack.c.l.b16 %v66
  %v1207 = vunpack.c.l.b16 %v67
  %v1208 = vunpack.c.l.b16 %v68
  %v1209 = vunpack.c.l.b16 %v69
  %v1210 = vunpack.c.l.b16 %v70
  %v1211 = vunpack.c.l.b16 %v71
  %v1212 = vunpack.c.l.b16 %v72
  %v1213 = vunpack.c.l.b16 %v73
  %v1214 = vunpack.c.l.b16 %v74
  %v1215 = vunpack.c.l.b16 %v75
  %v1216 = vunpack.c.l.b16 %v76
  %v1217 = vunpack.c.l.b16 %v77
  %v1218 = vunpack.c.l.b16 %v78
  %v1219 = vunpack.c.l.b16 %v79
  %v1220 = vunpack.c.l.b16 %v80
  %v1221 = vunpack.c.l.b16 %v81
  %v1222 = vunpack.c.l.b16 %v82
  %v1223 = vunpack.c.l.b16 %v83
  %v1224 = vunpack.c.l.b16 %v84
  %v1225 = vunpack.c.l.b16 %v85
  %v1226 = vunpack.c.l.b16 %v86
  %v1227 = vunpack.c.l.b16 %v87
  %v1228 = vunpack.c.l.b16 %v88
  %v1229 = vunpack.c.l.b16 %v89
  %v1230 = vunpack.c.l.b16 %v90
  %v1231 = vunpack.c.l.b16 %v91
  %v1232 = vunpack.c.l.b16 %v92
  %v1233 = vunpack.c.l.b16 %v93
  %v1234 = vunpack.c.l.b16 %v94
  %v1235 = vunpack.c.l.b16 %v95
  %v1236 = vunpack.c.l.b16 %v96
  %v1237 = vunpack.c.l.b16 %v97
  %v1238 = vunpack.c.l.b16 %v98
  %v1239 = vunpack.c.l.b16 %v99
  %v1240 = vunpack.c.l.b16 %v100
  %v1241 = vunpack.c.l.b16 %v101
  %v1242 = vunpack.c.l.b16 %v102
  %v1243 = vunpack.c.l.b16 %v103
  %v1244 = vunpack.c.l.b16 %v104
  %v1245 = vunpack.c.l.b16 %v105
  %v1246 = vunpack.c.l.b16 %v106
  %v1247 = vunpack.c.l.b16 %v107
  %v1248 = vunpack.c.l.b16 %v108
  %v1249 = vunpack.c.l.b16 %v109
  %v1250 = vunpack.c.l.b16 %v110
  %v1251 = vunpack.c.l.b16 %v111
  %v1252 = vunpack.c.l.b16 %v112
  %v1253 = vunpack.c.l.b16 %v113
  %v1254 = vunpack.c.l.b16 %v114
  %v1255 = vunpack.c.l.b16 %v115
  %v1256 = vunpack.c.l.b16 %v116
  %v1257 = vunpack.c.l.b16 %v117
  %v1258 = vunpack.c.l.b16 %v118
  %v1259 = vunpack.c.l.b16 %v119
  %v1260 = vunpack.c.l.b16 %v120
  %v1261 = vunpack.c.l.b16 %v121
  %v1262 = vunpack.c.l.b16 %v122
  %v1263 = vunpack.c.l.b16 %v123
  %v1264 = vunpack.c.l.b16 %v124
  %v1265 = vunpack.c.l.b16 %v125
  %v1266 = vunpack.c.l.b16 %v126
  %v1267 = vunpack.c.l.b16 %v127
  %v1268 = vunpack.c.l.b16 %v128
  %v1269 = vunpack.c.l.b16 %v129
  %v1270 = vunpack.c.l.b16 %v130
  %v1271 = vunpack.c.l.b16 %v131
  %v1272 = vunpack.c.l.b16 %v132
  %v1273 = vunpack.c.l.b16 %v133
  %v1274 = vunpack.c.l.b16 %v134
  %v1275 = vunpack.c.l.b16 %v135
  %v1276 = vunpack.c.l.b16 %v136
  %v1277 = vunpack.c.l.b16 %v137
  %v1278 = vunpack.c.l.b16 %v138
  %v1279 = vunpack.c.l.b16 %v139
  %v1280 = vunpack.c.l.b16 %v140
  %v1281 = vunpack.c.l.b16 %v141
  %v1282 = vunpack.c.l.b16 %v142
  %v1283 = vunpack.c.l.b16 %v143
  %v1284 = vunpack.c.l.b16 %v144
  %v1285 = vunpack.c.l.b16 %v145
  %v1286 = vunpack.c.l.b16 %v146
  %v1287 = vunpack.c.l.b16 %v147
  %v1288 = vunpack.c.l.b16 %v148
  %v1289 = vunpack.c.l.b16 %v149
  %v1290 = vunpack.c.l.b16 %v150
  %v1291 = vunpack.c.l.b16 %v151
  %v1292 = vunpack.c.l.b16 %v152
  %v1293 = vunpack.c.l.b16 %v153
  %v1294 = vunpack.c.l.b16 %v154
  %v1295 = vunpack.c.l.b16 %v155
  %v1296 = vunpack.c.l.b16 %v156
  %v1297 = vunpack.c.l.b16 %v157
  %v1298 = vunpack.c.l.b16 %v158
  %v1299 = vunpack.c.l.b16 %v159
  %v1300 = vunpack.c.l.b16 %v160
  %v1301 = vunpack.c.l.b16 %v161
  %v1302 = vunpack.c.l.b16 %v162
  %v1303 = vunpack.c.l.b16 %v163
  %v1304 = vunpack.c.l.b16 %v164
  %v1305 = vunpack.c.l.b16 %v165
  %v1306 = vunpack.c.l.b16 %v166
  %v1307 = vunpack.c.l.b16 %v167
  %v1308 = vunpack.c.l.b16 %v168
  %v1309 = vunpack.c.l.b16 %v169
  %v1310 = vunpack.c.l.b16 %v170
  %v1311 = vunpack.c.l.b16 %v171
  %v1312 = vunpack.c.l.b16 %v172
  %v1313 = vunpack.c.l.b16 %v173
  %v1314 = vunpack.c.l.b16 %v174
  %v1315 = vunpack.c.l.b16 %v175
  %v1316 = vunpack.c.l.b16 %v176
  %v1317 = vunpack.c.l.b16 %v177
  %v1318 = vunpack.c.l.b16 %v178
  %v1319 = vunpack.c.l.b16 %v179
  %v1320 = vunpack.c.l.b16 %v180
  %v1321 = vunpack.c.l.b16 %v181
  %v1322 = vunpack.c.l.b16 %v182
  %v1323 = vunpack.c.l.b16 %v183
  %v1324 = vunpack.c.l.b16 %v184
  %v1325 = vunpack.c.l.b16 %v185
  %v1326 = vunpack.c.l.b16 %v186
  %v1327 = vunpack.c.l.b16 %v187
  %v1328 = vunpack.c.l.b16 %v188
  %v1329 = vunpack.c.l.b16 %v189
  %v1330 = vunpack.c.l.b16 %v190
  %v1331 = vunpack.c.l.b16 %v191
  %v1332 = vunpack.c.l.b16 %v192
  %v1333 = vunpack.c.l.b16 %v193
  %v1334 = vunpack.c.l.b16 %v194
  %v1335 = vunpack.c.l.b16 %v195
  %v1336 = vunpack.c.l.b16 %v196
  %v1337 = vunpack.c.l.b16 %v197
  %v1338 = vunpack.c.l.b16 %v198
  %v1339 = vunpack.c.l.b16 %v199
  %v1340 = vunpack.c.l.b16 %v200
  %v1341 = vunpack.c.l.b16 %v201
  %v1342 = vunpack.c.l.b16 %v202
  %v1343 = vunpack.c.l.b16 %v203
  %v1344 = vunpack.c.l.b16 %v204
  %v1345 = vunpack.c.l.b16 %v205
  %v1346 = vunpack.c.l.b16 %v206
  %v1347 = vunpack.c.l.b16 %v207
  %v1348 = vunpack.c.l.b16 %v208
  %v1349 = vunpack.c.l.b16 %v209
  %v1350 = vunpack.c.l.b16 %v210
  %v1351 = vunpack.c.l.b16 %v211
  %v1352 = vunpack.c.l.b16 %v212
  %v1353 = vunpack.c.l.b16 %v213
  %v1354 = vunpack.c.l.b16 %v214
  %v1355 = vunpack.c.l.b16 %v215
  %v1356 = vunpack.c.l.b16 %v216
  %v1357 = vunpack.c.l.b16 %v217
  %v1358 = vunpack.c.l.b16 %v218
  %v1359 = vunpack.c.l.b16 %v219
  %v1360 = vunpack.c.l.b16 %v220
  %v1361 = vunpack.c.l.b16 %v221
  %v1362 = vunpack.c.l.b16 %v222
  %v1363 = vunpack.c.l.b16 %v223
  %v1364 = vunpack.c.l.b16 %v224
  %v1365 = vunpack.c.l.b16 %v225
  %v1366 = vunpack.c.l.b16 %v226
  %v1367 = vunpack.c.l.b16 %v227
  %v1368 = vunpack.c.l.b16 %v228
  %v1369 = vunpack.c.l.b16 %v229
  %v1370 = vunpack.c.l.b16 %v230
  %v1371 = vunpack.c.l.b16 %v231
  %v1372 = vunpack.c.l.b16 %v232
  %v1373 = vunpack.c.l.b16 %v233
  %v1374 = vunpack.c.l.b16 %v234
  %v1375 = vunpack.c.l.b16 %v235
  %v1376 = vunpack.c.l.b16 %v236
  %v1377 = vunpack.c.l.b16 %v237
  %v1378 = vunpack.c.l.b16 %v238
  %v1379 = vunpack.c.l.b16 %v239
  %v1380 = vunpack.c.l.b16 %v240
  %v1381 = vunpack.c.l.b16 %v241
  %v1382 = vunpack.c.l.b16 %v242
  %v1383 = vunpack.c.l.b16 %v243
  %v1384 = vunpack.c.l.b16 %v244
  %v1385 = vunpack.c.l.b16 %v245
  %v1386 = vunpack.c.l.b16 %v246
  %v1387 = vunpack.c.l.b16 %v247
  %v1388 = vunpack.c.l.b16 %v248
  %v1389 = vunpack.c.l.b16 %v249
  %v1390 = vunpack.c.l.b16 %v250
  %v1391 = vunpack.c.l.b16 %v251
  %v1392 = vunpack.c.l.b16 %v252
  %v1393 = vunpack.c.l.b16 %v253
  %v1394 = vunpack.c.l.b16 %v254
  %v1395 = vunpack.c.l.b16 %v255
  %v1396 = vunpack.c.l.b16 %v256
  %v1397 = vunpack.c.l.b16 %v257
  %v1398 = vunpack.c.l.b16 %v258
  %v1399 = vunpack.c.l.b16 %v259
  %v1400 = vunpack.c.l.b16 %v260
  %v1401 = vunpack.c.l.b16 %v261
  %v1402 = vunpack.c.l.b16 %v262
  %v1403 = vunpack.c.l.b16 %v263
  %v1404 = vunpack.c.l.b16 %v264
  %v1405 = vunpack.c.l.b16 %v265
  %v1406 = vunpack.c.l.b16 %v266
  %v1407 = vunpack.c.l.b16 %v267
  %v1408 = vunpack.c.l.b16 %v268
  %v1409 = vunpack.c.l.b16 %v269
  %v1410 = vunpack.c.l.b16 %v270
  %v1411 = vunpack.c.l.b16 %v271
  %v1412 = vunpack.c.l.b16 %v272
  %v1413 = vunpack.c.l.b16 %v273
  %v1414 = vunpack.c.l.b16 %v274
  %v1415 = vunpack.c.l.b16 %v275
  %v1416 = vunpack.c.l.b16 %v276
  %v1417 = vunpack.c.l.b16 %v277
  %v1418 = vunpack.c.l.b16 %v278
  %v1419 = vunpack.c.l.b16 %v279
  %v1420 = vunpack.c.l.b16 %v280
  %v1421 = vunpack.c.l.b16 %v281
  %v1422 = vunpack.c.l.b16 %v282
  %v1423 = vunpack.c.l.b16 %v283
  %v1424 = vunpack.c.l.b16 %v284
  %v1425 = vunpack.c.l.b16 %v285
  %v1426 = vunpack.c.l.b16 %v286
  %v1427 = vunpack.c.l.b16 %v287
  %v1428 = vunpack.c.l.b16 %v288
  %v1429 = vunpack.c.l.b16 %v289
  %v1430 = vunpack.c.l.b16 %v290
  %v1431 = vunpack.c.l.b16 %v291
  %v1432 = vunpack.c.l.b16 %v292
  %v1433 = vunpack.c.l.b16 %v293
  %v1434 = vunpack.c.l.b16 %v294
  %v1435 = vunpack.c.l.b16 %v295
  %v1436 = vunpack.c.l.b16 %v296
  %v1437 = vunpack.c.l.b16 %v297
  %v1438 = vunpack.c.l.b16 %v298
  %v1439 = vunpack.c.l.b16 %v299
  %v1440 = vunpack.c.l.b16 %v300
  %v1441 = vunpack.c.l.b16 %v301
  %v1442 = vunpack.c.l.b16 %v302
  %v1443 = vunpack.c.l.b16 %v303
  %v1444 = vunpack.c.l.b16 %v304
  %v1445 = vunpack.c.l.b16 %v305
  %v1446 = vunpack.c.l.b16 %v306
  %v1447 = vunpack.c.l.b16 %v307
  %v1448 = vunpack.c.l.b16 %v308
  %v1449 = vunpack.c.l.b16 %v309
  %v1450 = vunpack.c.l.b16 %v310
  %v1451 = vunpack.c.l.b16 %v311
  %v1452 = vunpack.c.l.b16 %v312
  %v1453 = vunpack.c.l.b16 %v313
  %v1454 = vunpack.c.l.b16 %v314
  %v1455 = vunpack.c.l.b16 %v315
  %v1456 = vunpack.c.l.b16 %v316
  %v1457 = vunpack.c.l.b16 %v317
  %v1458 = vunpack.c.l.b16 %v318
  %v1459 = vunpack.c.l.b16 %v319
  %v1460 = vunpack.c.l.b16 %v320
  %v1461 = vunpack.c.l.b16 %v321
  %v1462 = vunpack.c.l.b16 %v322
  %v1463 = vunpack.c.l.b16 %v323
  %v1464 = vunpack.c.l.b16 %v324
  %v1465 = vunpack.c.l.b16 %v325
  %v1466 = vunpack.c.l.b16 %v326
  %v1467 = vunpack.c.l.b16 %v327
  %v1468 = vunpack.c.l.b16 %v328
  %v1469 = vunpack.c.l.b16 %v329
  %v1470 = vunpack.c.l.b16 %v330
  %v1471 = vunpack.c.l.b16 %v331
  %v1472 = vunpack.c.l.b16 %v332
  %v1473 = vunpack.c.l.b16 %v333
  %v1474 = vunpack.c.l.b16 %v334
  %v1475 = vunpack.c.l.b16 %v335
  %v1476 = vunpack.c.l.b16 %v336
  %v1477 = vunpack.c.l.b16 %v337
  %v1478 = vunpack.c.l.b16 %v338
  %v1479 = vunpack.c.l.b16 %v339
  %v1480 = vunpack.c.l.b16 %v340
  %v1481 = vunpack.c.l.b16 %v341
  %v1482 = vunpack.c.l.b16 %v342
  %v1483 = vunpack.c.l.b16 %v343
  %v1484 = vunpack.c.l.b16 %v344
  %v1485 = vunpack.c.l.b16 %v345
  %v1486 = vunpack.c.l.b16 %v346
  %v1487 = vunpack.c.l.b16 %v347
  %v1488 = vunpack.c.l.b16 %v348
  %v1489 = vunpack.c.l.b16 %v349
  %v1490 = vunpack.c.l.b16 %v350
  %v1491 = vunpack.c.l.b16 %v351
  %v1492 = vunpack.c.l.b16 %v352
  %v1493 = vunpack.c.l.b16 %v353
  %v1494 = vunpack.c.l.b16 %v354
  %v1495 = vunpack.c.l.b16 %v355
  %v1496 = vunpack.c.l.b16 %v356
  %v1497 = vunpack.c.l.b16 %v357
  %v1498 = vunpack.c.l.b16 %v358
  %v1499 = vunpack.c.l.b16 %v359
  %v1500 = vunpack.c.l.b16 %v360
  %v1501 = vunpack.c.l.b16 %v361
  %v1502 = vunpack.c.l.b16 %v362
  %v1503 = vunpack.c.l.b16 %v363
  %v1504 = vunpack.c.l.b16 %v364
  %v1505 = vunpack.c.l.b16 %v365
  %v1506 = vunpack.c.l.b16 %v366
  %v1507 = vunpack.c.l.b16 %v367
  %v1508 = vunpack.c.l.b16 %v368
  %v1509 = vunpack.c.l.b16 %v369
  %v1510 = vunpack.c.l.b16 %v370
  %v1511 = vunpack.c.l.b16 %v371
  %v1512 = vunpack.c.l.b16 %v372
  %v1513 = vunpack.c.l.b16 %v373
  %v1514 = vunpack.c.l.b16 %v374
  %v1515 = vunpack.c.l.b16 %v375
  %v1516 = vunpack.c.l.b16 %v376
  %v1517 = vunpack.c.l.b16 %v377
  %v1518 = vunpack.c.l.b16 %v378
  %v1519 = vunpack.c.l.b16 %v379
  %v1520 = vunpack.c.l.b16 %v380
  %v1521 = vunpack.c.l.b16 %v381
  %v1522 = vunpack.c.l.b16 %v382
  %v1523 = vunpack.c.l.b16 %v383
  %v1524 = vunpack.c.l.b16 %v384
  %v1525 = vunpack.c.l.b16 %v385
  %v1526 = vunpack.c.l.b16 %v386
  %v1527 = vunpack.c.l.b16 %v387
  %v1528 = vunpack.c.l.b16 %v388
  %v1529 = vunpack.c.l.b16 %v389
  %v1530 = vunpack.c.l.b16 %v390
  %v1531 = vunpack.c.l.b16 %v391
  %v1532 = vunpack.c.l.b16 %v392
  %v1533 = vunpack.c.l.b16 %v393
  %v1534 = vunpack.c.l.b16 %v394
  %v1535 = vunpack.c.l.b16 %v395
  %v1536 = vunpack.c.l.b16 %v396
  %v1537 = vunpack.c.l.b16 %v397
  %v1538 = vunpack.c.l.b16 %v398
  %v1539 = vunpack.c.l.b16 %v399
  %v1540 = vunpack.c.l.b16 %v400
  %v1541 = vunpack.c.l.b16 %v401
  %v1542 = vunpack.c.l.b16 %v402
  %v1543 = vunpack.c.l.b16 %v403
  %v1544 = vunpack.c.l.b16 %v404
  %v1545 = vunpack.c.l.b16 %v405
  %v1546 = vunpack.c.l.b16 %v406
  %v1547 = vunpack.c.l.b16 %v407
  %v1548 = vunpack.c.l.b16 %v408
  %v1549 = vunpack.c.l.b16 %v409
  %v1550 = vunpack.c.l.b16 %v410
  %v1551 = vunpack.c.l.b16 %v411
  %v1552 = vunpack.c.l.b16 %v412
  %v1553 = vunpack.c.l.b16 %v413
  %v1554 = vunpack.c.l.b16 %v414
  %v1555 = vunpack.c.l.b16 %v415
  %v1556 = vunpack.c.l.b16 %v416
  %v1557 = vunpack.c.l.b16 %v417
  %v1558 = vunpack.c.l.b16 %v418
  %v1559 = vunpack.c.l.b16 %v419
  %v1560 = vunpack.c.l.b16 %v420
  %v1561 = vunpack.c.l.b16 %v421
  %v1562 = vunpack.c.l.b16 %v422
  %v1563 = vunpack.c.l.b16 %v423
  %v1564 = vunpack.c.l.b16 %v424
  %v1565 = vunpack.c.l.b16 %v425
  %v1566 = vunpack.c.l.b16 %v426
  %v1567 = vunpack.c.l.b16 %v427
  %v1568 = vunpack.c.l.b16 %v428
  %v1569 = vunpack.c.l.b16 %v429
  %v1570 = vunpack.c.l.b16 %v430
  %v1571 = vunpack.c.l.b16 %v431
  %v1572 = vunpack.c.l.b16 %v432
  %v1573 = vunpack.c.l.b16 %v433
  %v1574 = vunpack.c.l.b16 %v434
  %v1575 = vunpack.c.l.b16 %v435
  %v1576 = vunpack.c.l.b16 %v436
  %v1577 = vunpack.c.l.b16 %v437
  %v1578 = vunpack.c.l.b16 %v438
  %v1579 = vunpack.c.l.b16 %v439
  %v1580 = vunpack.c.l.b16 %v440
  %v1581 = vunpack.c.l.b16 %v441
  %v1582 = vunpack.c.l.b16 %v442
  %v1583 = vunpack.c.l.b16 %v443
  %v1584 = vunpack.c.l.b16 %v444
  %v1585 = vunpack.c.l.b16 %v445
  %v1586 = vunpack.c.l.b16 %v446
  %v1587 = vunpack.c.l.b16 %v447
  %v1588 = vunpack.c.l.b16 %v448
  %v1589 = vunpack.c.l.b16 %v449
  %v1590 = vunpack.c.l.b16 %v450
  %v1591 = vunpack.c.l.b16 %v451
  %v1592 = vunpack.c.l.b16 %v452
  %v1593 = vunpack.c.l.b16 %v453
  %v1594 = vunpack.c.l.b16 %v454
  %v1595 = vunpack.c.l.b16 %v455
  %v1596 = vunpack.c.l.b16 %v456
  %v1597 = vunpack.c.l.b16 %v457
  %v1598 = vunpack.c.l.b16 %v458
  %v1599 = vunpack.c.l.b16 %v459
  %v1600 = vunpack.c.l.b16 %v460
  %v1601 = vunpack.c.l.b16 %v461
  %v1602 = vunpack.c.l.b16 %v462
  %v1603 = vunpack.c.l.b16 %v463
  %v1604 = vunpack.c.l.b16 %v464
  %v1605 = vunpack.c.l.b16 %v465
  %v1606 = vunpack.c.l.b16 %v466
  %v1607 = vunpack.c.l.b16 %v467
  %v1608 = vunpack.c.l.b16 %v468
  %v1609 = vunpack.c.l.b16 %v469
  %v1610 = vunpack.c.l.b16 %v470
  %v1611 = vunpack.c.l.b16 %v471
  %v1612 = vunpack.c.l.b16 %v472
  %v1613 = vunpack.c.l.b16 %v473
  %v1614 = vunpack.c.l.b16 %v474
  %v1615 = vunpack.c.l.b16 %v475
  %v1616 = vunpack.c.l.b16 %v476
  %v1617 = vunpack.c.l.b16 %v477
  %v1618 = vunpack.c.l.b16 %v478
  %v1619 = vunpack.c.l.b16 %v479
  %v1620 = vunpack.c.l.b16 %v480
  %v1621 = vunpack.c.l.b16 %v481
  %v1622 = vunpack.c.l.b16 %v482
  %v1623 = vunpack.c.l.b16 %v483
  %v1624 = vunpack.c.l.b16 %v484
  %v1625 = vunpack.c.l.b16 %v485
  %v1626 = vunpack.c.l.b16 %v486
  %v1627 = vunpack.c.l.b16 %v487
  %v1628 = vunpack.c.l.b16 %v488
  %v1629 = vunpack.c.l.b16 %v489
  %v1630 = vunpack.c.l.b16 %v490
  %v1631 = vunpack.c.l.b16 %v491
  %v1632 = vunpack.c.l.b16 %v492
  %v1633 = vunpack.c.l.b16 %v493
  %v1634 = vunpack.c.l.b16 %v494
  %v1635 = vunpack.c.l.b16 %v495
  %v1636 = vunpack.c.l.b16 %v496
  %v1637 = vunpack.c.l.b16 %v497
  %v1638 = vunpack.c.l.b16 %v498
  %v1639 = vunpack.c.l.b16 %v499
  %v1640 = vunpack.c.l.b16 %v500
  %v1641 = vunpack.c.l.b16 %v501
  %v1642 = vunpack.c.l.b16 %v502
  %v1643 = vunpack.c.l.b16 %v503
  %v1644 = vunpack.c.l.b16 %v504
  %v1645 = vunpack.c.l.b16 %v505
  %v1646 = vunpack.c.l.b16 %v506
  %v1647 = vunpack.c.l.b16 %v507
  %v1648 = vunpack.c.l.b16 %v508
  %v1649 = vunpack.c.l.b16 %v509
  %v1650 = vunpack.c.l.b16 %v510
  %v1651 = vunpack.c.l.b16 %v511
  %v1652 = vunpack.c.l.b16 %v512
  %v1653 = vunpack.c.l.b16 %v513
  %v1654 = vunpack.c.l.b16 %v514
  %v1655 = vunpack.c.l.b16 %v515
  %v1656 = vunpack.c.l.b16 %v516
  %v1657 = vunpack.c.l.b16 %v517
  %v1658 = vunpack.c.l.b16 %v518
  %v1659 = vunpack.c.l.b16 %v519
  %v1660 = vunpack.c.l.b16 %v520
  %v1661 = vunpack.c.l.b16 %v521
  %v1662 = vunpack.c.l.b16 %v522
  %v1663 = vunpack.c.l.b16 %v523
  %v1664 = vunpack.c.l.b16 %v524
  %v1665 = vunpack.c.l.b16 %v525
  %v1666 = vunpack.c.l.b16 %v526
  %v1667 = vunpack.c.l.b16 %v527
  %v1668 = vunpack.c.l.b16 %v528
  %v1669 = vunpack.c.l.b16 %v529
  %v1670 = vunpack.c.l.b16 %v530
  %v1671 = vunpack.c.l.b16 %v531
  %v1672 = vunpack.c.l.b16 %v532
  %v1673 = vunpack.c.l.b16 %v533
  %v1674 = vunpack.c.l.b16 %v534
  %v1675 = vunpack.c.l.b16 %v535
  %v1676 = vunpack.c.l.b16 %v536
  %v1677 = vunpack.c.l.b16 %v537
  %v1678 = vunpack.c.l.b16 %v538
  %v1679 = vunpack.c.l.b16 %v539
  %v1680 = vunpack.c.l.b16 %v540
  %v1681 = vunpack.c.l.b16 %v541
  %v1682 = vpack.c.b16 %v1171, %v1170
  %v1683 = vpack.c.b16 %v1173, %v1172
  %v1684 = vpack.c.b16 %v1175, %v1174
  %v1685 = vpack.c.b16 %v1177, %v1176
  %v1686 = vpack.c.b16 %v1179, %v1178
  %v1687 = vpack.c.b16 %v1181, %v1180
  %v1688 = vpack.c.b16 %v1183, %v1182
  %v1689 = vpack.c.b16 %v1185, %v1184
  %v1690 = vpack.c.b16 %v1187, %v1186
  %v1691 = vpack.c.b16 %v1189, %v1188
  %v1692 = vpack.c.b16 %v1191, %v1190
  %v1693 = vpack.c.b16 %v1193, %v1192
  %v1694 = vpack.c.b16 %v1195, %v1194
  %v1695 = vpack.c.b16 %v1197, %v1196
  %v1696 = vpack.c.b16 %v1199, %v1198
  %v1697 = vpack.c.b16 %v1201, %v1200
  %v1698 = vpack.c.b16 %v1203, %v1202
  %v1699 = vpack.c.b16 %v1205, %v1204
  %v1700 = vpack.c.b16 %v1207, %v1206
  %v1701 = vpack.c.b16 %v1209, %v1208
  %v1702 = vpack.c.b16 %v1211, %v1210
  %v1703 = vpack.c.b16 %v1213, %v1212
  %v1704 = vpack.c.b16 %v1215, %v1214
  %v1705 = vpack.c.b16 %v1217, %v1216
  %v1706 = vpack.c.b16 %v1219, %v1218
  %v1707 = vpack.c.b16 %v1221, %v1220
  %v1708 = vpack.c.b16 %v1223, %v1222
  %v1709 = vpack.c.b16 %v1225, %v1224
  %v1710 = vpack.c.b16 %v1227, %v1226
  %v1711 = vpack.c.b16 %v1229, %v1228
  %v1712 = vpack.c.b16 %v1231, %v1230
  %v1713 = vpack.c.b16 %v1233, %v1232
  %v1714 = vpack.c.b16 %v1235, %v1234
  %v1715 = vpack.c.b16 %v1237, %v1236
  %v1716 = vpack.c.b16 %v1239, %v1238
  %v1717 = vpack.c.b16 %v1241, %v1240
  %v1718 = vpack.c.b16 %v1243, %v1242
  %v1719 = vpack.c.b16 %v1245, %v1244
  %v1720 = vpack.c.b16 %v1247, %v1246
  %v1721 = vpack.c.b16 %v1249, %v1248
  %v1722 = vpack.c.b16 %v1251, %v1250
  %v1723 = vpack.c.b16 %v1253, %v1252
  %v1724 = vpack.c.b16 %v1255, %v1254
  %v1725 = vpack.c.b16 %v1257, %v1256
  %v1726 = vpack.c.b16 %v1259, %v1258
  %v1727 = vpack.c.b16 %v1261, %v1260
  %v1728 = vpack.c.b16 %v1263, %v1262
  %v1729 = vpack.c.b16 %v1265, %v1264
  %v1730 = vpack.c.b16 %v1267, %v1266
  %v1731 = vpack.c.b16 %v1269, %v1268
  %v1732 = vpack.c.b16 %v1271, %v1270
  %v1733 = vpack.c.b16 %v1273, %v1272
  %v1734 = vpack.c.b16 %v1275, %v1274
  %v1735 = vpack.c.b16 %v1277, %v1276
  %v1736 = vpack.c.b16 %v1279, %v1278
  %v1737 = vpack.c.b16 %v1281, %v1280
  %v1738 = vpack.c.b16 %v1283, %v1282
  %v1739 = vpack.c.b16 %v1285, %v1284
  %v1740 = vpack.c.b16 %v1287, %v1286
  %v1741 = vpack.c.b16 %v1289, %v1288
  %v1742 = vpack.c.b16 %v1291, %v1290
  %v1743 = vpack.c.b16 %v1293, %v1292
  %v1744 = vpack.c.b16 %v1295, %v1294
  %v1745 = vpack.c.b16 %v1297, %v1296
  %v1746 = vpack.c.b16 %v1299, %v1298
  %v1747 = vpack.c.b16 %v1301, %v1300
  %v1748 = vpack.c.b16 %v1303, %v1302
  %v1749 = vpack.c.b16 %v1305, %v1304
  %v1750 = vpack.c.b16 %v1307, %v1306
  %v1751 = vpack.c.b16 %v1309, %v1308
  %v1752 = vpack.c.b16 %v1311, %v1310
  %v1753 = vpack.c.b16 %v1313, %v1312
  %v1754 = vpack.c.b16 %v1315, %v1314
  %v1755 = vpack.c.b16 %v1317, %v1316
  %v1756 = vpack.c.b16 %v1319, %v1318
  %v1757 = vpack.c.b16 %v1321, %v1320
  %v1758 = vpack.c.b16 %v1323, %v1322
  %v1759 = vpack.c.b16 %v1325, %v1324
  %v1760 = vpack.c.b16 %v1327, %v1326
  %v1761 = vpack.c.b16 %v1329, %v1328
  %v1762 = vpack.c.b16 %v1331, %v1330
  %v1763 = vpack.c.b16 %v1333, %v1332
  %v1764 = vpack.c.b16 %v1335, %v1334
  %v1765 = vpack.c.b16 %v1337, %v1336
  %v1766 = vpack.c.b16 %v1339, %v1338
  %v1767 = vpack.c.b16 %v1341, %v1340
  %v1768 = vpack.c.b16 %v1343, %v1342
  %v1769 = vpack.c.b16 %v1345, %v1344
  %v1770 = vpack.c.b16 %v1347, %v1346
  %v1771 = vpack.c.b16 %v1349, %v1348
  %v1772 = vpack.c.b16 %v1351, %v1350
  %v1773 = vpack.c.b16 %v1353, %v1352
  %v1774 = vpack.c.b16 %v1355, %v1354
  %v1775 = vpack.c.b16 %v1357, %v1356
  %v1776 = vpack.c.b16 %v1359, %v1358
  %v1777 = vpack.c.b16 %v1361, %v1360
  %v1778 = vpack.c.b16 %v1363, %v1362
  %v1779 = vpack.c.b16 %v1365, %v1364
  %v1780 = vpack.c.b16 %v1367, %v1366
  %v1781 = vpack.c.b16 %v1369, %v1368
  %v1782 = vpack.c.b16 %v1371, %v1370
  %v1783 = vpack.c.b16 %v1373, %v1372
  %v1784 = vpack.c.b16 %v1375, %v1374
  %v1785 = vpack.c.b16 %v1377, %v1376
  %v1786 = vpack.c.b16 %v1379, %v1378
  %v1787 = vpack.c.b16 %v1381, %v1380
  %v1788 = vpack.c.b16 %v1383, %v1382
  %v1789 = vpack.c.b16 %v1385, %v1384
  %v1790 = vpack.c.b16 %v1387, %v1386
  %v1791 = vpack.c.b16 %v1389, %v1388
  %v1792 = vpack.c.b16 %v1391, %v1390
  %v1793 = vpack.c.b16 %v1393, %v1392
  %v1794 = vpack.c.b16 %v1395, %v1394
  %v1795 = vpack.c.b16 %v1397, %v1396
  %v1796 = vpack.c.b16 %v1399, %v1398
  %v1797 = vpack.c.b16 %v1401, %v1400
  %v1798 = vpack.c.b16 %v1403, %v1402
  %v1799 = vpack.c.b16 %v1405, %v1404
  %v1800 = vpack.c.b16 %v1407, %v1406
  %v1801 = vpack.c.b16 %v1409, %v1408
  %v1802 = vpack.c.b16 %v1411, %v1410
  %v1803 = vpack.c.b16 %v1413, %v1412
  %v1804 = vpack.c.b16 %v1415, %v1414
  %v1805 = vpack.c.b16 %v1417, %v1416
  %v1806 = vpack.c.b16 %v1419, %v1418
  %v1807 = vpack.c.b16 %v1421, %v1420
  %v1808 = vpack.c.b16 %v1423, %v1422
  %v1809 = vpack.c.b16 %v1425, %v1424
  %v1810 = vpack.c.b16 %v1427, %v1426
  %v1811 = vpack.c.b16 %v1429, %v1428
  %v1812 = vpack.c.b16 %v1431, %v1430
  %v1813 = vpack.c.b16 %v1433, %v1432
  %v1814 = vpack.c.b16 %v1435, %v1434
  %v1815 = vpack.c.b16 %v1437, %v1436
  %v1816 = vpack.c.b16 %v1439, %v1438
  %v1817 = vpack.c.b16 %v1441, %v1440
  %v1818 = vpack.c.b16 %v1443, %v1442
  %v1819 = vpack.c.b16 %v1445, %v1444
  %v1820 = vpack.c.b16 %v1447, %v1446
  %v1821 = vpack.c.b16 %v1449, %v1448
  %v1822 = vpack.c.b16 %v1451, %v1450
  %v1823 = vpack.c.b16 %v1453, %v1452
  %v1824 = vpack.c.b16 %v1455, %v1454
  %v1825 = vpack.c.b16 %v1457, %v1456
  %v1826 = vpack.c.b16 %v1459, %v1458
  %v1827 = vpack.c.b16 %v1461, %v1460
  %v1828 = vpack.c.b16 %v1463, %v1462
  %v1829 = vpack.c.b16 %v1465, %v1464
  %v1830 = vpack.c.b16 %v1467, %v1466
  %v1831 = vpack.c.b16 %v1469, %v1468
  %v1832 = vpack.c.b16 %v1471, %v1470
  %v1833 = vpack.c.b16 %v1473, %v1472
  %v1834 = vpack.c.b16 %v1475, %v1474
  %v1835 = vpack.c.b16 %v1477, %v1476
  %v1836 = vpack.c.b16 %v1479, %v1478
  %v1837 = vpack.c.b16 %v1481, %v1480
  %v1838 = vpack.c.b16 %v1483, %v1482
  %v1839 = vpack.c.b16 %v1485, %v1484
  %v1840 = vpack.c.b16 %v1487, %v1486
  %v1841 = vpack.c.b16 %v1489, %v1488
  %v1842 = vpack.c.b16 %v1491, %v1490
  %v1843 = vpack.c.b16 %v1493, %v1492
  %v1844 = vpack.c.b16 %v1495, %v1494
  %v1845 = vpack.c.b16 %v1497, %v1496
  %v1846 = vpack.c.b16 %v1499, %v1498
  %v1847 = vpack.c.b16 %v1501, %v1500
  %v1848 = vpack.c.b16 %v1503, %v1502
  %v1849 = vpack.c.b16 %v1505, %v1504
  %v1850 = vpack.c.b16 %v1507, %v1506
  %v1851 = vpack.c.b16 %v1509, %v1508
  %v1852 = vpack.c.b16 %v1511, %v1510
  %v1853 = vpack.c.b16 %v1513, %v1512
  %v1854 = vpack.c.b16 %v1515, %v1514
  %v1855 = vpack.c.b16 %v1517, %v1516
  %v1856 = vpack.c.b16 %v1519, %v1518
  %v1857 = vpack.c.b16 %v1521, %v1520
  %v1858 = vpack.c.b16 %v1523, %v1522
  %v1859 = vpack.c.b16 %v1525, %v1524
  %v1860 = vpack.c.b16 %v1527, %v1526
  %v1861 = vpack.c.b16 %v1529, %v1528
  %v1862 = vpack.c.b16 %v1531, %v1530
  %v1863 = vpack.c.b16 %v1533, %v1532
  %v1864 = vpack.c.b16 %v1535, %v1534
  %v1865 = vpack.c.b16 %v1537, %v1536
  %v1866 = vpack.c.b16 %v1539, %v1538
  %v1867 = vpack.c.b16 %v1541, %v1540
  %v1868 = vpack.c.b16 %v1543, %v1542
  %v1869 = vpack.c.b16 %v1545, %v1544
  %v1870 = vpack.c.b16 %v1547, %v1546
  %v1871 = vpack.c.b16 %v1549, %v1548
  %v1872 = vpack.c.b16 %v1551, %v1550
  %v1873 = vpack.c.b16 %v1553, %v1552
  %v1874 = vpack.c.b16 %v1555, %v1554
  %v1875 = vpack.c.b16 %v1557, %v1556
  %v1876 = vpack.c.b16 %v1559, %v1558
  %v1877 = vpack.c.b16 %v1561, %v1560
  %v1878 = vpack.c.b16 %v1563, %v1562
  %v1879 = vpack.c.b16 %v1565, %v1564
  %v1880 = vpack.c.b16 %v1567, %v1566
  %v1881 = vpack.c.b16 %v1569, %v1568
  %v1882 = vpack.c.b16 %v1571, %v1570
  %v1883 = vpack.c.b16 %v1573, %v1572
  %v1884 = vpack.c.b16 %v1575, %v1574
  %v1885 = vpack.c.b16 %v1577, %v1576
  %v1886 = vpack.c.b16 %v1579, %v1578
  %v1887 = vpack.c.b16 %v1581, %v1580
  %v1888 = vpack.c.b16 %v1583, %v1582
  %v1889 = vpack.c.b16 %v1585, %v1584
  %v1890 = vpack.c.b16 %v1587, %v1586
  %v1891 = vpack.c.b16 %v1589, %v1588
  %v1892 = vpack.c.b16 %v1591, %v1590
  %v1893 = vpack.c.b16 %v1593, %v1592
  %v1894 = vpack.c.b16 %v1595, %v1594
  %v1895 = vpack.c.b16 %v1597, %v1596
  %v1896 = vpack.c.b16 %v1599, %v1598
  %v1897 = vpack.c.b16 %v1601, %v1600
  %v1898 = vpack.c.b16 %v1603, %v1602
  %v1899 = vpack.c.b16 %v1605, %v1604
  %v1900 = vpack.c.b16 %v1607, %v1606
  %v1901 = vpack.c.b16 %v1609, %v1608
  %v1902 = vpack.c.b16 %v1611, %v1610
  %v1903 = vpack.c.b16 %v1613, %v1612
  %v1904 = vpack.c.b16 %v1615, %v1614
  %v1905 = vpack.c.b16 %v1617, %v1616
  %v1906 = vpack.c.b16 %v1619, %v1618
  %v1907 = vpack.c.b16 %v1621, %v1620
  %v1908 = vpack.c.b16 %v1623, %v1622
  %v1909 = vpack.c.b16 %v1625, %v1624
  %v1910 = vpack.c.b16 %v1627, %v1626
  %v1911 = vpack.c.b16 %v1629, %v1628
  %v1912 = vpack.c.b16 %v1631, %v1630
  %v1913 = vpack.c.b16 %v1633, %v1632
  %v1914 = vpack.c.b16 %v1635, %v1634
  %v1915 = vpack.c.b16 %v1637, %v1636
  %v1916 = vpack.c.b16 %v1639, %v1638
  %v1917 = vpack.c.b16 %v1641, %v1640
  %v1918 = vpack.c.b16 %v1643, %v1642
  %v1919 = vpack.c.b16 %v1645, %v1644
  %v1920 = vpack.c.b16 %v1647, %v1646
  %v1921 = vpack.c.b16 %v1649, %v1648
  %v1922 = vpack.c.b16 %v1651, %v1650
  %v1923 = vpack.c.b16 %v1653, %v1652
  %v1924 = vpack.c.b16 %v1655, %v1654
  %v1925 = vpack.c.b16 %v1657, %v1656
  %v1926 = vpack.c.b16 %v1659, %v1658
  %v1927 = vpack.c.b16 %v1661, %v1660
  %v1928 = vpack.c.b16 %v1663, %v1662
  %v1929 = vpack.c.b16 %v1665, %v1664
  %v1930 = vpack.c.b16 %v1667, %v1666
  %v1931 = vpack.c.b16 %v1669, %v1668
  %v1932 = vpack.c.b16 %v1671, %v1670
  %v1933 = vpack.c.b16 %v1673, %v1672
  %v1934 = vpack.c.b16 %v1675, %v1674
  %v1935 = vpack.c.b16 %v1677, %v1676
  %v1936 = vpack.c.b16 %v1679, %v1678
  %v1937 = vpack.c.b16 %v1681, %v1680
  %2194 = vmatpush.bf16.msra.mxu0 %v1689
  %2195 = vmatpush.bf16.msra.mxu0 %v1688
  %2196 = vmatpush.bf16.msra.mxu0 %v1687
  %2197 = vmatpush.bf16.msra.mxu0 %v1686
  %2198 = vmatpush.bf16.msra.mxu0 %v1685
  %2199 = vmatpush.bf16.msra.mxu0 %v1684
  %2200 = vmatpush.bf16.msra.mxu0 %v1683
  %2201 = vmatpush.bf16.msra.mxu0 %v1682
  %2202 = vmatmul.bf16.gmra.mxu0 %v594
  %v2203 = vpop.f32.mrf.mxu0
  %v2204 = vadd.f32 %v544, %v2203
  %v2205 = vpop.f32.mrf.mxu0
  %2206 = vdwg.mxu0
  %2207 = vmatpush.bf16.msra.mxu0 %v1697
  %2208 = vmatpush.bf16.msra.mxu0 %v1696
  %2209 = vmatpush.bf16.msra.mxu0 %v1695
  %2210 = vmatpush.bf16.msra.mxu0 %v1694
  %2211 = vmatpush.bf16.msra.mxu0 %v1693
  %2212 = vmatpush.bf16.msra.mxu0 %v1692
  %2213 = vmatpush.bf16.msra.mxu0 %v1691
  %2214 = vmatpush.bf16.msra.mxu0 %v1690
  %2215 = vmatmul.bf16.gmra.mxu0 %v595
  %v2216 = vpop.f32.mrf.mxu0
  %v2217 = vadd.f32 %v2204, %v2216
  %v2218 = vpop.f32.mrf.mxu0
  %2219 = vdwg.mxu0
  %2220 = vmatpush.bf16.msra.mxu0 %v1705
  %2221 = vmatpush.bf16.msra.mxu0 %v1704
  %2222 = vmatpush.bf16.msra.mxu0 %v1703
  %2223 = vmatpush.bf16.msra.mxu0 %v1702
  %2224 = vmatpush.bf16.msra.mxu0 %v1701
  %2225 = vmatpush.bf16.msra.mxu0 %v1700
  %2226 = vmatpush.bf16.msra.mxu0 %v1699
  %2227 = vmatpush.bf16.msra.mxu0 %v1698
  %2228 = vmatmul.bf16.gmra.mxu0 %v596
  %v2229 = vpop.f32.mrf.mxu0
  %v2230 = vadd.f32 %v2217, %v2229
  %v2231 = vpop.f32.mrf.mxu0
  %2232 = vdwg.mxu0
  %2233 = vmatpush.bf16.msra.mxu0 %v1713
  %2234 = vmatpush.bf16.msra.mxu0 %v1712
  %2235 = vmatpush.bf16.msra.mxu0 %v1711
  %2236 = vmatpush.bf16.msra.mxu0 %v1710
  %2237 = vmatpush.bf16.msra.mxu0 %v1709
  %2238 = vmatpush.bf16.msra.mxu0 %v1708
  %2239 = vmatpush.bf16.msra.mxu0 %v1707
  %2240 = vmatpush.bf16.msra.mxu0 %v1706
  %2241 = vmatmul.bf16.gmra.mxu0 %v597
  %v2242 = vpop.f32.mrf.mxu0
  %v2243 = vadd.f32 %v2230, %v2242
  %v2244 = vpop.f32.mrf.mxu0
  %2245 = vdwg.mxu0
  %2246 = vmatpush.bf16.msra.mxu0 %v1721
  %2247 = vmatpush.bf16.msra.mxu0 %v1720
  %2248 = vmatpush.bf16.msra.mxu0 %v1719
  %2249 = vmatpush.bf16.msra.mxu0 %v1718
  %2250 = vmatpush.bf16.msra.mxu0 %v1717
  %2251 = vmatpush.bf16.msra.mxu0 %v1716
  %2252 = vmatpush.bf16.msra.mxu0 %v1715
  %2253 = vmatpush.bf16.msra.mxu0 %v1714
  %2254 = vmatmul.bf16.gmra.mxu0 %v598
  %v2255 = vpop.f32.mrf.mxu0
  %v2256 = vadd.f32 %v2243, %v2255
  %v2257 = vpop.f32.mrf.mxu0
  %2258 = vdwg.mxu0
  %2259 = vmatpush.bf16.msra.mxu0 %v1729
  %2260 = vmatpush.bf16.msra.mxu0 %v1728
  %2261 = vmatpush.bf16.msra.mxu0 %v1727
  %2262 = vmatpush.bf16.msra.mxu0 %v1726
  %2263 = vmatpush.bf16.msra.mxu0 %v1725
  %2264 = vmatpush.bf16.msra.mxu0 %v1724
  %2265 = vmatpush.bf16.msra.mxu0 %v1723
  %2266 = vmatpush.bf16.msra.mxu0 %v1722
  %2267 = vmatmul.bf16.gmra.mxu0 %v599
  %v2268 = vpop.f32.mrf.mxu0
  %v2269 = vadd.f32 %v2256, %v2268
  %v2270 = vpop.f32.mrf.mxu0
  %2271 = vdwg.mxu0
  %2272 = vmatpush.bf16.msra.mxu0 %v1737
  %2273 = vmatpush.bf16.msra.mxu0 %v1736
  %2274 = vmatpush.bf16.msra.mxu0 %v1735
  %2275 = vmatpush.bf16.msra.mxu0 %v1734
  %2276 = vmatpush.bf16.msra.mxu0 %v1733
  %2277 = vmatpush.bf16.msra.mxu0 %v1732
  %2278 = vmatpush.bf16.msra.mxu0 %v1731
  %2279 = vmatpush.bf16.msra.mxu0 %v1730
  %2280 = vmatmul.bf16.gmra.mxu0 %v600
  %v2281 = vpop.f32.mrf.mxu0
  %v2282 = vadd.f32 %v2269, %v2281
  %v2283 = vpop.f32.mrf.mxu0
  %2284 = vdwg.mxu0
  %2285 = vmatpush.bf16.msra.mxu0 %v1745
  %2286 = vmatpush.bf16.msra.mxu0 %v1744
  %2287 = vmatpush.bf16.msra.mxu0 %v1743
  %2288 = vmatpush.bf16.msra.mxu0 %v1742
  %2289 = vmatpush.bf16.msra.mxu0 %v1741
  %2290 = vmatpush.bf16.msra.mxu0 %v1740
  %2291 = vmatpush.bf16.msra.mxu0 %v1739
  %2292 = vmatpush.bf16.msra.mxu0 %v1738
  %2293 = vmatmul.bf16.gmra.mxu0 %v601
  %v2294 = vpop.f32.mrf.mxu0
  %v2295 = vadd.f32 %v2282, %v2294
  %v2296 = vpop.f32.mrf.mxu0
  %2297 = vdwg.mxu0
  %2298 = vmatpush.bf16.msra.mxu0 %v1753
  %2299 = vmatpush.bf16.msra.mxu0 %v1752
  %2300 = vmatpush.bf16.msra.mxu0 %v1751
  %2301 = vmatpush.bf16.msra.mxu0 %v1750
  %2302 = vmatpush.bf16.msra.mxu0 %v1749
  %2303 = vmatpush.bf16.msra.mxu0 %v1748
  %2304 = vmatpush.bf16.msra.mxu0 %v1747
  %2305 = vmatpush.bf16.msra.mxu0 %v1746
  %2306 = vmatmul.bf16.gmra.mxu0 %v602
  %v2307 = vpop.f32.mrf.mxu0
  %v2308 = vadd.f32 %v2295, %v2307
  %v2309 = vpop.f32.mrf.mxu0
  %2310 = vdwg.mxu0
  %2311 = vmatpush.bf16.msra.mxu0 %v1761
  %2312 = vmatpush.bf16.msra.mxu0 %v1760
  %2313 = vmatpush.bf16.msra.mxu0 %v1759
  %2314 = vmatpush.bf16.msra.mxu0 %v1758
  %2315 = vmatpush.bf16.msra.mxu0 %v1757
  %2316 = vmatpush.bf16.msra.mxu0 %v1756
  %2317 = vmatpush.bf16.msra.mxu0 %v1755
  %2318 = vmatpush.bf16.msra.mxu0 %v1754
  %2319 = vmatmul.bf16.gmra.mxu0 %v603
  %v2320 = vpop.f32.mrf.mxu0
  %v2321 = vadd.f32 %v2308, %v2320
  %v2322 = vpop.f32.mrf.mxu0
  %2323 = vdwg.mxu0
  %2324 = vmatpush.bf16.msra.mxu0 %v1769
  %2325 = vmatpush.bf16.msra.mxu0 %v1768
  %2326 = vmatpush.bf16.msra.mxu0 %v1767
  %2327 = vmatpush.bf16.msra.mxu0 %v1766
  %2328 = vmatpush.bf16.msra.mxu0 %v1765
  %2329 = vmatpush.bf16.msra.mxu0 %v1764
  %2330 = vmatpush.bf16.msra.mxu0 %v1763
  %2331 = vmatpush.bf16.msra.mxu0 %v1762
  %2332 = vmatmul.bf16.gmra.mxu0 %v604
  %v2333 = vpop.f32.mrf.mxu0
  %v2334 = vadd.f32 %v2321, %v2333
  %v2335 = vpop.f32.mrf.mxu0
  %2336 = vdwg.mxu0
  %2337 = vmatpush.bf16.msra.mxu0 %v1777
  %2338 = vmatpush.bf16.msra.mxu0 %v1776
  %2339 = vmatpush.bf16.msra.mxu0 %v1775
  %2340 = vmatpush.bf16.msra.mxu0 %v1774
  %2341 = vmatpush.bf16.msra.mxu0 %v1773
  %2342 = vmatpush.bf16.msra.mxu0 %v1772
  %2343 = vmatpush.bf16.msra.mxu0 %v1771
  %2344 = vmatpush.bf16.msra.mxu0 %v1770
  %2345 = vmatmul.bf16.gmra.mxu0 %v605
  %v2346 = vpop.f32.mrf.mxu0
  %v2347 = vadd.f32 %v2334, %v2346
  %v2348 = vpop.f32.mrf.mxu0
  %2349 = vdwg.mxu0
  %2350 = vmatpush.bf16.msra.mxu0 %v1785
  %2351 = vmatpush.bf16.msra.mxu0 %v1784
  %2352 = vmatpush.bf16.msra.mxu0 %v1783
  %2353 = vmatpush.bf16.msra.mxu0 %v1782
  %2354 = vmatpush.bf16.msra.mxu0 %v1781
  %2355 = vmatpush.bf16.msra.mxu0 %v1780
  %2356 = vmatpush.bf16.msra.mxu0 %v1779
  %2357 = vmatpush.bf16.msra.mxu0 %v1778
  %2358 = vmatmul.bf16.gmra.mxu0 %v606
  %v2359 = vpop.f32.mrf.mxu0
  %v2360 = vadd.f32 %v2347, %v2359
  %v2361 = vpop.f32.mrf.mxu0
  %2362 = vdwg.mxu0
  %2363 = vmatpush.bf16.msra.mxu0 %v1793
  %2364 = vmatpush.bf16.msra.mxu0 %v1792
  %2365 = vmatpush.bf16.msra.mxu0 %v1791
  %2366 = vmatpush.bf16.msra.mxu0 %v1790
  %2367 = vmatpush.bf16.msra.mxu0 %v1789
  %2368 = vmatpush.bf16.msra.mxu0 %v1788
  %2369 = vmatpush.bf16.msra.mxu0 %v1787
  %2370 = vmatpush.bf16.msra.mxu0 %v1786
  %2371 = vmatmul.bf16.gmra.mxu0 %v607
  %v2372 = vpop.f32.mrf.mxu0
  %v2373 = vadd.f32 %v2360, %v2372
  %v2374 = vpop.f32.mrf.mxu0
  %2375 = vdwg.mxu0
  %2376 = vmatpush.bf16.msra.mxu0 %v1801
  %2377 = vmatpush.bf16.msra.mxu0 %v1800
  %2378 = vmatpush.bf16.msra.mxu0 %v1799
  %2379 = vmatpush.bf16.msra.mxu0 %v1798
  %2380 = vmatpush.bf16.msra.mxu0 %v1797
  %2381 = vmatpush.bf16.msra.mxu0 %v1796
  %2382 = vmatpush.bf16.msra.mxu0 %v1795
  %2383 = vmatpush.bf16.msra.mxu0 %v1794
  %2384 = vmatmul.bf16.gmra.mxu0 %v608
  %v2385 = vpop.f32.mrf.mxu0
  %v2386 = vadd.f32 %v2373, %v2385
  %v2387 = vpop.f32.mrf.mxu0
  %2388 = vdwg.mxu0
  %2389 = vmatpush.bf16.msra.mxu0 %v1809
  %2390 = vmatpush.bf16.msra.mxu0 %v1808
  %2391 = vmatpush.bf16.msra.mxu0 %v1807
  %2392 = vmatpush.bf16.msra.mxu0 %v1806
  %2393 = vmatpush.bf16.msra.mxu0 %v1805
  %2394 = vmatpush.bf16.msra.mxu0 %v1804
  %2395 = vmatpush.bf16.msra.mxu0 %v1803
  %2396 = vmatpush.bf16.msra.mxu0 %v1802
  %2397 = vmatmul.bf16.gmra.mxu0 %v609
  %v2398 = vpop.f32.mrf.mxu0
  %v2399 = vadd.f32 %v2386, %v2398
  %v2400 = vpop.f32.mrf.mxu0
  %2401 = vdwg.mxu0
  %2402 = vmatpush.bf16.msra.mxu0 %v1817
  %2403 = vmatpush.bf16.msra.mxu0 %v1816
  %2404 = vmatpush.bf16.msra.mxu0 %v1815
  %2405 = vmatpush.bf16.msra.mxu0 %v1814
  %2406 = vmatpush.bf16.msra.mxu0 %v1813
  %2407 = vmatpush.bf16.msra.mxu0 %v1812
  %2408 = vmatpush.bf16.msra.mxu0 %v1811
  %2409 = vmatpush.bf16.msra.mxu0 %v1810
  %2410 = vmatmul.bf16.gmra.mxu0 %v610
  %v2411 = vpop.f32.mrf.mxu0
  %v2412 = vadd.f32 %v2399, %v2411
  %v2413 = vpop.f32.mrf.mxu0
  %2414 = vdwg.mxu0
  %2415 = vmatpush.bf16.msra.mxu0 %v1825
  %2416 = vmatpush.bf16.msra.mxu0 %v1824
  %2417 = vmatpush.bf16.msra.mxu0 %v1823
  %2418 = vmatpush.bf16.msra.mxu0 %v1822
  %2419 = vmatpush.bf16.msra.mxu0 %v1821
  %2420 = vmatpush.bf16.msra.mxu0 %v1820
  %2421 = vmatpush.bf16.msra.mxu0 %v1819
  %2422 = vmatpush.bf16.msra.mxu0 %v1818
  %2423 = vmatmul.bf16.gmra.mxu0 %v611
  %v2424 = vpop.f32.mrf.mxu0
  %v2425 = vadd.f32 %v2412, %v2424
  %v2426 = vpop.f32.mrf.mxu0
  %2427 = vdwg.mxu0
  %2428 = vmatpush.bf16.msra.mxu0 %v1833
  %2429 = vmatpush.bf16.msra.mxu0 %v1832
  %2430 = vmatpush.bf16.msra.mxu0 %v1831
  %2431 = vmatpush.bf16.msra.mxu0 %v1830
  %2432 = vmatpush.bf16.msra.mxu0 %v1829
  %2433 = vmatpush.bf16.msra.mxu0 %v1828
  %2434 = vmatpush.bf16.msra.mxu0 %v1827
  %2435 = vmatpush.bf16.msra.mxu0 %v1826
  %2436 = vmatmul.bf16.gmra.mxu0 %v612
  %v2437 = vpop.f32.mrf.mxu0
  %v2438 = vadd.f32 %v2425, %v2437
  %v2439 = vpop.f32.mrf.mxu0
  %2440 = vdwg.mxu0
  %2441 = vmatpush.bf16.msra.mxu0 %v1841
  %2442 = vmatpush.bf16.msra.mxu0 %v1840
  %2443 = vmatpush.bf16.msra.mxu0 %v1839
  %2444 = vmatpush.bf16.msra.mxu0 %v1838
  %2445 = vmatpush.bf16.msra.mxu0 %v1837
  %2446 = vmatpush.bf16.msra.mxu0 %v1836
  %2447 = vmatpush.bf16.msra.mxu0 %v1835
  %2448 = vmatpush.bf16.msra.mxu0 %v1834
  %2449 = vmatmul.bf16.gmra.mxu0 %v613
  %v2450 = vpop.f32.mrf.mxu0
  %v2451 = vadd.f32 %v2438, %v2450
  %v2452 = vpop.f32.mrf.mxu0
  %2453 = vdwg.mxu0
  %2454 = vmatpush.bf16.msra.mxu0 %v1849
  %2455 = vmatpush.bf16.msra.mxu0 %v1848
  %2456 = vmatpush.bf16.msra.mxu0 %v1847
  %2457 = vmatpush.bf16.msra.mxu0 %v1846
  %2458 = vmatpush.bf16.msra.mxu0 %v1845
  %2459 = vmatpush.bf16.msra.mxu0 %v1844
  %2460 = vmatpush.bf16.msra.mxu0 %v1843
  %2461 = vmatpush.bf16.msra.mxu0 %v1842
  %2462 = vmatmul.bf16.gmra.mxu0 %v614
  %v2463 = vpop.f32.mrf.mxu0
  %v2464 = vadd.f32 %v2451, %v2463
  %v2465 = vpop.f32.mrf.mxu0
  %2466 = vdwg.mxu0
  %2467 = vmatpush.bf16.msra.mxu0 %v1857
  %2468 = vmatpush.bf16.msra.mxu0 %v1856
  %2469 = vmatpush.bf16.msra.mxu0 %v1855
  %2470 = vmatpush.bf16.msra.mxu0 %v1854
  %2471 = vmatpush.bf16.msra.mxu0 %v1853
  %2472 = vmatpush.bf16.msra.mxu0 %v1852
  %2473 = vmatpush.bf16.msra.mxu0 %v1851
  %2474 = vmatpush.bf16.msra.mxu0 %v1850
  %2475 = vmatmul.bf16.gmra.mxu0 %v615
  %v2476 = vpop.f32.mrf.mxu0
  %v2477 = vadd.f32 %v2464, %v2476
  %v2478 = vpop.f32.mrf.mxu0
  %2479 = vdwg.mxu0
  %2480 = vmatpush.bf16.msra.mxu0 %v1865
  %2481 = vmatpush.bf16.msra.mxu0 %v1864
  %2482 = vmatpush.bf16.msra.mxu0 %v1863
  %2483 = vmatpush.bf16.msra.mxu0 %v1862
  %2484 = vmatpush.bf16.msra.mxu0 %v1861
  %2485 = vmatpush.bf16.msra.mxu0 %v1860
  %2486 = vmatpush.bf16.msra.mxu0 %v1859
  %2487 = vmatpush.bf16.msra.mxu0 %v1858
  %2488 = vmatmul.bf16.gmra.mxu0 %v616
  %v2489 = vpop.f32.mrf.mxu0
  %v2490 = vadd.f32 %v2477, %v2489
  %v2491 = vpop.f32.mrf.mxu0
  %2492 = vdwg.mxu0
  %2493 = vmatpush.bf16.msra.mxu0 %v1873
  %2494 = vmatpush.bf16.msra.mxu0 %v1872
  %2495 = vmatpush.bf16.msra.mxu0 %v1871
  %2496 = vmatpush.bf16.msra.mxu0 %v1870
  %2497 = vmatpush.bf16.msra.mxu0 %v1869
  %2498 = vmatpush.bf16.msra.mxu0 %v1868
  %2499 = vmatpush.bf16.msra.mxu0 %v1867
  %2500 = vmatpush.bf16.msra.mxu0 %v1866
  %2501 = vmatmul.bf16.gmra.mxu0 %v617
  %v2502 = vpop.f32.mrf.mxu0
  %v2503 = vadd.f32 %v2490, %v2502
  %v2504 = vpop.f32.mrf.mxu0
  %2505 = vdwg.mxu0
  %2506 = vmatpush.bf16.msra.mxu0 %v1881
  %2507 = vmatpush.bf16.msra.mxu0 %v1880
  %2508 = vmatpush.bf16.msra.mxu0 %v1879
  %2509 = vmatpush.bf16.msra.mxu0 %v1878
  %2510 = vmatpush.bf16.msra.mxu0 %v1877
  %2511 = vmatpush.bf16.msra.mxu0 %v1876
  %2512 = vmatpush.bf16.msra.mxu0 %v1875
  %2513 = vmatpush.bf16.msra.mxu0 %v1874
  %2514 = vmatmul.bf16.gmra.mxu0 %v618
  %v2515 = vpop.f32.mrf.mxu0
  %v2516 = vadd.f32 %v2503, %v2515
  %v2517 = vpop.f32.mrf.mxu0
  %2518 = vdwg.mxu0
  %2519 = vmatpush.bf16.msra.mxu0 %v1889
  %2520 = vmatpush.bf16.msra.mxu0 %v1888
  %2521 = vmatpush.bf16.msra.mxu0 %v1887
  %2522 = vmatpush.bf16.msra.mxu0 %v1886
  %2523 = vmatpush.bf16.msra.mxu0 %v1885
  %2524 = vmatpush.bf16.msra.mxu0 %v1884
  %2525 = vmatpush.bf16.msra.mxu0 %v1883
  %2526 = vmatpush.bf16.msra.mxu0 %v1882
  %2527 = vmatmul.bf16.gmra.mxu0 %v619
  %v2528 = vpop.f32.mrf.mxu0
  %v2529 = vadd.f32 %v2516, %v2528
  %v2530 = vpop.f32.mrf.mxu0
  %2531 = vdwg.mxu0
  %2532 = vmatpush.bf16.msra.mxu0 %v1897
  %2533 = vmatpush.bf16.msra.mxu0 %v1896
  %2534 = vmatpush.bf16.msra.mxu0 %v1895
  %2535 = vmatpush.bf16.msra.mxu0 %v1894
  %2536 = vmatpush.bf16.msra.mxu0 %v1893
  %2537 = vmatpush.bf16.msra.mxu0 %v1892
  %2538 = vmatpush.bf16.msra.mxu0 %v1891
  %2539 = vmatpush.bf16.msra.mxu0 %v1890
  %2540 = vmatmul.bf16.gmra.mxu0 %v620
  %v2541 = vpop.f32.mrf.mxu0
  %v2542 = vadd.f32 %v2529, %v2541
  %v2543 = vpop.f32.mrf.mxu0
  %2544 = vdwg.mxu0
  %2545 = vmatpush.bf16.msra.mxu0 %v1905
  %2546 = vmatpush.bf16.msra.mxu0 %v1904
  %2547 = vmatpush.bf16.msra.mxu0 %v1903
  %2548 = vmatpush.bf16.msra.mxu0 %v1902
  %2549 = vmatpush.bf16.msra.mxu0 %v1901
  %2550 = vmatpush.bf16.msra.mxu0 %v1900
  %2551 = vmatpush.bf16.msra.mxu0 %v1899
  %2552 = vmatpush.bf16.msra.mxu0 %v1898
  %2553 = vmatmul.bf16.gmra.mxu0 %v621
  %v2554 = vpop.f32.mrf.mxu0
  %v2555 = vadd.f32 %v2542, %v2554
  %v2556 = vpop.f32.mrf.mxu0
  %2557 = vdwg.mxu0
  %2558 = vmatpush.bf16.msra.mxu0 %v1913
  %2559 = vmatpush.bf16.msra.mxu0 %v1912
  %2560 = vmatpush.bf16.msra.mxu0 %v1911
  %2561 = vmatpush.bf16.msra.mxu0 %v1910
  %2562 = vmatpush.bf16.msra.mxu0 %v1909
  %2563 = vmatpush.bf16.msra.mxu0 %v1908
  %2564 = vmatpush.bf16.msra.mxu0 %v1907
  %2565 = vmatpush.bf16.msra.mxu0 %v1906
  %2566 = vmatmul.bf16.gmra.mxu0 %v622
  %v2567 = vpop.f32.mrf.mxu0
  %v2568 = vadd.f32 %v2555, %v2567
  %v2569 = vpop.f32.mrf.mxu0
  %2570 = vdwg.mxu0
  %2571 = vmatpush.bf16.msra.mxu0 %v1921
  %2572 = vmatpush.bf16.msra.mxu0 %v1920
  %2573 = vmatpush.bf16.msra.mxu0 %v1919
  %2574 = vmatpush.bf16.msra.mxu0 %v1918
  %2575 = vmatpush.bf16.msra.mxu0 %v1917
  %2576 = vmatpush.bf16.msra.mxu0 %v1916
  %2577 = vmatpush.bf16.msra.mxu0 %v1915
  %2578 = vmatpush.bf16.msra.mxu0 %v1914
  %2579 = vmatmul.bf16.gmra.mxu0 %v623
  %v2580 = vpop.f32.mrf.mxu0
  %v2581 = vadd.f32 %v2568, %v2580
  %v2582 = vpop.f32.mrf.mxu0
  %2583 = vdwg.mxu0
  %2584 = vmatpush.bf16.msra.mxu0 %v1929
  %2585 = vmatpush.bf16.msra.mxu0 %v1928
  %2586 = vmatpush.bf16.msra.mxu0 %v1927
  %2587 = vmatpush.bf16.msra.mxu0 %v1926
  %2588 = vmatpush.bf16.msra.mxu0 %v1925
  %2589 = vmatpush.bf16.msra.mxu0 %v1924
  %2590 = vmatpush.bf16.msra.mxu0 %v1923
  %2591 = vmatpush.bf16.msra.mxu0 %v1922
  %2592 = vmatmul.bf16.gmra.mxu0 %v624
  %v2593 = vpop.f32.mrf.mxu0
  %v2594 = vadd.f32 %v2581, %v2593
  %v2595 = vpop.f32.mrf.mxu0
  %2596 = vdwg.mxu0
  %2597 = vmatpush.bf16.msra.mxu0 %v1937
  %2598 = vmatpush.bf16.msra.mxu0 %v1936
  %2599 = vmatpush.bf16.msra.mxu0 %v1935
  %2600 = vmatpush.bf16.msra.mxu0 %v1934
  %2601 = vmatpush.bf16.msra.mxu0 %v1933
  %2602 = vmatpush.bf16.msra.mxu0 %v1932
  %2603 = vmatpush.bf16.msra.mxu0 %v1931
  %2604 = vmatpush.bf16.msra.mxu0 %v1930
  %2605 = vmatmul.bf16.gmra.mxu0 %v625
  %v2606 = vpop.f32.mrf.mxu0
  %v2607 = vadd.f32 %v2594, %v2606
  %v2608 = vpop.f32.mrf.mxu0
  %2609 = vdwg.mxu0
  %2610 = vst [vmem:[%s3] sm:$0xff] %v2607
  // Predicated region
  $region14: #{f_forward.7} parent=0 // pred_check
    _
  $region15: #{f_forward.7} parent=0 // pred_check_branch
    %2612 = sbr.rel (0) target = $region17
  $region16: #{f_forward.7} parent=0 // pred_region
    _
  $region17: #{f_forward.7} parent=0 // pred_fallthru
    _
  // Predicated region
  $region18: #{f_forward.7} parent=0 // pred_check
    _
  $region19: #{f_forward.7} parent=0 // pred_check_branch
    %2614 = sbr.rel (0) target = $region21
  $region20: #{f_forward.7} parent=0 // pred_region
    _
  $region21: #{f_forward.7} parent=0 // pred_fallthru
    _

</llo_original>
